<compile_context>
chip_gen: v5e
topology: v5e:2x2
jax: 0.10.0
libtpu: 0.0.40
codegen_flags: <defaults>
</compile_context>

<pallas_src>
import functools
import math

import jax
import jax.numpy as jnp
from jax.experimental import pallas as pl
from jax.experimental.pallas import tpu as pltpu

EPS = 1e-5                        # torch BatchNorm1d default
MATMUL_DTYPE = jnp.bfloat16       # MXU operand dtype; accumulation is f32
GUARD0 = 1                        # guard lanes per segment at the first group
                                  # (doubles after each x2 upsample; 1 is
                                  #  enough for every K in this module)
_VMEM_FLOOR = 16 * 1024 * 1024
_VMEM_CAP = 48 * 1024 * 1024      # below v7x's 64 MiB physical VMEM


def _vmem():
    return pl.BlockSpec(memory_space=pltpu.MemorySpace.VMEM)


def _vmem_limit(args, out_bytes, xs_bytes):
    io = sum(int(a.size) * a.dtype.itemsize for a in args) + out_bytes
    est = 2 * io + 3 * xs_bytes
    return int(min(_VMEM_CAP, max(_VMEM_FLOOR, est)))


# ----------------------------------------------------------------------------
# In-kernel building blocks.  Activations are (C, N*S): channels on sublanes,
# batch folded into lanes as N segments of S = L_data + guard lanes; guard
# lanes are kept at zero so conv tap shifts never leak across segments.
# ----------------------------------------------------------------------------
def _bn_scale_shift(y, mask, inv_count, gamma, beta):
    """Training-mode BN as per-channel (scale, shift); guard lanes excluded."""
    ym = y * mask
    mean = jnp.sum(ym, axis=1, keepdims=True) * inv_count
    ex2 = jnp.sum(y * ym, axis=1, keepdims=True) * inv_count
    var = ex2 - mean * mean
    scale = gamma * jax.lax.rsqrt(var + EPS)
    shift = beta - mean * scale
    return scale, shift


def _bn_relu_guarded(y, mask, inv_count, gamma, beta):
    """BN + ReLU, re-zeroing guard lanes so the next conv reads zeros there."""
    scale, shift = _bn_scale_shift(y, mask, inv_count, gamma, beta)
    return jnp.maximum(y * scale + shift, 0.0) * mask


def _corr(h, w2d, ntaps, left):
    """Multi-tap stride-1 correlation as ONE MXU matmul.

    h:    (Cin, N*S) f32 activation with zero guard lanes between segments.
    w2d:  (M, ntaps*Cin) packed taps (bf16); column u*Cin+ci multiplies
          h[ci, j + (u - left)].
    No boundary masking: the guard lanes supply the zero padding; the tap
    stack is built in MATMUL_DTYPE to halve its VMEM / store traffic.
    """
    cin, nl = h.shape
    right = ntaps - 1 - left
    h = h.astype(MATMUL_DTYPE)
    parts = []
    if left:
        parts.append(jnp.zeros((cin, left), MATMUL_DTYPE))
    parts.append(h)
    if right:
        parts.append(jnp.zeros((cin, right), MATMUL_DTYPE))
    hz = jnp.concatenate(parts, axis=1) if len(parts) > 1 else h
    xs = jnp.concatenate([hz[:, u:u + nl] for u in range(ntaps)], axis=0)
    return jnp.dot(w2d, xs, preferred_element_type=jnp.float32)


def _make_group_kernel(inv_count, k1, k1_left, pf_ntaps, pf_left):
    """Fused: skip-add -> BN -> ReLU -> stride-1 convT -> BN -> ReLU ->
    stride-2 convT (both polyphases in one matmul).  Output (2*Cout, N*S)."""
    def kernel(h_ref, skip_ref, mask_ref, ga_ref, ba_ref, w1_ref,
               gb_ref, bb_ref, wp_ref, o_ref):
        mask = mask_ref[...]
        s = h_ref[...] + skip_ref[...]
        a = _bn_relu_guarded(s, mask, inv_count, ga_ref[...], ba_ref[...])
        y = _corr(a, w1_ref[...], k1, k1_left)
        b = _bn_relu_guarded(y, mask, inv_count, gb_ref[...], bb_ref[...])
        o_ref[...] = _corr(b, wp_ref[...], pf_ntaps, pf_left)
    return kernel


def _make_tail_kernel(inv_count, k, left):
    """Fused: BN -> ReLU -> stride-1 convT -> BN  (bn14 / dec8 / bn15)."""
    def kernel(h_ref, mask_ref, ga_ref, ba_ref, w_ref, gb_ref, bb_ref, o_ref):
        mask = mask_ref[...]
        a = _bn_relu_guarded(h_ref[...], mask, inv_count, ga_ref[...], ba_ref[...])
        y = _corr(a, w_ref[...], k, left)
        scale, shift = _bn_scale_shift(y, mask, inv_count, gb_ref[...], bb_ref[...])
        o_ref[...] = y * scale + shift
    return kernel


# ----------------------------------------------------------------------------
# Wrapper-side weight packing / layout glue (pure XLA, outside the kernels).
# Conv biases are dropped everywhere: every conv feeds a training-mode BN
# whose mean subtraction cancels a per-channel constant exactly.
# ----------------------------------------------------------------------------
def _pack_taps_s1(w):
    """ConvTranspose1d(stride=1, padding=(K-1)//2) weight (Cin, Cout, K) ->
    (Cout, K*Cin); slot u multiplies x[j + u - (K-1)//2]."""
    cin, cout, k = w.shape
    cols = [jnp.transpose(w[:, :, k - 1 - u]) for u in range(k)]
    return jnp.stack(cols, axis=1).reshape(cout, k * cin)


def _pack_taps_polyphase(w):
    """ConvTranspose1d(stride=2, padding=(K-1)//2, output_padding=1) weight
    (Cin, Cout, K) -> single packed weight (2*Cout, ntaps*Cin) that computes
    BOTH output phases (y[2r+0], y[2r+1]) in one matmul over the
    un-upsampled input; slots where a phase has no tap hold zeros."""
    cin, cout, k = w.shape
    pad = (k - 1) // 2
    phase_maps = []
    for q in (0, 1):
        parity = (q + pad) % 2
        c = (q + pad - parity) // 2
        m = {}
        for kk in range(parity, k, 2):
            m[c - (kk - parity) // 2] = kk      # lane offset d -> torch tap kk
        phase_maps.append(m)
    offsets = sorted(set(phase_maps[0]) | set(phase_maps[1]))
    assert offsets == list(range(offsets[0], offsets[-1] + 1))
    left = -offsets[0]
    blocks = []
    for q in (0, 1):
        cols = [jnp.transpose(w[:, :, phase_maps[q][d]]) if d in phase_maps[q]
                else jnp.zeros((cout, cin), w.dtype) for d in offsets]
        blocks.append(jnp.stack(cols, axis=1).reshape(cout, len(offsets) * cin))
    return jnp.concatenate(blocks, axis=0), len(offsets), left


def _to_lanes(x, guard):
    """(N, C, L) -> (C, N*(L+guard)) with `guard` trailing zero lanes/segment."""
    n, c, l = x.shape
    x = jnp.transpose(x, (1, 0, 2))
    if guard:
        x = jnp.pad(x, ((0, 0), (0, 0), (0, guard)))
    return x.reshape(c, n * (l + guard))


def _from_lanes(y, n, l_data):
    """(C, N*S) -> (N, C, l_data), stripping the guard lanes."""
    c, nl = y.shape
    seg = nl // n
    return jnp.transpose(y.reshape(c, n, seg)[:, :, :l_data], (1, 0, 2))


def _guard_mask(n, l_data, guard):
    seg = jnp.concatenate([jnp.ones((1, l_data), jnp.float32),
                           jnp.zeros((1, guard), jnp.float32)], axis=1)
    return jnp.tile(seg, (1, n))


def _interleave_phases(p, n):
    """(2*C, N*S) phase-stacked output -> (C, N*2S) lane-interleaved."""
    c2, nl = p.shape
    c = c2 // 2
    seg = nl // n
    p = p.reshape(2, c, n, seg)
    return jnp.transpose(p, (1, 2, 3, 0)).reshape(c, n * 2 * seg)


def _group_call(h_c, skip_c, mask, bn_a, conv1, bn_b, conv2, inv_count):
    cin1, cout1, k1 = conv1["w"].shape
    cout2 = conv2["w"].shape[1]
    nl = h_c.shape[1]
    w1 = _pack_taps_s1(conv1["w"]).astype(MATMUL_DTYPE)
    wp, pf_ntaps, pf_left = _pack_taps_polyphase(conv2["w"])
    wp = wp.astype(MATMUL_DTYPE)
    args = (h_c, skip_c, mask,
            bn_a["gamma"].reshape(-1, 1), bn_a["beta"].reshape(-1, 1), w1,
            bn_b["gamma"].reshape(-1, 1), bn_b["beta"].reshape(-1, 1), wp)
    kernel = _make_group_kernel(inv_count, k1, (k1 - 1) // 2, pf_ntaps, pf_left)
    xs_bytes = (k1 * cin1 + pf_ntaps * cout1) * nl * jnp.dtype(MATMUL_DTYPE).itemsize
    out_bytes = 2 * cout2 * nl * 4
    return pl.pallas_call(
        kernel,
        out_shape=jax.ShapeDtypeStruct((2 * cout2, nl), jnp.float32),
        in_specs=[_vmem() for _ in args],
        out_specs=_vmem(),
        compiler_params=pltpu.CompilerParams(
            vmem_limit_bytes=_vmem_limit(args, out_bytes, xs_bytes)),
    )(*args)


def _tail_call(h_c, mask, bn_a, conv, bn_b, inv_count):
    cin, cout, k = conv["w"].shape
    nl = h_c.shape[1]
    w = _pack_taps_s1(conv["w"]).astype(MATMUL_DTYPE)
    args = (h_c, mask,
            bn_a["gamma"].reshape(-1, 1), bn_a["beta"].reshape(-1, 1), w,
            bn_b["gamma"].reshape(-1, 1), bn_b["beta"].reshape(-1, 1))
    kernel = _make_tail_kernel(inv_count, k, (k - 1) // 2)
    xs_bytes = k * cin * nl * jnp.dtype(MATMUL_DTYPE).itemsize
    out_bytes = cout * nl * 4
    return pl.pallas_call(
        kernel,
        out_shape=jax.ShapeDtypeStruct((cout, nl), jnp.float32),
        in_specs=[_vmem() for _ in args],
        out_specs=_vmem(),
        compiler_params=pltpu.CompilerParams(
            vmem_limit_bytes=_vmem_limit(args, out_bytes, xs_bytes)),
    )(*args)


# ----------------------------------------------------------------------------
# Forward pass (matches SeismogramDecoder.forward with bottleneck=None).
# Inputs arrive in the torch NCL layout.
# ----------------------------------------------------------------------------
def seismogram_decoder_forward(params, x, x1, x2, x3):
    n, _, l0 = x.shape
    g = GUARD0
    f32 = jnp.float32
    xc = _to_lanes(x.astype(f32), g)
    x3c = _to_lanes(x3.astype(f32), g)
    x2c = _to_lanes(x2.astype(f32), 2 * g)
    x1c = _to_lanes(x1.astype(f32), 4 * g)
    m1 = _guard_mask(n, l0, g)
    m2 = _guard_mask(n, 2 * l0, 2 * g)
    m3 = _guard_mask(n, 4 * l0, 4 * g)
    m4 = _guard_mask(n, 8 * l0, 8 * g)

    # group 1: relu(bn8(x+x3)) -> relu(bn9(dec2)) -> dec3c (fused polyphase)
    p = _group_call(xc, x3c, m1, params["bn8"], params["dec2"], params["bn9"],
                    params["dec3c"], 1.0 / float(n * l0))
    t = _interleave_phases(p, n)                              # (32, N*2S)
    # group 2: relu(bn10(.+x2)) -> relu(bn11(dec4)) -> dec5c
    p = _group_call(t, x2c, m2, params["bn10"], params["dec4"], params["bn11"],
                    params["dec5c"], 1.0 / float(n * 2 * l0))
    t = _interleave_phases(p, n)                              # (16, N*4S)
    # group 3: relu(bn12(.+x1)) -> relu(bn13(dec6)) -> dec7
    p = _group_call(t, x1c, m3, params["bn12"], params["dec6"], params["bn13"],
                    params["dec7"], 1.0 / float(n * 4 * l0))
    t = _interleave_phases(p, n)                              # (8, N*8S)
    # tail: relu(bn14(.)) -> bn15(dec8)
    out = _tail_call(t, m4, params["bn14"], params["dec8"], params["bn15"],
                     1.0 / float(n * 8 * l0))
    return _from_lanes(out, n, 8 * l0)                        # (N, 3, 8L)


# ----------------------------------------------------------------------------
# Synthetic parameters (torch layouts; dec1c unused in forward and omitted).
# ----------------------------------------------------------------------------
_CONV_SHAPES = {            # (Cin, Cout, K) -- torch ConvTranspose1d weight layout
    "dec2":  (64, 32, 3),
    "dec3c": (32, 32, 5),
    "dec4":  (32, 16, 5),
    "dec5c": (16, 16, 7),
    "dec6":  (16, 8, 7),
    "dec7":  (8, 8, 9),
    "dec8":  (8, 3, 9),
}
_BN_CHANNELS = {"bn8": 64, "bn9": 32, "bn10": 32, "bn11": 16, "bn12": 16,
                "bn13": 8, "bn14": 8, "bn15": 3}


def init_params(key):
    params = {}
    for name, (cin, cout, k) in _CONV_SHAPES.items():
        key, kw, kb = jax.random.split(key, 3)
        bound = 1.0 / math.sqrt(cout * k)
        params[name] = dict(
            w=jax.random.uniform(kw, (cin, cout, k), jnp.float32, -bound, bound),
            b=jax.random.uniform(kb, (cout,), jnp.float32, -bound, bound))
    for name, c in _BN_CHANNELS.items():
        params[name] = dict(gamma=jnp.ones((c,), jnp.float32),
                            beta=jnp.zeros((c,), jnp.float32))
    return params


# ----------------------------------------------------------------------------
# Pure-XLA reference.  `conv_dtype` lets the reference quantize conv operands
# to bf16 exactly where the kernel does (f32 accumulation in both), giving a
# TIGHT structural check; conv_dtype=f32 gives the full-precision forward.
# Conv biases are kept here (as in torch) -- they cancel in the BNs.
# ----------------------------------------------------------------------------
def _convt_ref(x, conv, stride, pad, out_pad, conv_dtype):
    w, b = conv["w"], conv["b"]
    k = w.shape[2]
    w_oik = jnp.transpose(jnp.flip(w, axis=2), (1, 0, 2)).astype(conv_dtype)
    y = jax.lax.conv_general_dilated(
        x.astype(conv_dtype), w_oik, window_strides=(1,),
        padding=[(k - 1 - pad, k - 1 - pad + out_pad)],
        lhs_dilation=(stride,), rhs_dilation=(1,),
        dimension_numbers=("NCH", "OIH", "NCH"),
        preferred_element_type=jnp.float32,
        precision=jax.lax.Precision.HIGHEST)
    return y + b[None, :, None]


def _bn_ref(x, bn):
    mean = jnp.mean(x, axis=(0, 2), keepdims=True)
    var = jnp.mean((x - mean) ** 2, axis=(0, 2), keepdims=True)
    return ((x - mean) * jax.lax.rsqrt(var + EPS) * bn["gamma"][None, :, None]
            + bn["beta"][None, :, None])


def reference_forward(params, x, x1, x2, x3, conv_dtype=jnp.float32):
    r = jax.nn.relu
    ct = functools.partial(_convt_ref, conv_dtype=conv_dtype)
    h = r(_bn_ref(x + x3, params["bn8"]))
    h = r(_bn_ref(ct(h, params["dec2"], 1, 1, 0), params["bn9"]))
    h = ct(h, params["dec3c"], 2, 2, 1)
    h = r(_bn_ref(h + x2, params["bn10"]))
    h = r(_bn_ref(ct(h, params["dec4"], 1, 2, 0), params["bn11"]))
    h = ct(h, params["dec5c"], 2, 3, 1)
    h = r(_bn_ref(h + x1, params["bn12"]))
    h = r(_bn_ref(ct(h, params["dec6"], 1, 3, 0), params["bn13"]))
    h = r(_bn_ref(ct(h, params["dec7"], 2, 4, 1), params["bn14"]))
    return _bn_ref(ct(h, params["dec8"], 1, 4, 0), params["bn15"])


if __name__ == "__main__":
    N, L0 = 2, 128            # small but lane-friendly (final length 8*L0 = 1024)
    key = jax.random.PRNGKey(0)
    kp, kx, k1, k2, k3 = jax.random.split(key, 5)
    params = init_params(kp)

    x = jax.random.normal(kx, (N, 64, L0), jnp.float32)
    x3 = jax.random.normal(k3, (N, 64, L0), jnp.float32)
    x2 = jax.random.normal(k2, (N, 32, 2 * L0), jnp.float32)
    x1 = jax.random.normal(k1, (N, 16, 4 * L0), jnp.float32)

    fwd = jax.jit(seismogram_decoder_forward)
    out = jax.block_until_ready(fwd(params, x, x1, x2, x3))

    assert out.shape == (N, 3, 8 * L0), out.shape
    assert bool(jnp.all(jnp.isfinite(out)))

    # Tight structural check: reference with the same bf16 conv operands /
    # f32 accumulation -- any indexing / polyphase / guard-lane bug shows up
    # as O(1) error, well above this tolerance.
    ref_q = jax.jit(functools.partial(reference_forward,
                                      conv_dtype=MATMUL_DTYPE))(params, x, x1, x2, x3)
    err_struct = float(jnp.max(jnp.abs(out - ref_q)))
    assert err_struct < 1e-2, f"structural max abs error: {err_struct}"

    # Loose drift check vs the full-f32 reference (bounds bf16 quantization).
    ref_f32 = jax.jit(reference_forward)(params, x, x1, x2, x3)
    err_drift = float(jnp.max(jnp.abs(out - ref_f32)))
    assert err_drift < 0.25, f"bf16 drift vs f32 reference: {err_drift}"

    print("KERNEL_OK")
</pallas_src>

<mosaic_0001>
module attributes {stable_mosaic.version = 11 : i64} {
  func.func @kernel(%arg0: memref<64x258xf32, #tpu.memory_space<vmem>>, %arg1: memref<64x258xf32, #tpu.memory_space<vmem>>, %arg2: memref<1x258xf32, #tpu.memory_space<vmem>>, %arg3: memref<64x1xf32, #tpu.memory_space<vmem>>, %arg4: memref<64x1xf32, #tpu.memory_space<vmem>>, %arg5: memref<32x192xbf16, #tpu.memory_space<vmem>>, %arg6: memref<32x1xf32, #tpu.memory_space<vmem>>, %arg7: memref<32x1xf32, #tpu.memory_space<vmem>>, %arg8: memref<64x96xbf16, #tpu.memory_space<vmem>>, %arg9: memref<64x258xf32, #tpu.memory_space<vmem>>) attributes {dimension_semantics = [], scalar_prefetch = 0 : i64, scratch_operands = 0 : i64, tpu.core_type = #tpu.core_type<tc>} {
    %c0 = arith.constant 0 : index
    %c0_0 = arith.constant 0 : index
    %0 = vector.load %arg2[%c0, %c0_0] : memref<1x258xf32, #tpu.memory_space<vmem>>, vector<1x258xf32>
    %c0_1 = arith.constant 0 : index
    %c0_2 = arith.constant 0 : index
    %1 = vector.load %arg0[%c0_1, %c0_2] : memref<64x258xf32, #tpu.memory_space<vmem>>, vector<64x258xf32>
    %c0_3 = arith.constant 0 : index
    %c0_4 = arith.constant 0 : index
    %2 = vector.load %arg1[%c0_3, %c0_4] : memref<64x258xf32, #tpu.memory_space<vmem>>, vector<64x258xf32>
    %3 = arith.addf %1, %2 : vector<64x258xf32>
    %c0_5 = arith.constant 0 : index
    %c0_6 = arith.constant 0 : index
    %4 = vector.load %arg3[%c0_5, %c0_6] : memref<64x1xf32, #tpu.memory_space<vmem>>, vector<64x1xf32>
    %c0_7 = arith.constant 0 : index
    %c0_8 = arith.constant 0 : index
    %5 = vector.load %arg4[%c0_7, %c0_8] : memref<64x1xf32, #tpu.memory_space<vmem>>, vector<64x1xf32>
    %6 = vector.broadcast %0 : vector<1x258xf32> to vector<64x258xf32>
    %7 = arith.mulf %3, %6 : vector<64x258xf32>
    %cst = arith.constant dense<0.000000e+00> : vector<64xf32>
    %8 = vector.multi_reduction <add>, %7, %cst [1] : vector<64x258xf32> to vector<64xf32>
    %9 = vector.shape_cast %8 : vector<64xf32> to vector<64x1xf32>
    %cst_9 = arith.constant 3.906250e-03 : f32
    %10 = vector.broadcast %cst_9 : f32 to vector<64x1xf32>
    %11 = arith.mulf %9, %10 : vector<64x1xf32>
    %12 = arith.mulf %3, %7 : vector<64x258xf32>
    %cst_10 = arith.constant dense<0.000000e+00> : vector<64xf32>
    %13 = vector.multi_reduction <add>, %12, %cst_10 [1] : vector<64x258xf32> to vector<64xf32>
    %14 = vector.shape_cast %13 : vector<64xf32> to vector<64x1xf32>
    %cst_11 = arith.constant 3.906250e-03 : f32
    %15 = vector.broadcast %cst_11 : f32 to vector<64x1xf32>
    %16 = arith.mulf %14, %15 : vector<64x1xf32>
    %17 = arith.mulf %11, %11 : vector<64x1xf32>
    %18 = arith.subf %16, %17 : vector<64x1xf32>
    %cst_12 = arith.constant 9.99999974E-6 : f32
    %19 = vector.broadcast %cst_12 : f32 to vector<64x1xf32>
    %20 = arith.addf %18, %19 : vector<64x1xf32>
    %21 = math.rsqrt %20 : vector<64x1xf32>
    %22 = arith.mulf %4, %21 : vector<64x1xf32>
    %23 = arith.mulf %11, %22 : vector<64x1xf32>
    %24 = arith.subf %5, %23 : vector<64x1xf32>
    %25 = vector.broadcast %22 : vector<64x1xf32> to vector<64x258xf32>
    %26 = arith.mulf %3, %25 : vector<64x258xf32>
    %27 = vector.broadcast %24 : vector<64x1xf32> to vector<64x258xf32>
    %28 = arith.addf %26, %27 : vector<64x258xf32>
    %cst_13 = arith.constant 0.000000e+00 : f32
    %29 = vector.broadcast %cst_13 : f32 to vector<64x258xf32>
    %30 = arith.maximumf %28, %29 : vector<64x258xf32>
    %31 = vector.broadcast %0 : vector<1x258xf32> to vector<64x258xf32>
    %32 = arith.mulf %30, %31 : vector<64x258xf32>
    %c0_14 = arith.constant 0 : index
    %c0_15 = arith.constant 0 : index
    %33 = vector.load %arg5[%c0_14, %c0_15] : memref<32x192xbf16, #tpu.memory_space<vmem>>, vector<32x192xbf16>
    %34 = arith.truncf %32 : vector<64x258xf32> to vector<64x258xbf16>
    %cst_16 = arith.constant 0.000000e+00 : bf16
    %35 = vector.broadcast %cst_16 : bf16 to vector<64x1xbf16>
    %cst_17 = arith.constant 0.000000e+00 : bf16
    %36 = vector.broadcast %cst_17 : bf16 to vector<64x1xbf16>
    %37 = tpu.concatenate %35, %34, %36 in 1 : vector<64x1xbf16>, vector<64x258xbf16>, vector<64x1xbf16> -> vector<64x260xbf16>
    %38 = vector.extract_strided_slice %37 {offsets = [0, 0], sizes = [64, 258], strides = [1, 1]} : vector<64x260xbf16> to vector<64x258xbf16>
    %39 = vector.extract_strided_slice %37 {offsets = [0, 1], sizes = [64, 258], strides = [1, 1]} : vector<64x260xbf16> to vector<64x258xbf16>
    %40 = vector.extract_strided_slice %37 {offsets = [0, 2], sizes = [64, 258], strides = [1, 1]} : vector<64x260xbf16> to vector<64x258xbf16>
    %41 = tpu.concatenate %38, %39, %40 in 0 : vector<64x258xbf16>, vector<64x258xbf16>, vector<64x258xbf16> -> vector<192x258xbf16>
    %cst_18 = arith.constant dense<0.000000e+00> : vector<32x258xf32>
    %42 = tpu.matmul %33, %41, %cst_18 {dimension_numbers = #tpu.dot_dimension_numbers<[1], [0], [0], [1], [0, 0, 1, 1], [], []>} : vector<32x192xbf16>, vector<192x258xbf16>, vector<32x258xf32> -> vector<32x258xf32>
    %c0_19 = arith.constant 0 : index
    %c0_20 = arith.constant 0 : index
    %43 = vector.load %arg6[%c0_19, %c0_20] : memref<32x1xf32, #tpu.memory_space<vmem>>, vector<32x1xf32>
    %c0_21 = arith.constant 0 : index
    %c0_22 = arith.constant 0 : index
    %44 = vector.load %arg7[%c0_21, %c0_22] : memref<32x1xf32, #tpu.memory_space<vmem>>, vector<32x1xf32>
    %45 = vector.broadcast %0 : vector<1x258xf32> to vector<32x258xf32>
    %46 = arith.mulf %42, %45 : vector<32x258xf32>
    %cst_23 = arith.constant dense<0.000000e+00> : vector<32xf32>
    %47 = vector.multi_reduction <add>, %46, %cst_23 [1] : vector<32x258xf32> to vector<32xf32>
    %48 = vector.shape_cast %47 : vector<32xf32> to vector<32x1xf32>
    %cst_24 = arith.constant 3.906250e-03 : f32
    %49 = vector.broadcast %cst_24 : f32 to vector<32x1xf32>
    %50 = arith.mulf %48, %49 : vector<32x1xf32>
    %51 = arith.mulf %42, %46 : vector<32x258xf32>
    %cst_25 = arith.constant dense<0.000000e+00> : vector<32xf32>
    %52 = vector.multi_reduction <add>, %51, %cst_25 [1] : vector<32x258xf32> to vector<32xf32>
    %53 = vector.shape_cast %52 : vector<32xf32> to vector<32x1xf32>
    %cst_26 = arith.constant 3.906250e-03 : f32
    %54 = vector.broadcast %cst_26 : f32 to vector<32x1xf32>
    %55 = arith.mulf %53, %54 : vector<32x1xf32>
    %56 = arith.mulf %50, %50 : vector<32x1xf32>
    %57 = arith.subf %55, %56 : vector<32x1xf32>
    %cst_27 = arith.constant 9.99999974E-6 : f32
    %58 = vector.broadcast %cst_27 : f32 to vector<32x1xf32>
    %59 = arith.addf %57, %58 : vector<32x1xf32>
    %60 = math.rsqrt %59 : vector<32x1xf32>
    %61 = arith.mulf %43, %60 : vector<32x1xf32>
    %62 = arith.mulf %50, %61 : vector<32x1xf32>
    %63 = arith.subf %44, %62 : vector<32x1xf32>
    %64 = vector.broadcast %61 : vector<32x1xf32> to vector<32x258xf32>
    %65 = arith.mulf %42, %64 : vector<32x258xf32>
    %66 = vector.broadcast %63 : vector<32x1xf32> to vector<32x258xf32>
    %67 = arith.addf %65, %66 : vector<32x258xf32>
    %cst_28 = arith.constant 0.000000e+00 : f32
    %68 = vector.broadcast %cst_28 : f32 to vector<32x258xf32>
    %69 = arith.maximumf %67, %68 : vector<32x258xf32>
    %70 = vector.broadcast %0 : vector<1x258xf32> to vector<32x258xf32>
    %71 = arith.mulf %69, %70 : vector<32x258xf32>
    %c0_29 = arith.constant 0 : index
    %c0_30 = arith.constant 0 : index
    %72 = vector.load %arg8[%c0_29, %c0_30] : memref<64x96xbf16, #tpu.memory_space<vmem>>, vector<64x96xbf16>
    %73 = arith.truncf %71 : vector<32x258xf32> to vector<32x258xbf16>
    %cst_31 = arith.constant 0.000000e+00 : bf16
    %74 = vector.broadcast %cst_31 : bf16 to vector<32x1xbf16>
    %cst_32 = arith.constant 0.000000e+00 : bf16
    %75 = vector.broadcast %cst_32 : bf16 to vector<32x1xbf16>
    %76 = tpu.concatenate %74, %73, %75 in 1 : vector<32x1xbf16>, vector<32x258xbf16>, vector<32x1xbf16> -> vector<32x260xbf16>
    %77 = vector.extract_strided_slice %76 {offsets = [0, 0], sizes = [32, 258], strides = [1, 1]} : vector<32x260xbf16> to vector<32x258xbf16>
    %78 = vector.extract_strided_slice %76 {offsets = [0, 1], sizes = [32, 258], strides = [1, 1]} : vector<32x260xbf16> to vector<32x258xbf16>
    %79 = vector.extract_strided_slice %76 {offsets = [0, 2], sizes = [32, 258], strides = [1, 1]} : vector<32x260xbf16> to vector<32x258xbf16>
    %80 = tpu.concatenate %77, %78, %79 in 0 : vector<32x258xbf16>, vector<32x258xbf16>, vector<32x258xbf16> -> vector<96x258xbf16>
    %cst_33 = arith.constant dense<0.000000e+00> : vector<64x258xf32>
    %81 = tpu.matmul %72, %80, %cst_33 {dimension_numbers = #tpu.dot_dimension_numbers<[1], [0], [0], [1], [0, 0, 1, 1], [], []>} : vector<64x96xbf16>, vector<96x258xbf16>, vector<64x258xf32> -> vector<64x258xf32>
    %c0_34 = arith.constant 0 : index
    %c0_35 = arith.constant 0 : index
    %82 = vector.load %arg9[%c0_34, %c0_35] : memref<64x258xf32, #tpu.memory_space<vmem>>, vector<64x258xf32>
    tpu.vector_store %arg9[%c0_34, %c0_35], %81 {strides = array<i32>} : memref<64x258xf32, #tpu.memory_space<vmem>>, vector<64x258xf32>,
    return
  }
}

module attributes {stable_mosaic.version = 11 : i64} {
  func.func @kernel(%arg0: memref<32x516xf32, #tpu.memory_space<vmem>>, %arg1: memref<32x516xf32, #tpu.memory_space<vmem>>, %arg2: memref<1x516xf32, #tpu.memory_space<vmem>>, %arg3: memref<32x1xf32, #tpu.memory_space<vmem>>, %arg4: memref<32x1xf32, #tpu.memory_space<vmem>>, %arg5: memref<16x160xbf16, #tpu.memory_space<vmem>>, %arg6: memref<16x1xf32, #tpu.memory_space<vmem>>, %arg7: memref<16x1xf32, #tpu.memory_space<vmem>>, %arg8: memref<32x64xbf16, #tpu.memory_space<vmem>>, %arg9: memref<32x516xf32, #tpu.memory_space<vmem>>) attributes {dimension_semantics = [], scalar_prefetch = 0 : i64, scratch_operands = 0 : i64, tpu.core_type = #tpu.core_type<tc>} {
    %c0 = arith.constant 0 : index
    %c0_0 = arith.constant 0 : index
    %0 = vector.load %arg2[%c0, %c0_0] : memref<1x516xf32, #tpu.memory_space<vmem>>, vector<1x516xf32>
    %c0_1 = arith.constant 0 : index
    %c0_2 = arith.constant 0 : index
    %1 = vector.load %arg0[%c0_1, %c0_2] : memref<32x516xf32, #tpu.memory_space<vmem>>, vector<32x516xf32>
    %c0_3 = arith.constant 0 : index
    %c0_4 = arith.constant 0 : index
    %2 = vector.load %arg1[%c0_3, %c0_4] : memref<32x516xf32, #tpu.memory_space<vmem>>, vector<32x516xf32>
    %3 = arith.addf %1, %2 : vector<32x516xf32>
    %c0_5 = arith.constant 0 : index
    %c0_6 = arith.constant 0 : index
    %4 = vector.load %arg3[%c0_5, %c0_6] : memref<32x1xf32, #tpu.memory_space<vmem>>, vector<32x1xf32>
    %c0_7 = arith.constant 0 : index
    %c0_8 = arith.constant 0 : index
    %5 = vector.load %arg4[%c0_7, %c0_8] : memref<32x1xf32, #tpu.memory_space<vmem>>, vector<32x1xf32>
    %6 = vector.broadcast %0 : vector<1x516xf32> to vector<32x516xf32>
    %7 = arith.mulf %3, %6 : vector<32x516xf32>
    %cst = arith.constant dense<0.000000e+00> : vector<32xf32>
    %8 = vector.multi_reduction <add>, %7, %cst [1] : vector<32x516xf32> to vector<32xf32>
    %9 = vector.shape_cast %8 : vector<32xf32> to vector<32x1xf32>
    %cst_9 = arith.constant 0.001953125 : f32
    %10 = vector.broadcast %cst_9 : f32 to vector<32x1xf32>
    %11 = arith.mulf %9, %10 : vector<32x1xf32>
    %12 = arith.mulf %3, %7 : vector<32x516xf32>
    %cst_10 = arith.constant dense<0.000000e+00> : vector<32xf32>
    %13 = vector.multi_reduction <add>, %12, %cst_10 [1] : vector<32x516xf32> to vector<32xf32>
    %14 = vector.shape_cast %13 : vector<32xf32> to vector<32x1xf32>
    %cst_11 = arith.constant 0.001953125 : f32
    %15 = vector.broadcast %cst_11 : f32 to vector<32x1xf32>
    %16 = arith.mulf %14, %15 : vector<32x1xf32>
    %17 = arith.mulf %11, %11 : vector<32x1xf32>
    %18 = arith.subf %16, %17 : vector<32x1xf32>
    %cst_12 = arith.constant 9.99999974E-6 : f32
    %19 = vector.broadcast %cst_12 : f32 to vector<32x1xf32>
    %20 = arith.addf %18, %19 : vector<32x1xf32>
    %21 = math.rsqrt %20 : vector<32x1xf32>
    %22 = arith.mulf %4, %21 : vector<32x1xf32>
    %23 = arith.mulf %11, %22 : vector<32x1xf32>
    %24 = arith.subf %5, %23 : vector<32x1xf32>
    %25 = vector.broadcast %22 : vector<32x1xf32> to vector<32x516xf32>
    %26 = arith.mulf %3, %25 : vector<32x516xf32>
    %27 = vector.broadcast %24 : vector<32x1xf32> to vector<32x516xf32>
    %28 = arith.addf %26, %27 : vector<32x516xf32>
    %cst_13 = arith.constant 0.000000e+00 : f32
    %29 = vector.broadcast %cst_13 : f32 to vector<32x516xf32>
    %30 = arith.maximumf %28, %29 : vector<32x516xf32>
    %31 = vector.broadcast %0 : vector<1x516xf32> to vector<32x516xf32>
    %32 = arith.mulf %30, %31 : vector<32x516xf32>
    %c0_14 = arith.constant 0 : index
    %c0_15 = arith.constant 0 : index
    %33 = vector.load %arg5[%c0_14, %c0_15] : memref<16x160xbf16, #tpu.memory_space<vmem>>, vector<16x160xbf16>
    %34 = arith.truncf %32 : vector<32x516xf32> to vector<32x516xbf16>
    %cst_16 = arith.constant 0.000000e+00 : bf16
    %35 = vector.broadcast %cst_16 : bf16 to vector<32x2xbf16>
    %cst_17 = arith.constant 0.000000e+00 : bf16
    %36 = vector.broadcast %cst_17 : bf16 to vector<32x2xbf16>
    %37 = tpu.concatenate %35, %34, %36 in 1 : vector<32x2xbf16>, vector<32x516xbf16>, vector<32x2xbf16> -> vector<32x520xbf16>
    %38 = vector.extract_strided_slice %37 {offsets = [0, 0], sizes = [32, 516], strides = [1, 1]} : vector<32x520xbf16> to vector<32x516xbf16>
    %39 = vector.extract_strided_slice %37 {offsets = [0, 1], sizes = [32, 516], strides = [1, 1]} : vector<32x520xbf16> to vector<32x516xbf16>
    %40 = vector.extract_strided_slice %37 {offsets = [0, 2], sizes = [32, 516], strides = [1, 1]} : vector<32x520xbf16> to vector<32x516xbf16>
    %41 = vector.extract_strided_slice %37 {offsets = [0, 3], sizes = [32, 516], strides = [1, 1]} : vector<32x520xbf16> to vector<32x516xbf16>
    %42 = vector.extract_strided_slice %37 {offsets = [0, 4], sizes = [32, 516], strides = [1, 1]} : vector<32x520xbf16> to vector<32x516xbf16>
    %43 = tpu.concatenate %38, %39, %40, %41, %42 in 0 : vector<32x516xbf16>, vector<32x516xbf16>, vector<32x516xbf16>, vector<32x516xbf16>, vector<32x516xbf16> -> vector<160x516xbf16>
    %cst_18 = arith.constant dense<0.000000e+00> : vector<16x516xf32>
    %44 = tpu.matmul %33, %43, %cst_18 {dimension_numbers = #tpu.dot_dimension_numbers<[1], [0], [0], [1], [0, 0, 1, 1], [], []>} : vector<16x160xbf16>, vector<160x516xbf16>, vector<16x516xf32> -> vector<16x516xf32>
    %c0_19 = arith.constant 0 : index
    %c0_20 = arith.constant 0 : index
    %45 = vector.load %arg6[%c0_19, %c0_20] : memref<16x1xf32, #tpu.memory_space<vmem>>, vector<16x1xf32>
    %c0_21 = arith.constant 0 : index
    %c0_22 = arith.constant 0 : index
    %46 = vector.load %arg7[%c0_21, %c0_22] : memref<16x1xf32, #tpu.memory_space<vmem>>, vector<16x1xf32>
    %47 = vector.broadcast %0 : vector<1x516xf32> to vector<16x516xf32>
    %48 = arith.mulf %44, %47 : vector<16x516xf32>
    %cst_23 = arith.constant dense<0.000000e+00> : vector<16xf32>
    %49 = vector.multi_reduction <add>, %48, %cst_23 [1] : vector<16x516xf32> to vector<16xf32>
    %50 = vector.shape_cast %49 : vector<16xf32> to vector<16x1xf32>
    %cst_24 = arith.constant 0.001953125 : f32
    %51 = vector.broadcast %cst_24 : f32 to vector<16x1xf32>
    %52 = arith.mulf %50, %51 : vector<16x1xf32>
    %53 = arith.mulf %44, %48 : vector<16x516xf32>
    %cst_25 = arith.constant dense<0.000000e+00> : vector<16xf32>
    %54 = vector.multi_reduction <add>, %53, %cst_25 [1] : vector<16x516xf32> to vector<16xf32>
    %55 = vector.shape_cast %54 : vector<16xf32> to vector<16x1xf32>
    %cst_26 = arith.constant 0.001953125 : f32
    %56 = vector.broadcast %cst_26 : f32 to vector<16x1xf32>
    %57 = arith.mulf %55, %56 : vector<16x1xf32>
    %58 = arith.mulf %52, %52 : vector<16x1xf32>
    %59 = arith.subf %57, %58 : vector<16x1xf32>
    %cst_27 = arith.constant 9.99999974E-6 : f32
    %60 = vector.broadcast %cst_27 : f32 to vector<16x1xf32>
    %61 = arith.addf %59, %60 : vector<16x1xf32>
    %62 = math.rsqrt %61 : vector<16x1xf32>
    %63 = arith.mulf %45, %62 : vector<16x1xf32>
    %64 = arith.mulf %52, %63 : vector<16x1xf32>
    %65 = arith.subf %46, %64 : vector<16x1xf32>
    %66 = vector.broadcast %63 : vector<16x1xf32> to vector<16x516xf32>
    %67 = arith.mulf %44, %66 : vector<16x516xf32>
    %68 = vector.broadcast %65 : vector<16x1xf32> to vector<16x516xf32>
    %69 = arith.addf %67, %68 : vector<16x516xf32>
    %cst_28 = arith.constant 0.000000e+00 : f32
    %70 = vector.broadcast %cst_28 : f32 to vector<16x516xf32>
    %71 = arith.maximumf %69, %70 : vector<16x516xf32>
    %72 = vector.broadcast %0 : vector<1x516xf32> to vector<16x516xf32>
    %73 = arith.mulf %71, %72 : vector<16x516xf32>
    %c0_29 = arith.constant 0 : index
    %c0_30 = arith.constant 0 : index
    %74 = vector.load %arg8[%c0_29, %c0_30] : memref<32x64xbf16, #tpu.memory_space<vmem>>, vector<32x64xbf16>
    %75 = arith.truncf %73 : vector<16x516xf32> to vector<16x516xbf16>
    %cst_31 = arith.constant 0.000000e+00 : bf16
    %76 = vector.broadcast %cst_31 : bf16 to vector<16x1xbf16>
    %cst_32 = arith.constant 0.000000e+00 : bf16
    %77 = vector.broadcast %cst_32 : bf16 to vector<16x2xbf16>
    %78 = tpu.concatenate %76, %75, %77 in 1 : vector<16x1xbf16>, vector<16x516xbf16>, vector<16x2xbf16> -> vector<16x519xbf16>
    %79 = vector.extract_strided_slice %78 {offsets = [0, 0], sizes = [16, 516], strides = [1, 1]} : vector<16x519xbf16> to vector<16x516xbf16>
    %80 = vector.extract_strided_slice %78 {offsets = [0, 1], sizes = [16, 516], strides = [1, 1]} : vector<16x519xbf16> to vector<16x516xbf16>
    %81 = vector.extract_strided_slice %78 {offsets = [0, 2], sizes = [16, 516], strides = [1, 1]} : vector<16x519xbf16> to vector<16x516xbf16>
    %82 = vector.extract_strided_slice %78 {offsets = [0, 3], sizes = [16, 516], strides = [1, 1]} : vector<16x519xbf16> to vector<16x516xbf16>
    %83 = tpu.concatenate %79, %80, %81, %82 in 0 : vector<16x516xbf16>, vector<16x516xbf16>, vector<16x516xbf16>, vector<16x516xbf16> -> vector<64x516xbf16>
    %cst_33 = arith.constant dense<0.000000e+00> : vector<32x516xf32>
    %84 = tpu.matmul %74, %83, %cst_33 {dimension_numbers = #tpu.dot_dimension_numbers<[1], [0], [0], [1], [0, 0, 1, 1], [], []>} : vector<32x64xbf16>, vector<64x516xbf16>, vector<32x516xf32> -> vector<32x516xf32>
    %c0_34 = arith.constant 0 : index
    %c0_35 = arith.constant 0 : index
    %85 = vector.load %arg9[%c0_34, %c0_35] : memref<32x516xf32, #tpu.memory_space<vmem>>, vector<32x516xf32>
    tpu.vector_store %arg9[%c0_34, %c0_35], %84 {strides = array<i32>} : memref<32x516xf32, #tpu.memory_space<vmem>>, vector<32x516xf32>,
    return
  }
}

module attributes {stable_mosaic.version = 11 : i64} {
  func.func @kernel(%arg0: memref<16x1032xf32, #tpu.memory_space<vmem>>, %arg1: memref<16x1032xf32, #tpu.memory_space<vmem>>, %arg2: memref<1x1032xf32, #tpu.memory_space<vmem>>, %arg3: memref<16x1xf32, #tpu.memory_space<vmem>>, %arg4: memref<16x1xf32, #tpu.memory_space<vmem>>, %arg5: memref<8x112xbf16, #tpu.memory_space<vmem>>, %arg6: memref<8x1xf32, #tpu.memory_space<vmem>>, %arg7: memref<8x1xf32, #tpu.memory_space<vmem>>, %arg8: memref<16x40xbf16, #tpu.memory_space<vmem>>, %arg9: memref<16x1032xf32, #tpu.memory_space<vmem>>) attributes {dimension_semantics = [], scalar_prefetch = 0 : i64, scratch_operands = 0 : i64, tpu.core_type = #tpu.core_type<tc>} {
    %c0 = arith.constant 0 : index
    %c0_0 = arith.constant 0 : index
    %0 = vector.load %arg2[%c0, %c0_0] : memref<1x1032xf32, #tpu.memory_space<vmem>>, vector<1x1032xf32>
    %c0_1 = arith.constant 0 : index
    %c0_2 = arith.constant 0 : index
    %1 = vector.load %arg0[%c0_1, %c0_2] : memref<16x1032xf32, #tpu.memory_space<vmem>>, vector<16x1032xf32>
    %c0_3 = arith.constant 0 : index
    %c0_4 = arith.constant 0 : index
    %2 = vector.load %arg1[%c0_3, %c0_4] : memref<16x1032xf32, #tpu.memory_space<vmem>>, vector<16x1032xf32>
    %3 = arith.addf %1, %2 : vector<16x1032xf32>
    %c0_5 = arith.constant 0 : index
    %c0_6 = arith.constant 0 : index
    %4 = vector.load %arg3[%c0_5, %c0_6] : memref<16x1xf32, #tpu.memory_space<vmem>>, vector<16x1xf32>
    %c0_7 = arith.constant 0 : index
    %c0_8 = arith.constant 0 : index
    %5 = vector.load %arg4[%c0_7, %c0_8] : memref<16x1xf32, #tpu.memory_space<vmem>>, vector<16x1xf32>
    %6 = vector.broadcast %0 : vector<1x1032xf32> to vector<16x1032xf32>
    %7 = arith.mulf %3, %6 : vector<16x1032xf32>
    %cst = arith.constant dense<0.000000e+00> : vector<16xf32>
    %8 = vector.multi_reduction <add>, %7, %cst [1] : vector<16x1032xf32> to vector<16xf32>
    %9 = vector.shape_cast %8 : vector<16xf32> to vector<16x1xf32>
    %cst_9 = arith.constant 9.765625E-4 : f32
    %10 = vector.broadcast %cst_9 : f32 to vector<16x1xf32>
    %11 = arith.mulf %9, %10 : vector<16x1xf32>
    %12 = arith.mulf %3, %7 : vector<16x1032xf32>
    %cst_10 = arith.constant dense<0.000000e+00> : vector<16xf32>
    %13 = vector.multi_reduction <add>, %12, %cst_10 [1] : vector<16x1032xf32> to vector<16xf32>
    %14 = vector.shape_cast %13 : vector<16xf32> to vector<16x1xf32>
    %cst_11 = arith.constant 9.765625E-4 : f32
    %15 = vector.broadcast %cst_11 : f32 to vector<16x1xf32>
    %16 = arith.mulf %14, %15 : vector<16x1xf32>
    %17 = arith.mulf %11, %11 : vector<16x1xf32>
    %18 = arith.subf %16, %17 : vector<16x1xf32>
    %cst_12 = arith.constant 9.99999974E-6 : f32
    %19 = vector.broadcast %cst_12 : f32 to vector<16x1xf32>
    %20 = arith.addf %18, %19 : vector<16x1xf32>
    %21 = math.rsqrt %20 : vector<16x1xf32>
    %22 = arith.mulf %4, %21 : vector<16x1xf32>
    %23 = arith.mulf %11, %22 : vector<16x1xf32>
    %24 = arith.subf %5, %23 : vector<16x1xf32>
    %25 = vector.broadcast %22 : vector<16x1xf32> to vector<16x1032xf32>
    %26 = arith.mulf %3, %25 : vector<16x1032xf32>
    %27 = vector.broadcast %24 : vector<16x1xf32> to vector<16x1032xf32>
    %28 = arith.addf %26, %27 : vector<16x1032xf32>
    %cst_13 = arith.constant 0.000000e+00 : f32
    %29 = vector.broadcast %cst_13 : f32 to vector<16x1032xf32>
    %30 = arith.maximumf %28, %29 : vector<16x1032xf32>
    %31 = vector.broadcast %0 : vector<1x1032xf32> to vector<16x1032xf32>
    %32 = arith.mulf %30, %31 : vector<16x1032xf32>
    %c0_14 = arith.constant 0 : index
    %c0_15 = arith.constant 0 : index
    %33 = vector.load %arg5[%c0_14, %c0_15] : memref<8x112xbf16, #tpu.memory_space<vmem>>, vector<8x112xbf16>
    %34 = arith.truncf %32 : vector<16x1032xf32> to vector<16x1032xbf16>
    %cst_16 = arith.constant 0.000000e+00 : bf16
    %35 = vector.broadcast %cst_16 : bf16 to vector<16x3xbf16>
    %cst_17 = arith.constant 0.000000e+00 : bf16
    %36 = vector.broadcast %cst_17 : bf16 to vector<16x3xbf16>
    %37 = tpu.concatenate %35, %34, %36 in 1 : vector<16x3xbf16>, vector<16x1032xbf16>, vector<16x3xbf16> -> vector<16x1038xbf16>
    %38 = vector.extract_strided_slice %37 {offsets = [0, 0], sizes = [16, 1032], strides = [1, 1]} : vector<16x1038xbf16> to vector<16x1032xbf16>
    %39 = vector.extract_strided_slice %37 {offsets = [0, 1], sizes = [16, 1032], strides = [1, 1]} : vector<16x1038xbf16> to vector<16x1032xbf16>
    %40 = vector.extract_strided_slice %37 {offsets = [0, 2], sizes = [16, 1032], strides = [1, 1]} : vector<16x1038xbf16> to vector<16x1032xbf16>
    %41 = vector.extract_strided_slice %37 {offsets = [0, 3], sizes = [16, 1032], strides = [1, 1]} : vector<16x1038xbf16> to vector<16x1032xbf16>
    %42 = vector.extract_strided_slice %37 {offsets = [0, 4], sizes = [16, 1032], strides = [1, 1]} : vector<16x1038xbf16> to vector<16x1032xbf16>
    %43 = vector.extract_strided_slice %37 {offsets = [0, 5], sizes = [16, 1032], strides = [1, 1]} : vector<16x1038xbf16> to vector<16x1032xbf16>
    %44 = vector.extract_strided_slice %37 {offsets = [0, 6], sizes = [16, 1032], strides = [1, 1]} : vector<16x1038xbf16> to vector<16x1032xbf16>
    %45 = tpu.concatenate %38, %39, %40, %41, %42, %43, %44 in 0 : vector<16x1032xbf16>, vector<16x1032xbf16>, vector<16x1032xbf16>, vector<16x1032xbf16>, vector<16x1032xbf16>, vector<16x1032xbf16>, vector<16x1032xbf16> -> vector<112x1032xbf16>
    %cst_18 = arith.constant dense<0.000000e+00> : vector<8x1032xf32>
    %46 = tpu.matmul %33, %45, %cst_18 {dimension_numbers = #tpu.dot_dimension_numbers<[1], [0], [0], [1], [0, 0, 1, 1], [], []>} : vector<8x112xbf16>, vector<112x1032xbf16>, vector<8x1032xf32> -> vector<8x1032xf32>
    %c0_19 = arith.constant 0 : index
    %c0_20 = arith.constant 0 : index
    %47 = vector.load %arg6[%c0_19, %c0_20] : memref<8x1xf32, #tpu.memory_space<vmem>>, vector<8x1xf32>
    %c0_21 = arith.constant 0 : index
    %c0_22 = arith.constant 0 : index
    %48 = vector.load %arg7[%c0_21, %c0_22] : memref<8x1xf32, #tpu.memory_space<vmem>>, vector<8x1xf32>
    %49 = vector.broadcast %0 : vector<1x1032xf32> to vector<8x1032xf32>
    %50 = arith.mulf %46, %49 : vector<8x1032xf32>
    %cst_23 = arith.constant dense<0.000000e+00> : vector<8xf32>
    %51 = vector.multi_reduction <add>, %50, %cst_23 [1] : vector<8x1032xf32> to vector<8xf32>
    %52 = vector.shape_cast %51 : vector<8xf32> to vector<8x1xf32>
    %cst_24 = arith.constant 9.765625E-4 : f32
    %53 = vector.broadcast %cst_24 : f32 to vector<8x1xf32>
    %54 = arith.mulf %52, %53 : vector<8x1xf32>
    %55 = arith.mulf %46, %50 : vector<8x1032xf32>
    %cst_25 = arith.constant dense<0.000000e+00> : vector<8xf32>
    %56 = vector.multi_reduction <add>, %55, %cst_25 [1] : vector<8x1032xf32> to vector<8xf32>
    %57 = vector.shape_cast %56 : vector<8xf32> to vector<8x1xf32>
    %cst_26 = arith.constant 9.765625E-4 : f32
    %58 = vector.broadcast %cst_26 : f32 to vector<8x1xf32>
    %59 = arith.mulf %57, %58 : vector<8x1xf32>
    %60 = arith.mulf %54, %54 : vector<8x1xf32>
    %61 = arith.subf %59, %60 : vector<8x1xf32>
    %cst_27 = arith.constant 9.99999974E-6 : f32
    %62 = vector.broadcast %cst_27 : f32 to vector<8x1xf32>
    %63 = arith.addf %61, %62 : vector<8x1xf32>
    %64 = math.rsqrt %63 : vector<8x1xf32>
    %65 = arith.mulf %47, %64 : vector<8x1xf32>
    %66 = arith.mulf %54, %65 : vector<8x1xf32>
    %67 = arith.subf %48, %66 : vector<8x1xf32>
    %68 = vector.broadcast %65 : vector<8x1xf32> to vector<8x1032xf32>
    %69 = arith.mulf %46, %68 : vector<8x1032xf32>
    %70 = vector.broadcast %67 : vector<8x1xf32> to vector<8x1032xf32>
    %71 = arith.addf %69, %70 : vector<8x1032xf32>
    %cst_28 = arith.constant 0.000000e+00 : f32
    %72 = vector.broadcast %cst_28 : f32 to vector<8x1032xf32>
    %73 = arith.maximumf %71, %72 : vector<8x1032xf32>
    %74 = vector.broadcast %0 : vector<1x1032xf32> to vector<8x1032xf32>
    %75 = arith.mulf %73, %74 : vector<8x1032xf32>
    %c0_29 = arith.constant 0 : index
    %c0_30 = arith.constant 0 : index
    %76 = vector.load %arg8[%c0_29, %c0_30] : memref<16x40xbf16, #tpu.memory_space<vmem>>, vector<16x40xbf16>
    %77 = arith.truncf %75 : vector<8x1032xf32> to vector<8x1032xbf16>
    %cst_31 = arith.constant 0.000000e+00 : bf16
    %78 = vector.broadcast %cst_31 : bf16 to vector<8x2xbf16>
    %cst_32 = arith.constant 0.000000e+00 : bf16
    %79 = vector.broadcast %cst_32 : bf16 to vector<8x2xbf16>
    %80 = tpu.concatenate %78, %77, %79 in 1 : vector<8x2xbf16>, vector<8x1032xbf16>, vector<8x2xbf16> -> vector<8x1036xbf16>
    %81 = vector.extract_strided_slice %80 {offsets = [0, 0], sizes = [8, 1032], strides = [1, 1]} : vector<8x1036xbf16> to vector<8x1032xbf16>
    %82 = vector.extract_strided_slice %80 {offsets = [0, 1], sizes = [8, 1032], strides = [1, 1]} : vector<8x1036xbf16> to vector<8x1032xbf16>
    %83 = vector.extract_strided_slice %80 {offsets = [0, 2], sizes = [8, 1032], strides = [1, 1]} : vector<8x1036xbf16> to vector<8x1032xbf16>
    %84 = vector.extract_strided_slice %80 {offsets = [0, 3], sizes = [8, 1032], strides = [1, 1]} : vector<8x1036xbf16> to vector<8x1032xbf16>
    %85 = vector.extract_strided_slice %80 {offsets = [0, 4], sizes = [8, 1032], strides = [1, 1]} : vector<8x1036xbf16> to vector<8x1032xbf16>
    %86 = tpu.concatenate %81, %82, %83, %84, %85 in 0 : vector<8x1032xbf16>, vector<8x1032xbf16>, vector<8x1032xbf16>, vector<8x1032xbf16>, vector<8x1032xbf16> -> vector<40x1032xbf16>
    %cst_33 = arith.constant dense<0.000000e+00> : vector<16x1032xf32>
    %87 = tpu.matmul %76, %86, %cst_33 {dimension_numbers = #tpu.dot_dimension_numbers<[1], [0], [0], [1], [0, 0, 1, 1], [], []>} : vector<16x40xbf16>, vector<40x1032xbf16>, vector<16x1032xf32> -> vector<16x1032xf32>
    %c0_34 = arith.constant 0 : index
    %c0_35 = arith.constant 0 : index
    %88 = vector.load %arg9[%c0_34, %c0_35] : memref<16x1032xf32, #tpu.memory_space<vmem>>, vector<16x1032xf32>
    tpu.vector_store %arg9[%c0_34, %c0_35], %87 {strides = array<i32>} : memref<16x1032xf32, #tpu.memory_space<vmem>>, vector<16x1032xf32>,
    return
  }
}

module attributes {stable_mosaic.version = 11 : i64} {
  func.func @kernel(%arg0: memref<8x2064xf32, #tpu.memory_space<vmem>>, %arg1: memref<1x2064xf32, #tpu.memory_space<vmem>>, %arg2: memref<8x1xf32, #tpu.memory_space<vmem>>, %arg3: memref<8x1xf32, #tpu.memory_space<vmem>>, %arg4: memref<3x72xbf16, #tpu.memory_space<vmem>>, %arg5: memref<3x1xf32, #tpu.memory_space<vmem>>, %arg6: memref<3x1xf32, #tpu.memory_space<vmem>>, %arg7: memref<3x2064xf32, #tpu.memory_space<vmem>>) attributes {dimension_semantics = [], scalar_prefetch = 0 : i64, scratch_operands = 0 : i64, tpu.core_type = #tpu.core_type<tc>} {
    %c0 = arith.constant 0 : index
    %c0_0 = arith.constant 0 : index
    %0 = vector.load %arg1[%c0, %c0_0] : memref<1x2064xf32, #tpu.memory_space<vmem>>, vector<1x2064xf32>
    %c0_1 = arith.constant 0 : index
    %c0_2 = arith.constant 0 : index
    %1 = vector.load %arg0[%c0_1, %c0_2] : memref<8x2064xf32, #tpu.memory_space<vmem>>, vector<8x2064xf32>
    %c0_3 = arith.constant 0 : index
    %c0_4 = arith.constant 0 : index
    %2 = vector.load %arg2[%c0_3, %c0_4] : memref<8x1xf32, #tpu.memory_space<vmem>>, vector<8x1xf32>
    %c0_5 = arith.constant 0 : index
    %c0_6 = arith.constant 0 : index
    %3 = vector.load %arg3[%c0_5, %c0_6] : memref<8x1xf32, #tpu.memory_space<vmem>>, vector<8x1xf32>
    %4 = vector.broadcast %0 : vector<1x2064xf32> to vector<8x2064xf32>
    %5 = arith.mulf %1, %4 : vector<8x2064xf32>
    %cst = arith.constant dense<0.000000e+00> : vector<8xf32>
    %6 = vector.multi_reduction <add>, %5, %cst [1] : vector<8x2064xf32> to vector<8xf32>
    %7 = vector.shape_cast %6 : vector<8xf32> to vector<8x1xf32>
    %cst_7 = arith.constant 4.8828125E-4 : f32
    %8 = vector.broadcast %cst_7 : f32 to vector<8x1xf32>
    %9 = arith.mulf %7, %8 : vector<8x1xf32>
    %10 = arith.mulf %1, %5 : vector<8x2064xf32>
    %cst_8 = arith.constant dense<0.000000e+00> : vector<8xf32>
    %11 = vector.multi_reduction <add>, %10, %cst_8 [1] : vector<8x2064xf32> to vector<8xf32>
    %12 = vector.shape_cast %11 : vector<8xf32> to vector<8x1xf32>
    %cst_9 = arith.constant 4.8828125E-4 : f32
    %13 = vector.broadcast %cst_9 : f32 to vector<8x1xf32>
    %14 = arith.mulf %12, %13 : vector<8x1xf32>
    %15 = arith.mulf %9, %9 : vector<8x1xf32>
    %16 = arith.subf %14, %15 : vector<8x1xf32>
    %cst_10 = arith.constant 9.99999974E-6 : f32
    %17 = vector.broadcast %cst_10 : f32 to vector<8x1xf32>
    %18 = arith.addf %16, %17 : vector<8x1xf32>
    %19 = math.rsqrt %18 : vector<8x1xf32>
    %20 = arith.mulf %2, %19 : vector<8x1xf32>
    %21 = arith.mulf %9, %20 : vector<8x1xf32>
    %22 = arith.subf %3, %21 : vector<8x1xf32>
    %23 = vector.broadcast %20 : vector<8x1xf32> to vector<8x2064xf32>
    %24 = arith.mulf %1, %23 : vector<8x2064xf32>
    %25 = vector.broadcast %22 : vector<8x1xf32> to vector<8x2064xf32>
    %26 = arith.addf %24, %25 : vector<8x2064xf32>
    %cst_11 = arith.constant 0.000000e+00 : f32
    %27 = vector.broadcast %cst_11 : f32 to vector<8x2064xf32>
    %28 = arith.maximumf %26, %27 : vector<8x2064xf32>
    %29 = vector.broadcast %0 : vector<1x2064xf32> to vector<8x2064xf32>
    %30 = arith.mulf %28, %29 : vector<8x2064xf32>
    %c0_12 = arith.constant 0 : index
    %c0_13 = arith.constant 0 : index
    %31 = vector.load %arg4[%c0_12, %c0_13] : memref<3x72xbf16, #tpu.memory_space<vmem>>, vector<3x72xbf16>
    %32 = arith.truncf %30 : vector<8x2064xf32> to vector<8x2064xbf16>
    %cst_14 = arith.constant 0.000000e+00 : bf16
    %33 = vector.broadcast %cst_14 : bf16 to vector<8x4xbf16>
    %cst_15 = arith.constant 0.000000e+00 : bf16
    %34 = vector.broadcast %cst_15 : bf16 to vector<8x4xbf16>
    %35 = tpu.concatenate %33, %32, %34 in 1 : vector<8x4xbf16>, vector<8x2064xbf16>, vector<8x4xbf16> -> vector<8x2072xbf16>
    %36 = vector.extract_strided_slice %35 {offsets = [0, 0], sizes = [8, 2064], strides = [1, 1]} : vector<8x2072xbf16> to vector<8x2064xbf16>
    %37 = vector.extract_strided_slice %35 {offsets = [0, 1], sizes = [8, 2064], strides = [1, 1]} : vector<8x2072xbf16> to vector<8x2064xbf16>
    %38 = vector.extract_strided_slice %35 {offsets = [0, 2], sizes = [8, 2064], strides = [1, 1]} : vector<8x2072xbf16> to vector<8x2064xbf16>
    %39 = vector.extract_strided_slice %35 {offsets = [0, 3], sizes = [8, 2064], strides = [1, 1]} : vector<8x2072xbf16> to vector<8x2064xbf16>
    %40 = vector.extract_strided_slice %35 {offsets = [0, 4], sizes = [8, 2064], strides = [1, 1]} : vector<8x2072xbf16> to vector<8x2064xbf16>
    %41 = vector.extract_strided_slice %35 {offsets = [0, 5], sizes = [8, 2064], strides = [1, 1]} : vector<8x2072xbf16> to vector<8x2064xbf16>
    %42 = vector.extract_strided_slice %35 {offsets = [0, 6], sizes = [8, 2064], strides = [1, 1]} : vector<8x2072xbf16> to vector<8x2064xbf16>
    %43 = vector.extract_strided_slice %35 {offsets = [0, 7], sizes = [8, 2064], strides = [1, 1]} : vector<8x2072xbf16> to vector<8x2064xbf16>
    %44 = vector.extract_strided_slice %35 {offsets = [0, 8], sizes = [8, 2064], strides = [1, 1]} : vector<8x2072xbf16> to vector<8x2064xbf16>
    %45 = tpu.concatenate %36, %37, %38, %39, %40, %41, %42, %43, %44 in 0 : vector<8x2064xbf16>, vector<8x2064xbf16>, vector<8x2064xbf16>, vector<8x2064xbf16>, vector<8x2064xbf16>, vector<8x2064xbf16>, vector<8x2064xbf16>, vector<8x2064xbf16>, vector<8x2064xbf16> -> vector<72x2064xbf16>
    %cst_16 = arith.constant dense<0.000000e+00> : vector<3x2064xf32>
    %46 = tpu.matmul %31, %45, %cst_16 {dimension_numbers = #tpu.dot_dimension_numbers<[1], [0], [0], [1], [0, 0, 1, 1], [], []>} : vector<3x72xbf16>, vector<72x2064xbf16>, vector<3x2064xf32> -> vector<3x2064xf32>
    %c0_17 = arith.constant 0 : index
    %c0_18 = arith.constant 0 : index
    %47 = vector.load %arg5[%c0_17, %c0_18] : memref<3x1xf32, #tpu.memory_space<vmem>>, vector<3x1xf32>
    %c0_19 = arith.constant 0 : index
    %c0_20 = arith.constant 0 : index
    %48 = vector.load %arg6[%c0_19, %c0_20] : memref<3x1xf32, #tpu.memory_space<vmem>>, vector<3x1xf32>
    %49 = vector.broadcast %0 : vector<1x2064xf32> to vector<3x2064xf32>
    %50 = arith.mulf %46, %49 : vector<3x2064xf32>
    %cst_21 = arith.constant dense<0.000000e+00> : vector<3xf32>
    %51 = vector.multi_reduction <add>, %50, %cst_21 [1] : vector<3x2064xf32> to vector<3xf32>
    %52 = vector.shape_cast %51 : vector<3xf32> to vector<3x1xf32>
    %cst_22 = arith.constant 4.8828125E-4 : f32
    %53 = vector.broadcast %cst_22 : f32 to vector<3x1xf32>
    %54 = arith.mulf %52, %53 : vector<3x1xf32>
    %55 = arith.mulf %46, %50 : vector<3x2064xf32>
    %cst_23 = arith.constant dense<0.000000e+00> : vector<3xf32>
    %56 = vector.multi_reduction <add>, %55, %cst_23 [1] : vector<3x2064xf32> to vector<3xf32>
    %57 = vector.shape_cast %56 : vector<3xf32> to vector<3x1xf32>
    %cst_24 = arith.constant 4.8828125E-4 : f32
    %58 = vector.broadcast %cst_24 : f32 to vector<3x1xf32>
    %59 = arith.mulf %57, %58 : vector<3x1xf32>
    %60 = arith.mulf %54, %54 : vector<3x1xf32>
    %61 = arith.subf %59, %60 : vector<3x1xf32>
    %cst_25 = arith.constant 9.99999974E-6 : f32
    %62 = vector.broadcast %cst_25 : f32 to vector<3x1xf32>
    %63 = arith.addf %61, %62 : vector<3x1xf32>
    %64 = math.rsqrt %63 : vector<3x1xf32>
    %65 = arith.mulf %47, %64 : vector<3x1xf32>
    %66 = arith.mulf %54, %65 : vector<3x1xf32>
    %67 = arith.subf %48, %66 : vector<3x1xf32>
    %68 = vector.broadcast %65 : vector<3x1xf32> to vector<3x2064xf32>
    %69 = arith.mulf %46, %68 : vector<3x2064xf32>
    %70 = vector.broadcast %67 : vector<3x1xf32> to vector<3x2064xf32>
    %71 = arith.addf %69, %70 : vector<3x2064xf32>
    %c0_26 = arith.constant 0 : index
    %c0_27 = arith.constant 0 : index
    %72 = vector.load %arg7[%c0_26, %c0_27] : memref<3x2064xf32, #tpu.memory_space<vmem>>, vector<3x2064xf32>
    tpu.vector_store %arg7[%c0_26, %c0_27], %71 {strides = array<i32>} : memref<3x2064xf32, #tpu.memory_space<vmem>>, vector<3x2064xf32>,
    return
  }
}

</mosaic_0001>

<llo_original>
// kernel: seismogram_decoder_forward.4
$region0: #{seismogram_decoder_forward.4}
  #allocation0 [shape = 'u32[]', space=smem, size = 0x4, offset = 0x4, fixed_abs, tag = 'smem constant byte address 0x4 - core index']
  #allocation1 [shape = 'u32[72,128]{1,0:T(1,128)}', space=vmem, size = 0x9000, scoped, tag = 'internal scratch']
  %s0 = inlined_call_operand.vmem [shape: f32[64,258], index: 0, kind: input, shape index: {}]
  %s1 = inlined_call_operand.vmem [shape: f32[64,258], index: 1, kind: input, shape index: {}]
  %s2 = inlined_call_operand.vmem [shape: f32[1,258], index: 2, kind: input, shape index: {}]
  %s3 = inlined_call_operand.vmem [shape: f32[64,1], index: 3, kind: input, shape index: {}]
  %s4 = inlined_call_operand.vmem [shape: f32[64,1], index: 4, kind: input, shape index: {}]
  %s5 = inlined_call_operand.vmem [shape: bf16[32,192], index: 5, kind: input, shape index: {}]
  %s6 = inlined_call_operand.vmem [shape: f32[32,1], index: 6, kind: input, shape index: {}]
  %s7 = inlined_call_operand.vmem [shape: f32[32,1], index: 7, kind: input, shape index: {}]
  %s8 = inlined_call_operand.vmem [shape: bf16[64,96], index: 8, kind: input, shape index: {}]
  %s9 = inlined_call_operand.vmem [shape: f32[64,258], index: 9, kind: output, shape index: {}]
  %s10 = sld [smem:[#allocation0]]
  $region46: #{seismogram_decoder_forward.4} parent=0
    _
  %s12 = ssub.s32 1, %s10
  %s13 = scalar_select 0, %s12, %s10
  // Predicated region
  $region2: #{seismogram_decoder_forward.4} parent=0 // pred_check
    _
  $region3: #{seismogram_decoder_forward.4} parent=0 // pred_check_branch
    %15 = sbr.rel (0) target = $region5
  $region4: #{seismogram_decoder_forward.4} parent=0 // pred_region
    _
  $region5: #{seismogram_decoder_forward.4} parent=0 // pred_fallthru
    _
  // Predicated region
  $region6: #{seismogram_decoder_forward.4} parent=0 // pred_check
    _
  $region7: #{seismogram_decoder_forward.4} parent=0 // pred_check_branch
    %17 = sbr.rel (0) target = $region9
  $region8: #{seismogram_decoder_forward.4} parent=0 // pred_region
    _
  $region9: #{seismogram_decoder_forward.4} parent=0 // pred_fallthru
    _
  // Predicated region
  $region10: #{seismogram_decoder_forward.4} parent=0 // pred_check
    _
  $region11: #{seismogram_decoder_forward.4} parent=0 // pred_check_branch
    %19 = sbr.rel (0) target = $region13
  $region12: #{seismogram_decoder_forward.4} parent=0 // pred_region
    _
  $region13: #{seismogram_decoder_forward.4} parent=0 // pred_fallthru
    _
  // Predicated region
  $region14: #{seismogram_decoder_forward.4} parent=0 // pred_check
    _
  $region15: #{seismogram_decoder_forward.4} parent=0 // pred_check_branch
    %21 = sbr.rel (0) target = $region17
  $region16: #{seismogram_decoder_forward.4} parent=0 // pred_region
    _
  $region17: #{seismogram_decoder_forward.4} parent=0 // pred_fallthru
    _
  // Predicated region
  $region18: #{seismogram_decoder_forward.4} parent=0 // pred_check
    _
  $region19: #{seismogram_decoder_forward.4} parent=0 // pred_check_branch
    %23 = sbr.rel (0) target = $region21
  $region20: #{seismogram_decoder_forward.4} parent=0 // pred_region
    _
  $region21: #{seismogram_decoder_forward.4} parent=0 // pred_fallthru
    _
  // Predicated region
  $region22: #{seismogram_decoder_forward.4} parent=0 // pred_check
    _
  $region23: #{seismogram_decoder_forward.4} parent=0 // pred_check_branch
    %25 = sbr.rel (0) target = $region25
  $region24: #{seismogram_decoder_forward.4} parent=0 // pred_region
    _
  $region25: #{seismogram_decoder_forward.4} parent=0 // pred_fallthru
    _
  // Predicated region
  $region26: #{seismogram_decoder_forward.4} parent=0 // pred_check
    _
  $region27: #{seismogram_decoder_forward.4} parent=0 // pred_check_branch
    %27 = sbr.rel (0) target = $region29
  $region28: #{seismogram_decoder_forward.4} parent=0 // pred_region
    _
  $region29: #{seismogram_decoder_forward.4} parent=0 // pred_fallthru
    _
  // Predicated region
  $region30: #{seismogram_decoder_forward.4} parent=0 // pred_check
    _
  $region31: #{seismogram_decoder_forward.4} parent=0 // pred_check_branch
    %29 = sbr.rel (0) target = $region33
  $region32: #{seismogram_decoder_forward.4} parent=0 // pred_region
    _
  $region33: #{seismogram_decoder_forward.4} parent=0 // pred_fallthru
    _
  // Predicated region
  $region34: #{seismogram_decoder_forward.4} parent=0 // pred_check
    _
  $region35: #{seismogram_decoder_forward.4} parent=0 // pred_check_branch
    %31 = sbr.rel (0) target = $region37
  $region36: #{seismogram_decoder_forward.4} parent=0 // pred_region
    _
  $region37: #{seismogram_decoder_forward.4} parent=0 // pred_fallthru
    _
  %v33 = vld [vmem:[%s2] sm:$0x7]
  %v34 = vld [vmem:[%s0] sm:$0xff]
  %v35 = vld [vmem:[%s0 + $0x8] sm:$0xff]
  %v36 = vld [vmem:[%s0 + $0x10] sm:$0xff]
  %v37 = vld [vmem:[%s0 + $0x18] sm:$0xff]
  %v38 = vld [vmem:[%s0 + $0x20] sm:$0xff]
  %v39 = vld [vmem:[%s0 + $0x28] sm:$0xff]
  %v40 = vld [vmem:[%s0 + $0x30] sm:$0xff]
  %v41 = vld [vmem:[%s0 + $0x38] sm:$0xff]
  %v42 = vld [vmem:[%s0 + $0x40] sm:$0xff]
  %v43 = vld [vmem:[%s0 + $0x48] sm:$0xff]
  %v44 = vld [vmem:[%s0 + $0x50] sm:$0xff]
  %v45 = vld [vmem:[%s0 + $0x58] sm:$0xff]
  %v46 = vld [vmem:[%s0 + $0x60] sm:$0xff]
  %v47 = vld [vmem:[%s0 + $0x68] sm:$0xff]
  %v48 = vld [vmem:[%s0 + $0x70] sm:$0xff]
  %v49 = vld [vmem:[%s0 + $0x78] sm:$0xff]
  %v50 = vld [vmem:[%s0 + $0x80] sm:$0xff]
  %v51 = vld [vmem:[%s0 + $0x88] sm:$0xff]
  %v52 = vld [vmem:[%s0 + $0x90] sm:$0xff]
  %v53 = vld [vmem:[%s0 + $0x98] sm:$0xff]
  %v54 = vld [vmem:[%s0 + $0xa0] sm:$0xff]
  %v55 = vld [vmem:[%s0 + $0xa8] sm:$0xff]
  %v56 = vld [vmem:[%s0 + $0xb0] sm:$0xff]
  %v57 = vld [vmem:[%s0 + $0xb8] sm:$0xff]
  %v58 = vld [vmem:[%s1] sm:$0xff]
  %v59 = vld [vmem:[%s1 + $0x8] sm:$0xff]
  %v60 = vld [vmem:[%s1 + $0x10] sm:$0xff]
  %v61 = vld [vmem:[%s1 + $0x18] sm:$0xff]
  %v62 = vld [vmem:[%s1 + $0x20] sm:$0xff]
  %v63 = vld [vmem:[%s1 + $0x28] sm:$0xff]
  %v64 = vld [vmem:[%s1 + $0x30] sm:$0xff]
  %v65 = vld [vmem:[%s1 + $0x38] sm:$0xff]
  %v66 = vld [vmem:[%s1 + $0x40] sm:$0xff]
  %v67 = vld [vmem:[%s1 + $0x48] sm:$0xff]
  %v68 = vld [vmem:[%s1 + $0x50] sm:$0xff]
  %v69 = vld [vmem:[%s1 + $0x58] sm:$0xff]
  %v70 = vld [vmem:[%s1 + $0x60] sm:$0xff]
  %v71 = vld [vmem:[%s1 + $0x68] sm:$0xff]
  %v72 = vld [vmem:[%s1 + $0x70] sm:$0xff]
  %v73 = vld [vmem:[%s1 + $0x78] sm:$0xff]
  %v74 = vld [vmem:[%s1 + $0x80] sm:$0xff]
  %v75 = vld [vmem:[%s1 + $0x88] sm:$0xff]
  %v76 = vld [vmem:[%s1 + $0x90] sm:$0xff]
  %v77 = vld [vmem:[%s1 + $0x98] sm:$0xff]
  %v78 = vld [vmem:[%s1 + $0xa0] sm:$0xff]
  %v79 = vld [vmem:[%s1 + $0xa8] sm:$0xff]
  %v80 = vld [vmem:[%s1 + $0xb0] sm:$0xff]
  %v81 = vld [vmem:[%s1 + $0xb8] sm:$0xff]
  %v82 = vadd.f32 %v34, %v58
  %v83 = vadd.f32 %v35, %v59
  %v84 = vadd.f32 %v36, %v60
  %v85 = vadd.f32 %v37, %v61
  %v86 = vadd.f32 %v38, %v62
  %v87 = vadd.f32 %v39, %v63
  %v88 = vadd.f32 %v40, %v64
  %v89 = vadd.f32 %v41, %v65
  %v90 = vadd.f32 %v42, %v66
  %v91 = vadd.f32 %v43, %v67
  %v92 = vadd.f32 %v44, %v68
  %v93 = vadd.f32 %v45, %v69
  %v94 = vadd.f32 %v46, %v70
  %v95 = vadd.f32 %v47, %v71
  %v96 = vadd.f32 %v48, %v72
  %v97 = vadd.f32 %v49, %v73
  %v98 = vadd.f32 %v50, %v74
  %v99 = vadd.f32 %v51, %v75
  %v100 = vadd.f32 %v52, %v76
  %v101 = vadd.f32 %v53, %v77
  %v102 = vadd.f32 %v54, %v78
  %v103 = vadd.f32 %v55, %v79
  %v104 = vadd.f32 %v56, %v80
  %v105 = vadd.f32 %v57, %v81
  %v106 = vld [vmem:[%s3] sm:$0xff]
  %v107 = vld [vmem:[%s3 + $0x8] sm:$0xff]
  %v108 = vld [vmem:[%s3 + $0x10] sm:$0xff]
  %v109 = vld [vmem:[%s3 + $0x18] sm:$0xff]
  %v110 = vld [vmem:[%s3 + $0x20] sm:$0xff]
  %v111 = vld [vmem:[%s3 + $0x28] sm:$0xff]
  %v112 = vld [vmem:[%s3 + $0x30] sm:$0xff]
  %v113 = vld [vmem:[%s3 + $0x38] sm:$0xff]
  %v114 = vld [vmem:[%s4] sm:$0xff]
  %v115 = vld [vmem:[%s4 + $0x8] sm:$0xff]
  %v116 = vld [vmem:[%s4 + $0x10] sm:$0xff]
  %v117 = vld [vmem:[%s4 + $0x18] sm:$0xff]
  %v118 = vld [vmem:[%s4 + $0x20] sm:$0xff]
  %v119 = vld [vmem:[%s4 + $0x28] sm:$0xff]
  %v120 = vld [vmem:[%s4 + $0x30] sm:$0xff]
  %v121 = vld [vmem:[%s4 + $0x38] sm:$0xff]
  %v123 = vperm.slane %v33, 0
  %v124 = vperm.slane %v33, 1
  %v125 = vperm.slane %v33, 2
  %v129 = vmul.f32 %v82, %v123
  %v130 = vmul.f32 %v83, %v124
  %v131 = vmul.f32 %v84, %v125
  %v132 = vmul.f32 %v85, %v123
  %v133 = vmul.f32 %v86, %v124
  %v134 = vmul.f32 %v87, %v125
  %v135 = vmul.f32 %v88, %v123
  %v136 = vmul.f32 %v89, %v124
  %v137 = vmul.f32 %v90, %v125
  %v138 = vmul.f32 %v91, %v123
  %v139 = vmul.f32 %v92, %v124
  %v140 = vmul.f32 %v93, %v125
  %v141 = vmul.f32 %v94, %v123
  %v142 = vmul.f32 %v95, %v124
  %v143 = vmul.f32 %v96, %v125
  %v144 = vmul.f32 %v97, %v123
  %v145 = vmul.f32 %v98, %v124
  %v146 = vmul.f32 %v99, %v125
  %v147 = vmul.f32 %v100, %v123
  %v148 = vmul.f32 %v101, %v124
  %v149 = vmul.f32 %v102, %v125
  %v150 = vmul.f32 %v103, %v123
  %v151 = vmul.f32 %v104, %v124
  %v152 = vmul.f32 %v105, %v125
  %v153 = vadd.f32 %v129, %v130
  %vm154 = vcmask 15360
  %v155 = vsel %vm154, %v131, 0.0
  %v156 = vadd.f32 %v153, %v155
  %157 = vadd.xlane.f32.xlu0 %v156
  %v158 = vpop.xlane.xlu0 %157
  %v159 = vadd.f32 %v132, %v133
  %v160 = vsel %vm154, %v134, 0.0
  %v161 = vadd.f32 %v159, %v160
  %162 = vadd.xlane.f32.xlu0 %v161
  %v163 = vpop.xlane.xlu0 %162
  %v164 = vadd.f32 %v135, %v136
  %v165 = vsel %vm154, %v137, 0.0
  %v166 = vadd.f32 %v164, %v165
  %167 = vadd.xlane.f32.xlu0 %v166
  %v168 = vpop.xlane.xlu0 %167
  %v169 = vadd.f32 %v138, %v139
  %v170 = vsel %vm154, %v140, 0.0
  %v171 = vadd.f32 %v169, %v170
  %172 = vadd.xlane.f32.xlu0 %v171
  %v173 = vpop.xlane.xlu0 %172
  %v174 = vadd.f32 %v141, %v142
  %v175 = vsel %vm154, %v143, 0.0
  %v176 = vadd.f32 %v174, %v175
  %177 = vadd.xlane.f32.xlu0 %v176
  %v178 = vpop.xlane.xlu0 %177
  %v179 = vadd.f32 %v144, %v145
  %v180 = vsel %vm154, %v146, 0.0
  %v181 = vadd.f32 %v179, %v180
  %182 = vadd.xlane.f32.xlu0 %v181
  %v183 = vpop.xlane.xlu0 %182
  %v184 = vadd.f32 %v147, %v148
  %v185 = vsel %vm154, %v149, 0.0
  %v186 = vadd.f32 %v184, %v185
  %187 = vadd.xlane.f32.xlu0 %v186
  %v188 = vpop.xlane.xlu0 %187
  %v189 = vadd.f32 %v150, %v151
  %v190 = vsel %vm154, %v152, 0.0
  %v191 = vadd.f32 %v189, %v190
  %192 = vadd.xlane.f32.xlu0 %v191
  %v193 = vpop.xlane.xlu0 %192
  %v194 = vmul.f32 %v158, 0.00390625
  %v195 = vmul.f32 %v163, 0.00390625
  %v196 = vmul.f32 %v168, 0.00390625
  %v197 = vmul.f32 %v173, 0.00390625
  %v198 = vmul.f32 %v178, 0.00390625
  %v199 = vmul.f32 %v183, 0.00390625
  %v200 = vmul.f32 %v188, 0.00390625
  %v201 = vmul.f32 %v193, 0.00390625
  %v202 = vmul.f32 %v82, %v129
  %v203 = vmul.f32 %v83, %v130
  %v204 = vmul.f32 %v84, %v131
  %v205 = vmul.f32 %v85, %v132
  %v206 = vmul.f32 %v86, %v133
  %v207 = vmul.f32 %v87, %v134
  %v208 = vmul.f32 %v88, %v135
  %v209 = vmul.f32 %v89, %v136
  %v210 = vmul.f32 %v90, %v137
  %v211 = vmul.f32 %v91, %v138
  %v212 = vmul.f32 %v92, %v139
  %v213 = vmul.f32 %v93, %v140
  %v214 = vmul.f32 %v94, %v141
  %v215 = vmul.f32 %v95, %v142
  %v216 = vmul.f32 %v96, %v143
  %v217 = vmul.f32 %v97, %v144
  %v218 = vmul.f32 %v98, %v145
  %v219 = vmul.f32 %v99, %v146
  %v220 = vmul.f32 %v100, %v147
  %v221 = vmul.f32 %v101, %v148
  %v222 = vmul.f32 %v102, %v149
  %v223 = vmul.f32 %v103, %v150
  %v224 = vmul.f32 %v104, %v151
  %v225 = vmul.f32 %v105, %v152
  %v226 = vadd.f32 %v202, %v203
  %v227 = vsel %vm154, %v204, 0.0
  %v228 = vadd.f32 %v226, %v227
  %229 = vadd.xlane.f32.xlu0 %v228
  %v230 = vpop.xlane.xlu0 %229
  %v231 = vadd.f32 %v205, %v206
  %v232 = vsel %vm154, %v207, 0.0
  %v233 = vadd.f32 %v231, %v232
  %234 = vadd.xlane.f32.xlu0 %v233
  %v235 = vpop.xlane.xlu0 %234
  %v236 = vadd.f32 %v208, %v209
  %v237 = vsel %vm154, %v210, 0.0
  %v238 = vadd.f32 %v236, %v237
  %239 = vadd.xlane.f32.xlu0 %v238
  %v240 = vpop.xlane.xlu0 %239
  %v241 = vadd.f32 %v211, %v212
  %v242 = vsel %vm154, %v213, 0.0
  %v243 = vadd.f32 %v241, %v242
  %244 = vadd.xlane.f32.xlu0 %v243
  %v245 = vpop.xlane.xlu0 %244
  %v246 = vadd.f32 %v214, %v215
  %v247 = vsel %vm154, %v216, 0.0
  %v248 = vadd.f32 %v246, %v247
  %249 = vadd.xlane.f32.xlu0 %v248
  %v250 = vpop.xlane.xlu0 %249
  %v251 = vadd.f32 %v217, %v218
  %v252 = vsel %vm154, %v219, 0.0
  %v253 = vadd.f32 %v251, %v252
  %254 = vadd.xlane.f32.xlu0 %v253
  %v255 = vpop.xlane.xlu0 %254
  %v256 = vadd.f32 %v220, %v221
  %v257 = vsel %vm154, %v222, 0.0
  %v258 = vadd.f32 %v256, %v257
  %259 = vadd.xlane.f32.xlu0 %v258
  %v260 = vpop.xlane.xlu0 %259
  %v261 = vadd.f32 %v223, %v224
  %v262 = vsel %vm154, %v225, 0.0
  %v263 = vadd.f32 %v261, %v262
  %264 = vadd.xlane.f32.xlu0 %v263
  %v265 = vpop.xlane.xlu0 %264
  %v266 = vmul.f32 %v230, 0.00390625
  %v267 = vmul.f32 %v235, 0.00390625
  %v268 = vmul.f32 %v240, 0.00390625
  %v269 = vmul.f32 %v245, 0.00390625
  %v270 = vmul.f32 %v250, 0.00390625
  %v271 = vmul.f32 %v255, 0.00390625
  %v272 = vmul.f32 %v260, 0.00390625
  %v273 = vmul.f32 %v265, 0.00390625
  %v274 = vmul.f32 %v194, %v194
  %v275 = vmul.f32 %v195, %v195
  %v276 = vmul.f32 %v196, %v196
  %v277 = vmul.f32 %v197, %v197
  %v278 = vmul.f32 %v198, %v198
  %v279 = vmul.f32 %v199, %v199
  %v280 = vmul.f32 %v200, %v200
  %v281 = vmul.f32 %v201, %v201
  %v282 = vsub.f32 %v266, %v274
  %v283 = vsub.f32 %v267, %v275
  %v284 = vsub.f32 %v268, %v276
  %v285 = vsub.f32 %v269, %v277
  %v286 = vsub.f32 %v270, %v278
  %v287 = vsub.f32 %v271, %v279
  %v288 = vsub.f32 %v272, %v280
  %v289 = vsub.f32 %v273, %v281
  %v290 = vadd.f32 %v282, 1e-05
  %v291 = vadd.f32 %v283, 1e-05
  %v292 = vadd.f32 %v284, 1e-05
  %v293 = vadd.f32 %v285, 1e-05
  %v294 = vadd.f32 %v286, 1e-05
  %v295 = vadd.f32 %v287, 1e-05
  %v296 = vadd.f32 %v288, 1e-05
  %v297 = vadd.f32 %v289, 1e-05
  %v298 = vrsqrt.pop %v290
  %v299 = vmul.f32 %v298, %v290
  %v300 = vmul.f32 %v299, %v298
  %v301 = vmul.f32 0.5, %v300
  %v302 = vsub.f32 1.5, %v301
  %v303 = vmul.f32 %v298, %v302
  %vm304 = vweird.f32 %v290
  %vm305 = vweird.f32 %v298
  %vm306 = vmor %vm304, %vm305
  %v307 = vsel %vm306, %v298, %v303
  %v308 = vrsqrt.pop %v291
  %v309 = vmul.f32 %v308, %v291
  %v310 = vmul.f32 %v309, %v308
  %v311 = vmul.f32 0.5, %v310
  %v312 = vsub.f32 1.5, %v311
  %v313 = vmul.f32 %v308, %v312
  %vm314 = vweird.f32 %v291
  %vm315 = vweird.f32 %v308
  %vm316 = vmor %vm314, %vm315
  %v317 = vsel %vm316, %v308, %v313
  %v318 = vrsqrt.pop %v292
  %v319 = vmul.f32 %v318, %v292
  %v320 = vmul.f32 %v319, %v318
  %v321 = vmul.f32 0.5, %v320
  %v322 = vsub.f32 1.5, %v321
  %v323 = vmul.f32 %v318, %v322
  %vm324 = vweird.f32 %v292
  %vm325 = vweird.f32 %v318
  %vm326 = vmor %vm324, %vm325
  %v327 = vsel %vm326, %v318, %v323
  %v328 = vrsqrt.pop %v293
  %v329 = vmul.f32 %v328, %v293
  %v330 = vmul.f32 %v329, %v328
  %v331 = vmul.f32 0.5, %v330
  %v332 = vsub.f32 1.5, %v331
  %v333 = vmul.f32 %v328, %v332
  %vm334 = vweird.f32 %v293
  %vm335 = vweird.f32 %v328
  %vm336 = vmor %vm334, %vm335
  %v337 = vsel %vm336, %v328, %v333
  %v338 = vrsqrt.pop %v294
  %v339 = vmul.f32 %v338, %v294
  %v340 = vmul.f32 %v339, %v338
  %v341 = vmul.f32 0.5, %v340
  %v342 = vsub.f32 1.5, %v341
  %v343 = vmul.f32 %v338, %v342
  %vm344 = vweird.f32 %v294
  %vm345 = vweird.f32 %v338
  %vm346 = vmor %vm344, %vm345
  %v347 = vsel %vm346, %v338, %v343
  %v348 = vrsqrt.pop %v295
  %v349 = vmul.f32 %v348, %v295
  %v350 = vmul.f32 %v349, %v348
  %v351 = vmul.f32 0.5, %v350
  %v352 = vsub.f32 1.5, %v351
  %v353 = vmul.f32 %v348, %v352
  %vm354 = vweird.f32 %v295
  %vm355 = vweird.f32 %v348
  %vm356 = vmor %vm354, %vm355
  %v357 = vsel %vm356, %v348, %v353
  %v358 = vrsqrt.pop %v296
  %v359 = vmul.f32 %v358, %v296
  %v360 = vmul.f32 %v359, %v358
  %v361 = vmul.f32 0.5, %v360
  %v362 = vsub.f32 1.5, %v361
  %v363 = vmul.f32 %v358, %v362
  %vm364 = vweird.f32 %v296
  %vm365 = vweird.f32 %v358
  %vm366 = vmor %vm364, %vm365
  %v367 = vsel %vm366, %v358, %v363
  %v368 = vrsqrt.pop %v297
  %v369 = vmul.f32 %v368, %v297
  %v370 = vmul.f32 %v369, %v368
  %v371 = vmul.f32 0.5, %v370
  %v372 = vsub.f32 1.5, %v371
  %v373 = vmul.f32 %v368, %v372
  %vm374 = vweird.f32 %v297
  %vm375 = vweird.f32 %v368
  %vm376 = vmor %vm374, %vm375
  %v377 = vsel %vm376, %v368, %v373
  %v378 = vmul.f32 %v106, %v307
  %v379 = vmul.f32 %v107, %v317
  %v380 = vmul.f32 %v108, %v327
  %v381 = vmul.f32 %v109, %v337
  %v382 = vmul.f32 %v110, %v347
  %v383 = vmul.f32 %v111, %v357
  %v384 = vmul.f32 %v112, %v367
  %v385 = vmul.f32 %v113, %v377
  %v386 = vmul.f32 %v194, %v378
  %v387 = vmul.f32 %v195, %v379
  %v388 = vmul.f32 %v196, %v380
  %v389 = vmul.f32 %v197, %v381
  %v390 = vmul.f32 %v198, %v382
  %v391 = vmul.f32 %v199, %v383
  %v392 = vmul.f32 %v200, %v384
  %v393 = vmul.f32 %v201, %v385
  %v394 = vsub.f32 %v114, %v386
  %v395 = vsub.f32 %v115, %v387
  %v396 = vsub.f32 %v116, %v388
  %v397 = vsub.f32 %v117, %v389
  %v398 = vsub.f32 %v118, %v390
  %v399 = vsub.f32 %v119, %v391
  %v400 = vsub.f32 %v120, %v392
  %v401 = vsub.f32 %v121, %v393
  %403 = vset.pattern.permute.xlu0 0
  %404 = vperm.xlu0 %403, %v378
  %v405 = vpop.permute.xlu0 %404
  %408 = vset.pattern.permute.xlu0 0
  %409 = vperm.xlu0 %408, %v379
  %v410 = vpop.permute.xlu0 %409
  %413 = vset.pattern.permute.xlu0 0
  %414 = vperm.xlu0 %413, %v380
  %v415 = vpop.permute.xlu0 %414
  %418 = vset.pattern.permute.xlu0 0
  %419 = vperm.xlu0 %418, %v381
  %v420 = vpop.permute.xlu0 %419
  %423 = vset.pattern.permute.xlu0 0
  %424 = vperm.xlu0 %423, %v382
  %v425 = vpop.permute.xlu0 %424
  %428 = vset.pattern.permute.xlu0 0
  %429 = vperm.xlu0 %428, %v383
  %v430 = vpop.permute.xlu0 %429
  %433 = vset.pattern.permute.xlu0 0
  %434 = vperm.xlu0 %433, %v384
  %v435 = vpop.permute.xlu0 %434
  %438 = vset.pattern.permute.xlu0 0
  %439 = vperm.xlu0 %438, %v385
  %v440 = vpop.permute.xlu0 %439
  %v442 = vmul.f32 %v82, %v405
  %v443 = vmul.f32 %v83, %v405
  %v444 = vmul.f32 %v84, %v405
  %v445 = vmul.f32 %v85, %v410
  %v446 = vmul.f32 %v86, %v410
  %v447 = vmul.f32 %v87, %v410
  %v448 = vmul.f32 %v88, %v415
  %v449 = vmul.f32 %v89, %v415
  %v450 = vmul.f32 %v90, %v415
  %v451 = vmul.f32 %v91, %v420
  %v452 = vmul.f32 %v92, %v420
  %v453 = vmul.f32 %v93, %v420
  %v454 = vmul.f32 %v94, %v425
  %v455 = vmul.f32 %v95, %v425
  %v456 = vmul.f32 %v96, %v425
  %v457 = vmul.f32 %v97, %v430
  %v458 = vmul.f32 %v98, %v430
  %v459 = vmul.f32 %v99, %v430
  %v460 = vmul.f32 %v100, %v435
  %v461 = vmul.f32 %v101, %v435
  %v462 = vmul.f32 %v102, %v435
  %v463 = vmul.f32 %v103, %v440
  %v464 = vmul.f32 %v104, %v440
  %v465 = vmul.f32 %v105, %v440
  %467 = vset.pattern.permute.xlu0 0
  %468 = vperm.xlu0 %467, %v394
  %v469 = vpop.permute.xlu0 %468
  %472 = vset.pattern.permute.xlu0 0
  %473 = vperm.xlu0 %472, %v395
  %v474 = vpop.permute.xlu0 %473
  %477 = vset.pattern.permute.xlu0 0
  %478 = vperm.xlu0 %477, %v396
  %v479 = vpop.permute.xlu0 %478
  %482 = vset.pattern.permute.xlu0 0
  %483 = vperm.xlu0 %482, %v397
  %v484 = vpop.permute.xlu0 %483
  %487 = vset.pattern.permute.xlu0 0
  %488 = vperm.xlu0 %487, %v398
  %v489 = vpop.permute.xlu0 %488
  %492 = vset.pattern.permute.xlu0 0
  %493 = vperm.xlu0 %492, %v399
  %v494 = vpop.permute.xlu0 %493
  %497 = vset.pattern.permute.xlu0 0
  %498 = vperm.xlu0 %497, %v400
  %v499 = vpop.permute.xlu0 %498
  %502 = vset.pattern.permute.xlu0 0
  %503 = vperm.xlu0 %502, %v401
  %v504 = vpop.permute.xlu0 %503
  %v506 = vadd.f32 %v442, %v469
  %v507 = vadd.f32 %v443, %v469
  %v508 = vadd.f32 %v444, %v469
  %v509 = vadd.f32 %v445, %v474
  %v510 = vadd.f32 %v446, %v474
  %v511 = vadd.f32 %v447, %v474
  %v512 = vadd.f32 %v448, %v479
  %v513 = vadd.f32 %v449, %v479
  %v514 = vadd.f32 %v450, %v479
  %v515 = vadd.f32 %v451, %v484
  %v516 = vadd.f32 %v452, %v484
  %v517 = vadd.f32 %v453, %v484
  %v518 = vadd.f32 %v454, %v489
  %v519 = vadd.f32 %v455, %v489
  %v520 = vadd.f32 %v456, %v489
  %v521 = vadd.f32 %v457, %v494
  %v522 = vadd.f32 %v458, %v494
  %v523 = vadd.f32 %v459, %v494
  %v524 = vadd.f32 %v460, %v499
  %v525 = vadd.f32 %v461, %v499
  %v526 = vadd.f32 %v462, %v499
  %v527 = vadd.f32 %v463, %v504
  %v528 = vadd.f32 %v464, %v504
  %v529 = vadd.f32 %v465, %v504
  %v530 = vmax.f32 %v506, 0.0
  %v531 = vmax.f32 %v507, 0.0
  %v532 = vmax.f32 %v508, 0.0
  %v533 = vmax.f32 %v509, 0.0
  %v534 = vmax.f32 %v510, 0.0
  %v535 = vmax.f32 %v511, 0.0
  %v536 = vmax.f32 %v512, 0.0
  %v537 = vmax.f32 %v513, 0.0
  %v538 = vmax.f32 %v514, 0.0
  %v539 = vmax.f32 %v515, 0.0
  %v540 = vmax.f32 %v516, 0.0
  %v541 = vmax.f32 %v517, 0.0
  %v542 = vmax.f32 %v518, 0.0
  %v543 = vmax.f32 %v519, 0.0
  %v544 = vmax.f32 %v520, 0.0
  %v545 = vmax.f32 %v521, 0.0
  %v546 = vmax.f32 %v522, 0.0
  %v547 = vmax.f32 %v523, 0.0
  %v548 = vmax.f32 %v524, 0.0
  %v549 = vmax.f32 %v525, 0.0
  %v550 = vmax.f32 %v526, 0.0
  %v551 = vmax.f32 %v527, 0.0
  %v552 = vmax.f32 %v528, 0.0
  %v553 = vmax.f32 %v529, 0.0
  %v554 = vmul.f32 %v530, %v123
  %v555 = vmul.f32 %v531, %v124
  %v556 = vmul.f32 %v532, %v125
  %v557 = vmul.f32 %v533, %v123
  %v558 = vmul.f32 %v534, %v124
  %v559 = vmul.f32 %v535, %v125
  %v560 = vmul.f32 %v536, %v123
  %v561 = vmul.f32 %v537, %v124
  %v562 = vmul.f32 %v538, %v125
  %v563 = vmul.f32 %v539, %v123
  %v564 = vmul.f32 %v540, %v124
  %v565 = vmul.f32 %v541, %v125
  %v566 = vmul.f32 %v542, %v123
  %v567 = vmul.f32 %v543, %v124
  %v568 = vmul.f32 %v544, %v125
  %v569 = vmul.f32 %v545, %v123
  %v570 = vmul.f32 %v546, %v124
  %v571 = vmul.f32 %v547, %v125
  %v572 = vmul.f32 %v548, %v123
  %v573 = vmul.f32 %v549, %v124
  %v574 = vmul.f32 %v550, %v125
  %v575 = vmul.f32 %v551, %v123
  %v576 = vmul.f32 %v552, %v124
  %v577 = vmul.f32 %v553, %v125
  %v578 = vld [vmem:[%s5] sm:$0xff]
  %v579 = vld [vmem:[%s5 + $0x8] sm:$0xff]
  %v580 = vld [vmem:[%s5 + $0x10] sm:$0xff]
  %v581 = vld [vmem:[%s5 + $0x18] sm:$0xff]
  %v582 = vpack.c.bf16 %v555, %v554
  %v583 = vpack.c.bf16 %v556, %v556
  %v584 = vpack.c.bf16 %v558, %v557
  %v585 = vpack.c.bf16 %v559, %v559
  %v586 = vpack.c.bf16 %v561, %v560
  %v587 = vpack.c.bf16 %v562, %v562
  %v588 = vpack.c.bf16 %v564, %v563
  %v589 = vpack.c.bf16 %v565, %v565
  %v590 = vpack.c.bf16 %v567, %v566
  %v591 = vpack.c.bf16 %v568, %v568
  %v592 = vpack.c.bf16 %v570, %v569
  %v593 = vpack.c.bf16 %v571, %v571
  %v594 = vpack.c.bf16 %v573, %v572
  %v595 = vpack.c.bf16 %v574, %v574
  %v596 = vpack.c.bf16 %v576, %v575
  %v597 = vpack.c.bf16 %v577, %v577
  %v614 = vunpack.c.l.b16 %v582
  %v615 = vunpack.c.h.b16 %v582
  %v616 = vunpack.c.l.b16 %v583
  %v617 = vunpack.c.l.b16 %v584
  %v618 = vunpack.c.h.b16 %v584
  %v619 = vunpack.c.l.b16 %v585
  %v620 = vunpack.c.l.b16 %v586
  %v621 = vunpack.c.h.b16 %v586
  %v622 = vunpack.c.l.b16 %v587
  %v623 = vunpack.c.l.b16 %v588
  %v624 = vunpack.c.h.b16 %v588
  %v625 = vunpack.c.l.b16 %v589
  %v626 = vunpack.c.l.b16 %v590
  %v627 = vunpack.c.h.b16 %v590
  %v628 = vunpack.c.l.b16 %v591
  %v629 = vunpack.c.l.b16 %v592
  %v630 = vunpack.c.h.b16 %v592
  %v631 = vunpack.c.l.b16 %v593
  %v632 = vunpack.c.l.b16 %v594
  %v633 = vunpack.c.h.b16 %v594
  %v634 = vunpack.c.l.b16 %v595
  %v635 = vunpack.c.l.b16 %v596
  %v636 = vunpack.c.h.b16 %v596
  %v637 = vunpack.c.l.b16 %v597
  %v638 = vpack.c.b16 %v617, %v614
  %v639 = vpack.c.b16 %v618, %v615
  %v640 = vpack.c.b16 %v619, %v616
  %v641 = vpack.c.b16 %v623, %v620
  %v642 = vpack.c.b16 %v624, %v621
  %v643 = vpack.c.b16 %v625, %v622
  %v644 = vpack.c.b16 %v629, %v626
  %v645 = vpack.c.b16 %v630, %v627
  %v646 = vpack.c.b16 %v631, %v628
  %v647 = vpack.c.b16 %v635, %v632
  %v648 = vpack.c.b16 %v636, %v633
  %v649 = vpack.c.b16 %v637, %v634
  %650 = vrot.lane.b32.xlu0 %v638, 1
  %v651 = vpop.permute.xlu0 %650
  %652 = vrot.lane.b32.xlu0 %v639, 1
  %v653 = vpop.permute.xlu0 %652
  %654 = vrot.lane.b32.xlu0 %v640, 1
  %v655 = vpop.permute.xlu0 %654
  %656 = vrot.lane.b32.xlu0 %v641, 1
  %v657 = vpop.permute.xlu0 %656
  %658 = vrot.lane.b32.xlu0 %v642, 1
  %v659 = vpop.permute.xlu0 %658
  %660 = vrot.lane.b32.xlu0 %v643, 1
  %v661 = vpop.permute.xlu0 %660
  %662 = vrot.lane.b32.xlu0 %v644, 1
  %v663 = vpop.permute.xlu0 %662
  %664 = vrot.lane.b32.xlu0 %v645, 1
  %v665 = vpop.permute.xlu0 %664
  %666 = vrot.lane.b32.xlu0 %v646, 1
  %v667 = vpop.permute.xlu0 %666
  %668 = vrot.lane.b32.xlu0 %v647, 1
  %v669 = vpop.permute.xlu0 %668
  %670 = vrot.lane.b32.xlu0 %v648, 1
  %v671 = vpop.permute.xlu0 %670
  %672 = vrot.lane.b32.xlu0 %v649, 1
  %v673 = vpop.permute.xlu0 %672
  %vm674 = vcmask 7168
  %v675 = vsel %vm674, %v651, %v653
  %v676 = vsel %vm674, %v653, %v655
  %v677 = vsel %vm674, %v657, %v659
  %v678 = vsel %vm674, %v659, %v661
  %v679 = vsel %vm674, %v663, %v665
  %v680 = vsel %vm674, %v665, %v667
  %v681 = vsel %vm674, %v669, %v671
  %v682 = vsel %vm674, %v671, %v673
  %vm687 = vcmask 7168
  %v690 = vsel %vm687, 0, %v651
  %v693 = vsel %vm687, 0, %v657
  %v696 = vsel %vm687, 0, %v663
  %v699 = vsel %vm687, 0, %v669
  %vm701 = vcmask 23552
  %v703 = vsel %vm701, %v676, 0
  %v706 = vsel %vm701, %v678, 0
  %v709 = vsel %vm701, %v680, 0
  %v712 = vsel %vm701, %v682, 0
  %722 = vrot.lane.b32.xlu0 %v690, 127
  %v723 = vpop.permute.xlu0 %722
  %724 = vrot.lane.b32.xlu0 %v675, 127
  %v725 = vpop.permute.xlu0 %724
  %726 = vrot.lane.b32.xlu0 %v703, 127
  %v727 = vpop.permute.xlu0 %726
  %728 = vrot.lane.b32.xlu0 %v693, 127
  %v729 = vpop.permute.xlu0 %728
  %730 = vrot.lane.b32.xlu0 %v677, 127
  %v731 = vpop.permute.xlu0 %730
  %732 = vrot.lane.b32.xlu0 %v706, 127
  %v733 = vpop.permute.xlu0 %732
  %734 = vrot.lane.b32.xlu0 %v696, 127
  %v735 = vpop.permute.xlu0 %734
  %736 = vrot.lane.b32.xlu0 %v679, 127
  %v737 = vpop.permute.xlu0 %736
  %738 = vrot.lane.b32.xlu0 %v709, 127
  %v739 = vpop.permute.xlu0 %738
  %740 = vrot.lane.b32.xlu0 %v699, 127
  %v741 = vpop.permute.xlu0 %740
  %742 = vrot.lane.b32.xlu0 %v681, 127
  %v743 = vpop.permute.xlu0 %742
  %744 = vrot.lane.b32.xlu0 %v712, 127
  %v745 = vpop.permute.xlu0 %744
  %vm746 = vcmask 1039360
  %v747 = vsel %vm746, %v723, %v725
  %v748 = vsel %vm746, %v725, %v727
  %v749 = vsel %vm746, %v729, %v731
  %v750 = vsel %vm746, %v731, %v733
  %v751 = vsel %vm746, %v735, %v737
  %v752 = vsel %vm746, %v737, %v739
  %v753 = vsel %vm746, %v741, %v743
  %v754 = vsel %vm746, %v743, %v745
  %767 = vrot.lane.b32.xlu0 %v690, 126
  %v768 = vpop.permute.xlu0 %767
  %769 = vrot.lane.b32.xlu0 %v675, 126
  %v770 = vpop.permute.xlu0 %769
  %771 = vrot.lane.b32.xlu0 %v703, 126
  %v772 = vpop.permute.xlu0 %771
  %773 = vrot.lane.b32.xlu0 %v693, 126
  %v774 = vpop.permute.xlu0 %773
  %775 = vrot.lane.b32.xlu0 %v677, 126
  %v776 = vpop.permute.xlu0 %775
  %777 = vrot.lane.b32.xlu0 %v706, 126
  %v778 = vpop.permute.xlu0 %777
  %779 = vrot.lane.b32.xlu0 %v696, 126
  %v780 = vpop.permute.xlu0 %779
  %781 = vrot.lane.b32.xlu0 %v679, 126
  %v782 = vpop.permute.xlu0 %781
  %783 = vrot.lane.b32.xlu0 %v709, 126
  %v784 = vpop.permute.xlu0 %783
  %785 = vrot.lane.b32.xlu0 %v699, 126
  %v786 = vpop.permute.xlu0 %785
  %787 = vrot.lane.b32.xlu0 %v681, 126
  %v788 = vpop.permute.xlu0 %787
  %789 = vrot.lane.b32.xlu0 %v712, 126
  %v790 = vpop.permute.xlu0 %789
  %vm791 = vcmask 1031168
  %v792 = vsel %vm791, %v768, %v770
  %v793 = vsel %vm791, %v770, %v772
  %v794 = vsel %vm791, %v774, %v776
  %v795 = vsel %vm791, %v776, %v778
  %v796 = vsel %vm791, %v780, %v782
  %v797 = vsel %vm791, %v782, %v784
  %v798 = vsel %vm791, %v786, %v788
  %v799 = vsel %vm791, %v788, %v790
  %v816 = vunpack.c.l.b16 %v578
  %v817 = vunpack.c.h.b16 %v578
  %v818 = vunpack.c.l.b16 %v579
  %v819 = vunpack.c.h.b16 %v579
  %v820 = vunpack.c.l.b16 %v580
  %v821 = vunpack.c.h.b16 %v580
  %v822 = vunpack.c.l.b16 %v581
  %v823 = vunpack.c.h.b16 %v581
  %v824 = vpack.c.b16 %v818, %v816
  %v825 = vpack.c.b16 %v819, %v817
  %v826 = vpack.c.b16 %v822, %v820
  %v827 = vpack.c.b16 %v823, %v821
  %vm830 = vcmask 523264
  %v832 = vsel %vm830, %v825, 0
  %v835 = vsel %vm830, %v827, 0
  %837 = vmatpush.bf16.msra.mxu0 %v753
  %838 = vmatpush.bf16.msra.mxu0 %v751
  %839 = vmatpush.bf16.msra.mxu0 %v749
  %840 = vmatpush.bf16.msra.mxu0 %v747
  %841 = vmatpush.bf16.msra.mxu0 %v699
  %842 = vmatpush.bf16.msra.mxu0 %v696
  %843 = vmatpush.bf16.msra.mxu0 %v693
  %844 = vmatpush.bf16.msra.mxu0 %v690
  %845 = vmatmul.bf16.gmra.mxu0 %v824
  %v846 = vpop.f32.mrf.mxu0
  %v847 = vadd.f32 0.0, %v846
  %v848 = vpop.f32.mrf.mxu0
  %v849 = vadd.f32 0.0, %v848
  %850 = vmatmul.bf16.gmra.mxu0 %v826
  %v851 = vpop.f32.mrf.mxu0
  %v852 = vadd.f32 0.0, %v851
  %v853 = vpop.f32.mrf.mxu0
  %v854 = vadd.f32 0.0, %v853
  %855 = vdwg.mxu0
  %856 = vmatpush.bf16.msra.mxu0 0
  %857 = vmatpush.bf16.msra.mxu0 0
  %858 = vmatpush.bf16.msra.mxu0 0
  %859 = vmatpush.bf16.msra.mxu0 0
  %860 = vmatpush.bf16.msra.mxu0 %v798
  %861 = vmatpush.bf16.msra.mxu0 %v796
  %862 = vmatpush.bf16.msra.mxu0 %v794
  %863 = vmatpush.bf16.msra.mxu0 %v792
  %864 = vmatmul.bf16.gmra.mxu0 %v832
  %v865 = vpop.f32.mrf.mxu0
  %v866 = vadd.f32 %v847, %v865
  %v867 = vpop.f32.mrf.mxu0
  %v868 = vadd.f32 %v849, %v867
  %869 = vmatmul.bf16.gmra.mxu0 %v835
  %v870 = vpop.f32.mrf.mxu0
  %v871 = vadd.f32 %v852, %v870
  %v872 = vpop.f32.mrf.mxu0
  %v873 = vadd.f32 %v854, %v872
  %874 = vdwg.mxu0
  %875 = vmatpush.bf16.msra.mxu0 %v754
  %876 = vmatpush.bf16.msra.mxu0 %v752
  %877 = vmatpush.bf16.msra.mxu0 %v750
  %878 = vmatpush.bf16.msra.mxu0 %v748
  %879 = vmatpush.bf16.msra.mxu0 %v681
  %880 = vmatpush.bf16.msra.mxu0 %v679
  %881 = vmatpush.bf16.msra.mxu0 %v677
  %882 = vmatpush.bf16.msra.mxu0 %v675
  %883 = vmatmul.bf16.gmra.mxu0 %v824
  %v884 = vpop.f32.mrf.mxu0
  %v885 = vadd.f32 0.0, %v884
  %v886 = vpop.f32.mrf.mxu0
  %v887 = vadd.f32 0.0, %v886
  %888 = vmatmul.bf16.gmra.mxu0 %v826
  %v889 = vpop.f32.mrf.mxu0
  %v890 = vadd.f32 0.0, %v889
  %v891 = vpop.f32.mrf.mxu0
  %v892 = vadd.f32 0.0, %v891
  %893 = vdwg.mxu0
  %894 = vmatpush.bf16.msra.mxu0 0
  %895 = vmatpush.bf16.msra.mxu0 0
  %896 = vmatpush.bf16.msra.mxu0 0
  %897 = vmatpush.bf16.msra.mxu0 0
  %898 = vmatpush.bf16.msra.mxu0 %v799
  %899 = vmatpush.bf16.msra.mxu0 %v797
  %900 = vmatpush.bf16.msra.mxu0 %v795
  %901 = vmatpush.bf16.msra.mxu0 %v793
  %902 = vmatmul.bf16.gmra.mxu0 %v832
  %v903 = vpop.f32.mrf.mxu0
  %v904 = vadd.f32 %v885, %v903
  %v905 = vpop.f32.mrf.mxu0
  %v906 = vadd.f32 %v887, %v905
  %907 = vmatmul.bf16.gmra.mxu0 %v835
  %v908 = vpop.f32.mrf.mxu0
  %v909 = vadd.f32 %v890, %v908
  %v910 = vpop.f32.mrf.mxu0
  %v911 = vadd.f32 %v892, %v910
  %912 = vdwg.mxu0
  %913 = vmatpush.bf16.msra.mxu0 %v745
  %914 = vmatpush.bf16.msra.mxu0 %v739
  %915 = vmatpush.bf16.msra.mxu0 %v733
  %916 = vmatpush.bf16.msra.mxu0 %v727
  %917 = vmatpush.bf16.msra.mxu0 %v712
  %918 = vmatpush.bf16.msra.mxu0 %v709
  %919 = vmatpush.bf16.msra.mxu0 %v706
  %920 = vmatpush.bf16.msra.mxu0 %v703
  %921 = vmatmul.bf16.gmra.mxu0 %v824
  %v922 = vpop.f32.mrf.mxu0
  %v923 = vadd.f32 0.0, %v922
  %v924 = vpop.f32.mrf.mxu0
  %v925 = vadd.f32 0.0, %v924
  %926 = vmatmul.bf16.gmra.mxu0 %v826
  %v927 = vpop.f32.mrf.mxu0
  %v928 = vadd.f32 0.0, %v927
  %v929 = vpop.f32.mrf.mxu0
  %v930 = vadd.f32 0.0, %v929
  %931 = vdwg.mxu0
  %932 = vmatpush.bf16.msra.mxu0 0
  %933 = vmatpush.bf16.msra.mxu0 0
  %934 = vmatpush.bf16.msra.mxu0 0
  %935 = vmatpush.bf16.msra.mxu0 0
  %936 = vmatpush.bf16.msra.mxu0 %v790
  %937 = vmatpush.bf16.msra.mxu0 %v784
  %938 = vmatpush.bf16.msra.mxu0 %v778
  %939 = vmatpush.bf16.msra.mxu0 %v772
  %940 = vmatmul.bf16.gmra.mxu0 %v832
  %v941 = vpop.f32.mrf.mxu0
  %v942 = vadd.f32 %v923, %v941
  %v943 = vpop.f32.mrf.mxu0
  %v944 = vadd.f32 %v925, %v943
  %945 = vmatmul.bf16.gmra.mxu0 %v835
  %v946 = vpop.f32.mrf.mxu0
  %v947 = vadd.f32 %v928, %v946
  %v948 = vpop.f32.mrf.mxu0
  %v949 = vadd.f32 %v930, %v948
  %950 = vdwg.mxu0
  %v951 = vld [vmem:[%s6] sm:$0xff]
  %v952 = vld [vmem:[%s6 + $0x8] sm:$0xff]
  %v953 = vld [vmem:[%s6 + $0x10] sm:$0xff]
  %v954 = vld [vmem:[%s6 + $0x18] sm:$0xff]
  %v955 = vld [vmem:[%s7] sm:$0xff]
  %v956 = vld [vmem:[%s7 + $0x8] sm:$0xff]
  %v957 = vld [vmem:[%s7 + $0x10] sm:$0xff]
  %v958 = vld [vmem:[%s7 + $0x18] sm:$0xff]
  %v959 = vmul.f32 %v866, %v123
  %v960 = vmul.f32 %v904, %v124
  %v961 = vmul.f32 %v942, %v125
  %v962 = vmul.f32 %v868, %v123
  %v963 = vmul.f32 %v906, %v124
  %v964 = vmul.f32 %v944, %v125
  %v965 = vmul.f32 %v871, %v123
  %v966 = vmul.f32 %v909, %v124
  %v967 = vmul.f32 %v947, %v125
  %v968 = vmul.f32 %v873, %v123
  %v969 = vmul.f32 %v911, %v124
  %v970 = vmul.f32 %v949, %v125
  %v971 = vadd.f32 %v959, %v960
  %v972 = vsel %vm154, %v961, 0.0
  %v973 = vadd.f32 %v971, %v972
  %974 = vadd.xlane.f32.xlu0 %v973
  %v975 = vpop.xlane.xlu0 %974
  %v976 = vadd.f32 %v962, %v963
  %v977 = vsel %vm154, %v964, 0.0
  %v978 = vadd.f32 %v976, %v977
  %979 = vadd.xlane.f32.xlu0 %v978
  %v980 = vpop.xlane.xlu0 %979
  %v981 = vadd.f32 %v965, %v966
  %v982 = vsel %vm154, %v967, 0.0
  %v983 = vadd.f32 %v981, %v982
  %984 = vadd.xlane.f32.xlu0 %v983
  %v985 = vpop.xlane.xlu0 %984
  %v986 = vadd.f32 %v968, %v969
  %v987 = vsel %vm154, %v970, 0.0
  %v988 = vadd.f32 %v986, %v987
  %989 = vadd.xlane.f32.xlu0 %v988
  %v990 = vpop.xlane.xlu0 %989
  %v991 = vmul.f32 %v975, 0.00390625
  %v992 = vmul.f32 %v980, 0.00390625
  %v993 = vmul.f32 %v985, 0.00390625
  %v994 = vmul.f32 %v990, 0.00390625
  %v995 = vmul.f32 %v866, %v959
  %v996 = vmul.f32 %v904, %v960
  %v997 = vmul.f32 %v942, %v961
  %v998 = vmul.f32 %v868, %v962
  %v999 = vmul.f32 %v906, %v963
  %v1000 = vmul.f32 %v944, %v964
  %v1001 = vmul.f32 %v871, %v965
  %v1002 = vmul.f32 %v909, %v966
  %v1003 = vmul.f32 %v947, %v967
  %v1004 = vmul.f32 %v873, %v968
  %v1005 = vmul.f32 %v911, %v969
  %v1006 = vmul.f32 %v949, %v970
  %v1007 = vadd.f32 %v995, %v996
  %v1008 = vsel %vm154, %v997, 0.0
  %v1009 = vadd.f32 %v1007, %v1008
  %1010 = vadd.xlane.f32.xlu0 %v1009
  %v1011 = vpop.xlane.xlu0 %1010
  %v1012 = vadd.f32 %v998, %v999
  %v1013 = vsel %vm154, %v1000, 0.0
  %v1014 = vadd.f32 %v1012, %v1013
  %1015 = vadd.xlane.f32.xlu0 %v1014
  %v1016 = vpop.xlane.xlu0 %1015
  %v1017 = vadd.f32 %v1001, %v1002
  %v1018 = vsel %vm154, %v1003, 0.0
  %v1019 = vadd.f32 %v1017, %v1018
  %1020 = vadd.xlane.f32.xlu0 %v1019
  %v1021 = vpop.xlane.xlu0 %1020
  %v1022 = vadd.f32 %v1004, %v1005
  %v1023 = vsel %vm154, %v1006, 0.0
  %v1024 = vadd.f32 %v1022, %v1023
  %1025 = vadd.xlane.f32.xlu0 %v1024
  %v1026 = vpop.xlane.xlu0 %1025
  %v1027 = vmul.f32 %v1011, 0.00390625
  %v1028 = vmul.f32 %v1016, 0.00390625
  %v1029 = vmul.f32 %v1021, 0.00390625
  %v1030 = vmul.f32 %v1026, 0.00390625
  %v1031 = vmul.f32 %v991, %v991
  %v1032 = vmul.f32 %v992, %v992
  %v1033 = vmul.f32 %v993, %v993
  %v1034 = vmul.f32 %v994, %v994
  %v1035 = vsub.f32 %v1027, %v1031
  %v1036 = vsub.f32 %v1028, %v1032
  %v1037 = vsub.f32 %v1029, %v1033
  %v1038 = vsub.f32 %v1030, %v1034
  %v1039 = vadd.f32 %v1035, 1e-05
  %v1040 = vadd.f32 %v1036, 1e-05
  %v1041 = vadd.f32 %v1037, 1e-05
  %v1042 = vadd.f32 %v1038, 1e-05
  %v1043 = vrsqrt.pop %v1039
  %v1044 = vmul.f32 %v1043, %v1039
  %v1045 = vmul.f32 %v1044, %v1043
  %v1046 = vmul.f32 0.5, %v1045
  %v1047 = vsub.f32 1.5, %v1046
  %v1048 = vmul.f32 %v1043, %v1047
  %vm1049 = vweird.f32 %v1039
  %vm1050 = vweird.f32 %v1043
  %vm1051 = vmor %vm1049, %vm1050
  %v1052 = vsel %vm1051, %v1043, %v1048
  %v1053 = vrsqrt.pop %v1040
  %v1054 = vmul.f32 %v1053, %v1040
  %v1055 = vmul.f32 %v1054, %v1053
  %v1056 = vmul.f32 0.5, %v1055
  %v1057 = vsub.f32 1.5, %v1056
  %v1058 = vmul.f32 %v1053, %v1057
  %vm1059 = vweird.f32 %v1040
  %vm1060 = vweird.f32 %v1053
  %vm1061 = vmor %vm1059, %vm1060
  %v1062 = vsel %vm1061, %v1053, %v1058
  %v1063 = vrsqrt.pop %v1041
  %v1064 = vmul.f32 %v1063, %v1041
  %v1065 = vmul.f32 %v1064, %v1063
  %v1066 = vmul.f32 0.5, %v1065
  %v1067 = vsub.f32 1.5, %v1066
  %v1068 = vmul.f32 %v1063, %v1067
  %vm1069 = vweird.f32 %v1041
  %vm1070 = vweird.f32 %v1063
  %vm1071 = vmor %vm1069, %vm1070
  %v1072 = vsel %vm1071, %v1063, %v1068
  %v1073 = vrsqrt.pop %v1042
  %v1074 = vmul.f32 %v1073, %v1042
  %v1075 = vmul.f32 %v1074, %v1073
  %v1076 = vmul.f32 0.5, %v1075
  %v1077 = vsub.f32 1.5, %v1076
  %v1078 = vmul.f32 %v1073, %v1077
  %vm1079 = vweird.f32 %v1042
  %vm1080 = vweird.f32 %v1073
  %vm1081 = vmor %vm1079, %vm1080
  %v1082 = vsel %vm1081, %v1073, %v1078
  %v1083 = vmul.f32 %v951, %v1052
  %v1084 = vmul.f32 %v952, %v1062
  %v1085 = vmul.f32 %v953, %v1072
  %v1086 = vmul.f32 %v954, %v1082
  %v1087 = vmul.f32 %v991, %v1083
  %v1088 = vmul.f32 %v992, %v1084
  %v1089 = vmul.f32 %v993, %v1085
  %v1090 = vmul.f32 %v994, %v1086
  %v1091 = vsub.f32 %v955, %v1087
  %v1092 = vsub.f32 %v956, %v1088
  %v1093 = vsub.f32 %v957, %v1089
  %v1094 = vsub.f32 %v958, %v1090
  %1096 = vset.pattern.permute.xlu0 0
  %1097 = vperm.xlu0 %1096, %v1083
  %v1098 = vpop.permute.xlu0 %1097
  %1101 = vset.pattern.permute.xlu0 0
  %1102 = vperm.xlu0 %1101, %v1084
  %v1103 = vpop.permute.xlu0 %1102
  %1106 = vset.pattern.permute.xlu0 0
  %1107 = vperm.xlu0 %1106, %v1085
  %v1108 = vpop.permute.xlu0 %1107
  %1111 = vset.pattern.permute.xlu0 0
  %1112 = vperm.xlu0 %1111, %v1086
  %v1113 = vpop.permute.xlu0 %1112
  %v1115 = vmul.f32 %v866, %v1098
  %v1116 = vmul.f32 %v904, %v1098
  %v1117 = vmul.f32 %v942, %v1098
  %v1118 = vmul.f32 %v868, %v1103
  %v1119 = vmul.f32 %v906, %v1103
  %v1120 = vmul.f32 %v944, %v1103
  %v1121 = vmul.f32 %v871, %v1108
  %v1122 = vmul.f32 %v909, %v1108
  %v1123 = vmul.f32 %v947, %v1108
  %v1124 = vmul.f32 %v873, %v1113
  %v1125 = vmul.f32 %v911, %v1113
  %v1126 = vmul.f32 %v949, %v1113
  %1128 = vset.pattern.permute.xlu0 0
  %1129 = vperm.xlu0 %1128, %v1091
  %v1130 = vpop.permute.xlu0 %1129
  %1133 = vset.pattern.permute.xlu0 0
  %1134 = vperm.xlu0 %1133, %v1092
  %v1135 = vpop.permute.xlu0 %1134
  %1138 = vset.pattern.permute.xlu0 0
  %1139 = vperm.xlu0 %1138, %v1093
  %v1140 = vpop.permute.xlu0 %1139
  %1143 = vset.pattern.permute.xlu0 0
  %1144 = vperm.xlu0 %1143, %v1094
  %v1145 = vpop.permute.xlu0 %1144
  %v1147 = vadd.f32 %v1115, %v1130
  %v1148 = vadd.f32 %v1116, %v1130
  %v1149 = vadd.f32 %v1117, %v1130
  %v1150 = vadd.f32 %v1118, %v1135
  %v1151 = vadd.f32 %v1119, %v1135
  %v1152 = vadd.f32 %v1120, %v1135
  %v1153 = vadd.f32 %v1121, %v1140
  %v1154 = vadd.f32 %v1122, %v1140
  %v1155 = vadd.f32 %v1123, %v1140
  %v1156 = vadd.f32 %v1124, %v1145
  %v1157 = vadd.f32 %v1125, %v1145
  %v1158 = vadd.f32 %v1126, %v1145
  %v1159 = vmax.f32 %v1147, 0.0
  %v1160 = vmax.f32 %v1148, 0.0
  %v1161 = vmax.f32 %v1149, 0.0
  %v1162 = vmax.f32 %v1150, 0.0
  %v1163 = vmax.f32 %v1151, 0.0
  %v1164 = vmax.f32 %v1152, 0.0
  %v1165 = vmax.f32 %v1153, 0.0
  %v1166 = vmax.f32 %v1154, 0.0
  %v1167 = vmax.f32 %v1155, 0.0
  %v1168 = vmax.f32 %v1156, 0.0
  %v1169 = vmax.f32 %v1157, 0.0
  %v1170 = vmax.f32 %v1158, 0.0
  %v1171 = vmul.f32 %v1159, %v123
  %v1172 = vmul.f32 %v1160, %v124
  %v1173 = vmul.f32 %v1161, %v125
  %v1174 = vmul.f32 %v1162, %v123
  %v1175 = vmul.f32 %v1163, %v124
  %v1176 = vmul.f32 %v1164, %v125
  %v1177 = vmul.f32 %v1165, %v123
  %v1178 = vmul.f32 %v1166, %v124
  %v1179 = vmul.f32 %v1167, %v125
  %v1180 = vmul.f32 %v1168, %v123
  %v1181 = vmul.f32 %v1169, %v124
  %v1182 = vmul.f32 %v1170, %v125
  %v1183 = vld [vmem:[%s8] sm:$0xf]
  %v1184 = vld [vmem:[%s8 + $0x4] sm:$0xf]
  %v1185 = vld [vmem:[%s8 + $0x8] sm:$0xf]
  %v1186 = vld [vmem:[%s8 + $0xc] sm:$0xf]
  %v1187 = vld [vmem:[%s8 + $0x10] sm:$0xf]
  %v1188 = vld [vmem:[%s8 + $0x14] sm:$0xf]
  %v1189 = vld [vmem:[%s8 + $0x18] sm:$0xf]
  %v1190 = vld [vmem:[%s8 + $0x1c] sm:$0xf]
  %v1191 = vpack.c.bf16 %v1172, %v1171
  %v1192 = vpack.c.bf16 %v1173, %v1173
  %v1193 = vpack.c.bf16 %v1175, %v1174
  %v1194 = vpack.c.bf16 %v1176, %v1176
  %v1195 = vpack.c.bf16 %v1178, %v1177
  %v1196 = vpack.c.bf16 %v1179, %v1179
  %v1197 = vpack.c.bf16 %v1181, %v1180
  %v1198 = vpack.c.bf16 %v1182, %v1182
  %v1207 = vunpack.c.l.b16 %v1191
  %v1208 = vunpack.c.h.b16 %v1191
  %v1209 = vunpack.c.l.b16 %v1192
  %v1210 = vunpack.c.l.b16 %v1193
  %v1211 = vunpack.c.h.b16 %v1193
  %v1212 = vunpack.c.l.b16 %v1194
  %v1213 = vunpack.c.l.b16 %v1195
  %v1214 = vunpack.c.h.b16 %v1195
  %v1215 = vunpack.c.l.b16 %v1196
  %v1216 = vunpack.c.l.b16 %v1197
  %v1217 = vunpack.c.h.b16 %v1197
  %v1218 = vunpack.c.l.b16 %v1198
  %v1219 = vpack.c.b16 %v1210, %v1207
  %v1220 = vpack.c.b16 %v1211, %v1208
  %v1221 = vpack.c.b16 %v1212, %v1209
  %v1222 = vpack.c.b16 %v1216, %v1213
  %v1223 = vpack.c.b16 %v1217, %v1214
  %v1224 = vpack.c.b16 %v1218, %v1215
  %1225 = vrot.lane.b32.xlu0 %v1219, 1
  %v1226 = vpop.permute.xlu0 %1225
  %1227 = vrot.lane.b32.xlu0 %v1220, 1
  %v1228 = vpop.permute.xlu0 %1227
  %1229 = vrot.lane.b32.xlu0 %v1221, 1
  %v1230 = vpop.permute.xlu0 %1229
  %1231 = vrot.lane.b32.xlu0 %v1222, 1
  %v1232 = vpop.permute.xlu0 %1231
  %1233 = vrot.lane.b32.xlu0 %v1223, 1
  %v1234 = vpop.permute.xlu0 %1233
  %1235 = vrot.lane.b32.xlu0 %v1224, 1
  %v1236 = vpop.permute.xlu0 %1235
  %v1237 = vsel %vm674, %v1226, %v1228
  %v1238 = vsel %vm674, %v1228, %v1230
  %v1239 = vsel %vm674, %v1232, %v1234
  %v1240 = vsel %vm674, %v1234, %v1236
  %v1244 = vsel %vm687, 0, %v1226
  %v1247 = vsel %vm687, 0, %v1232
  %v1250 = vsel %vm701, %v1238, 0
  %v1253 = vsel %vm701, %v1240, 0
  %1259 = vrot.lane.b32.xlu0 %v1244, 127
  %v1260 = vpop.permute.xlu0 %1259
  %1261 = vrot.lane.b32.xlu0 %v1237, 127
  %v1262 = vpop.permute.xlu0 %1261
  %1263 = vrot.lane.b32.xlu0 %v1250, 127
  %v1264 = vpop.permute.xlu0 %1263
  %1265 = vrot.lane.b32.xlu0 %v1247, 127
  %v1266 = vpop.permute.xlu0 %1265
  %1267 = vrot.lane.b32.xlu0 %v1239, 127
  %v1268 = vpop.permute.xlu0 %1267
  %1269 = vrot.lane.b32.xlu0 %v1253, 127
  %v1270 = vpop.permute.xlu0 %1269
  %v1271 = vsel %vm746, %v1260, %v1262
  %v1272 = vsel %vm746, %v1262, %v1264
  %v1273 = vsel %vm746, %v1266, %v1268
  %v1274 = vsel %vm746, %v1268, %v1270
  %1281 = vrot.lane.b32.xlu0 %v1244, 126
  %v1282 = vpop.permute.xlu0 %1281
  %1283 = vrot.lane.b32.xlu0 %v1237, 126
  %v1284 = vpop.permute.xlu0 %1283
  %1285 = vrot.lane.b32.xlu0 %v1250, 126
  %v1286 = vpop.permute.xlu0 %1285
  %1287 = vrot.lane.b32.xlu0 %v1247, 126
  %v1288 = vpop.permute.xlu0 %1287
  %1289 = vrot.lane.b32.xlu0 %v1239, 126
  %v1290 = vpop.permute.xlu0 %1289
  %1291 = vrot.lane.b32.xlu0 %v1253, 126
  %v1292 = vpop.permute.xlu0 %1291
  %v1293 = vsel %vm791, %v1282, %v1284
  %v1294 = vsel %vm791, %v1284, %v1286
  %v1295 = vsel %vm791, %v1288, %v1290
  %v1296 = vsel %vm791, %v1290, %v1292
  %v1311 = vunpack.c.l.b16 %v1183
  %v1312 = vunpack.c.l.b16 %v1184
  %v1313 = vunpack.c.l.b16 %v1185
  %v1314 = vunpack.c.l.b16 %v1186
  %v1315 = vunpack.c.l.b16 %v1187
  %v1316 = vunpack.c.l.b16 %v1188
  %v1317 = vunpack.c.l.b16 %v1189
  %v1318 = vunpack.c.l.b16 %v1190
  %v1319 = vpack.c.b16 %v1312, %v1311
  %v1320 = vpack.c.b16 %v1314, %v1313
  %v1321 = vpack.c.b16 %v1316, %v1315
  %v1322 = vpack.c.b16 %v1318, %v1317
  %vm1323 = vcmask 785408
  %v1325 = vsel %vm1323, %v1319, 0
  %v1328 = vsel %vm1323, %v1320, 0
  %v1331 = vsel %vm1323, %v1321, 0
  %v1334 = vsel %vm1323, %v1322, 0
  %1336 = vmatpush.bf16.msra.mxu0 0
  %1337 = vmatpush.bf16.msra.mxu0 0
  %1338 = vmatpush.bf16.msra.mxu0 %v1295
  %1339 = vmatpush.bf16.msra.mxu0 %v1293
  %1340 = vmatpush.bf16.msra.mxu0 %v1273
  %1341 = vmatpush.bf16.msra.mxu0 %v1271
  %1342 = vmatpush.bf16.msra.mxu0 %v1247
  %1343 = vmatpush.bf16.msra.mxu0 %v1244
  %1344 = vmatmul.bf16.gmra.mxu0 %v1325
  %v1345 = vpop.f32.mrf.mxu0
  %v1346 = vadd.f32 0.0, %v1345
  %v1347 = vpop.f32.mrf.mxu0
  %v1348 = vadd.f32 0.0, %v1347
  %1349 = vmatmul.bf16.gmra.mxu0 %v1328
  %v1350 = vpop.f32.mrf.mxu0
  %v1351 = vadd.f32 0.0, %v1350
  %v1352 = vpop.f32.mrf.mxu0
  %v1353 = vadd.f32 0.0, %v1352
  %1354 = vmatmul.bf16.gmra.mxu0 %v1331
  %v1355 = vpop.f32.mrf.mxu0
  %v1356 = vadd.f32 0.0, %v1355
  %v1357 = vpop.f32.mrf.mxu0
  %v1358 = vadd.f32 0.0, %v1357
  %1359 = vmatmul.bf16.gmra.mxu0 %v1334
  %v1360 = vpop.f32.mrf.mxu0
  %v1361 = vadd.f32 0.0, %v1360
  %v1362 = vpop.f32.mrf.mxu0
  %v1363 = vadd.f32 0.0, %v1362
  %1364 = vdwg.mxu0
  %1365 = vmatpush.bf16.msra.mxu0 0
  %1366 = vmatpush.bf16.msra.mxu0 0
  %1367 = vmatpush.bf16.msra.mxu0 %v1296
  %1368 = vmatpush.bf16.msra.mxu0 %v1294
  %1369 = vmatpush.bf16.msra.mxu0 %v1274
  %1370 = vmatpush.bf16.msra.mxu0 %v1272
  %1371 = vmatpush.bf16.msra.mxu0 %v1239
  %1372 = vmatpush.bf16.msra.mxu0 %v1237
  %1373 = vmatmul.bf16.gmra.mxu0 %v1325
  %v1374 = vpop.f32.mrf.mxu0
  %v1375 = vadd.f32 0.0, %v1374
  %v1376 = vpop.f32.mrf.mxu0
  %v1377 = vadd.f32 0.0, %v1376
  %1378 = vmatmul.bf16.gmra.mxu0 %v1328
  %v1379 = vpop.f32.mrf.mxu0
  %v1380 = vadd.f32 0.0, %v1379
  %v1381 = vpop.f32.mrf.mxu0
  %v1382 = vadd.f32 0.0, %v1381
  %1383 = vmatmul.bf16.gmra.mxu0 %v1331
  %v1384 = vpop.f32.mrf.mxu0
  %v1385 = vadd.f32 0.0, %v1384
  %v1386 = vpop.f32.mrf.mxu0
  %v1387 = vadd.f32 0.0, %v1386
  %1388 = vmatmul.bf16.gmra.mxu0 %v1334
  %v1389 = vpop.f32.mrf.mxu0
  %v1390 = vadd.f32 0.0, %v1389
  %v1391 = vpop.f32.mrf.mxu0
  %v1392 = vadd.f32 0.0, %v1391
  %1393 = vdwg.mxu0
  %1394 = vmatpush.bf16.msra.mxu0 0
  %1395 = vmatpush.bf16.msra.mxu0 0
  %1396 = vmatpush.bf16.msra.mxu0 %v1292
  %1397 = vmatpush.bf16.msra.mxu0 %v1286
  %1398 = vmatpush.bf16.msra.mxu0 %v1270
  %1399 = vmatpush.bf16.msra.mxu0 %v1264
  %1400 = vmatpush.bf16.msra.mxu0 %v1253
  %1401 = vmatpush.bf16.msra.mxu0 %v1250
  %1402 = vmatmul.bf16.gmra.mxu0 %v1325
  %v1403 = vpop.f32.mrf.mxu0
  %v1404 = vadd.f32 0.0, %v1403
  %v1405 = vpop.f32.mrf.mxu0
  %v1406 = vadd.f32 0.0, %v1405
  %1407 = vmatmul.bf16.gmra.mxu0 %v1328
  %v1408 = vpop.f32.mrf.mxu0
  %v1409 = vadd.f32 0.0, %v1408
  %v1410 = vpop.f32.mrf.mxu0
  %v1411 = vadd.f32 0.0, %v1410
  %1412 = vmatmul.bf16.gmra.mxu0 %v1331
  %v1413 = vpop.f32.mrf.mxu0
  %v1414 = vadd.f32 0.0, %v1413
  %v1415 = vpop.f32.mrf.mxu0
  %v1416 = vadd.f32 0.0, %v1415
  %1417 = vmatmul.bf16.gmra.mxu0 %v1334
  %v1418 = vpop.f32.mrf.mxu0
  %v1419 = vadd.f32 0.0, %v1418
  %v1420 = vpop.f32.mrf.mxu0
  %v1421 = vadd.f32 0.0, %v1420
  %1422 = vdwg.mxu0
  %1423 = vst [vmem:[%s9] sm:$0xff] %v1346
  %1424 = vst [vmem:[%s9 + $0x8] sm:$0xff] %v1375
  %1425 = vst.msk [vmem:[%s9 + $0x10] sm:$0xff] %vm154, %v1404
  %1426 = vst [vmem:[%s9 + $0x18] sm:$0xff] %v1348
  %1427 = vst [vmem:[%s9 + $0x20] sm:$0xff] %v1377
  %1428 = vst.msk [vmem:[%s9 + $0x28] sm:$0xff] %vm154, %v1406
  %1429 = vst [vmem:[%s9 + $0x30] sm:$0xff] %v1351
  %1430 = vst [vmem:[%s9 + $0x38] sm:$0xff] %v1380
  %1431 = vst.msk [vmem:[%s9 + $0x40] sm:$0xff] %vm154, %v1409
  %1432 = vst [vmem:[%s9 + $0x48] sm:$0xff] %v1353
  %1433 = vst [vmem:[%s9 + $0x50] sm:$0xff] %v1382
  %1434 = vst.msk [vmem:[%s9 + $0x58] sm:$0xff] %vm154, %v1411
  %1435 = vst [vmem:[%s9 + $0x60] sm:$0xff] %v1356
  %1436 = vst [vmem:[%s9 + $0x68] sm:$0xff] %v1385
  %1437 = vst.msk [vmem:[%s9 + $0x70] sm:$0xff] %vm154, %v1414
  %1438 = vst [vmem:[%s9 + $0x78] sm:$0xff] %v1358
  %1439 = vst [vmem:[%s9 + $0x80] sm:$0xff] %v1387
  %1440 = vst.msk [vmem:[%s9 + $0x88] sm:$0xff] %vm154, %v1416
  %1441 = vst [vmem:[%s9 + $0x90] sm:$0xff] %v1361
  %1442 = vst [vmem:[%s9 + $0x98] sm:$0xff] %v1390
  %1443 = vst.msk [vmem:[%s9 + $0xa0] sm:$0xff] %vm154, %v1419
  %1444 = vst [vmem:[%s9 + $0xa8] sm:$0xff] %v1363
  %1445 = vst [vmem:[%s9 + $0xb0] sm:$0xff] %v1392
  %1446 = vst.msk [vmem:[%s9 + $0xb8] sm:$0xff] %vm154, %v1421
  // Predicated region
  $region38: #{seismogram_decoder_forward.4} parent=0 // pred_check
    _
  $region39: #{seismogram_decoder_forward.4} parent=0 // pred_check_branch
    %1448 = sbr.rel (0) target = $region41
  $region40: #{seismogram_decoder_forward.4} parent=0 // pred_region
    _
  $region41: #{seismogram_decoder_forward.4} parent=0 // pred_fallthru
    _
  // Predicated region
  $region42: #{seismogram_decoder_forward.4} parent=0 // pred_check
    _
  $region43: #{seismogram_decoder_forward.4} parent=0 // pred_check_branch
    %1450 = sbr.rel (0) target = $region45
  $region44: #{seismogram_decoder_forward.4} parent=0 // pred_region
    _
  $region45: #{seismogram_decoder_forward.4} parent=0 // pred_fallthru
    _

// kernel: seismogram_decoder_forward.5
$region0: #{seismogram_decoder_forward.5}
  #allocation0 [shape = 'u32[]', space=smem, size = 0x4, offset = 0x4, fixed_abs, tag = 'smem constant byte address 0x4 - core index']
  #allocation1 [shape = 'u32[72,128]{1,0:T(1,128)}', space=vmem, size = 0x9000, scoped, tag = 'internal scratch']
  %s0 = inlined_call_operand.vmem [shape: f32[32,516], index: 0, kind: input, shape index: {}]
  %s1 = inlined_call_operand.vmem [shape: f32[32,516], index: 1, kind: input, shape index: {}]
  %s2 = inlined_call_operand.vmem [shape: f32[1,516], index: 2, kind: input, shape index: {}]
  %s3 = inlined_call_operand.vmem [shape: f32[32,1], index: 3, kind: input, shape index: {}]
  %s4 = inlined_call_operand.vmem [shape: f32[32,1], index: 4, kind: input, shape index: {}]
  %s5 = inlined_call_operand.vmem [shape: bf16[16,160], index: 5, kind: input, shape index: {}]
  %s6 = inlined_call_operand.vmem [shape: f32[16,1], index: 6, kind: input, shape index: {}]
  %s7 = inlined_call_operand.vmem [shape: f32[16,1], index: 7, kind: input, shape index: {}]
  %s8 = inlined_call_operand.vmem [shape: bf16[32,64], index: 8, kind: input, shape index: {}]
  %s9 = inlined_call_operand.vmem [shape: f32[32,516], index: 9, kind: output, shape index: {}]
  %s10 = sld [smem:[#allocation0]]
  $region46: #{seismogram_decoder_forward.5} parent=0
    _
  %s12 = ssub.s32 1, %s10
  %s13 = scalar_select 0, %s12, %s10
  // Predicated region
  $region2: #{seismogram_decoder_forward.5} parent=0 // pred_check
    _
  $region3: #{seismogram_decoder_forward.5} parent=0 // pred_check_branch
    %15 = sbr.rel (0) target = $region5
  $region4: #{seismogram_decoder_forward.5} parent=0 // pred_region
    _
  $region5: #{seismogram_decoder_forward.5} parent=0 // pred_fallthru
    _
  // Predicated region
  $region6: #{seismogram_decoder_forward.5} parent=0 // pred_check
    _
  $region7: #{seismogram_decoder_forward.5} parent=0 // pred_check_branch
    %17 = sbr.rel (0) target = $region9
  $region8: #{seismogram_decoder_forward.5} parent=0 // pred_region
    _
  $region9: #{seismogram_decoder_forward.5} parent=0 // pred_fallthru
    _
  // Predicated region
  $region10: #{seismogram_decoder_forward.5} parent=0 // pred_check
    _
  $region11: #{seismogram_decoder_forward.5} parent=0 // pred_check_branch
    %19 = sbr.rel (0) target = $region13
  $region12: #{seismogram_decoder_forward.5} parent=0 // pred_region
    _
  $region13: #{seismogram_decoder_forward.5} parent=0 // pred_fallthru
    _
  // Predicated region
  $region14: #{seismogram_decoder_forward.5} parent=0 // pred_check
    _
  $region15: #{seismogram_decoder_forward.5} parent=0 // pred_check_branch
    %21 = sbr.rel (0) target = $region17
  $region16: #{seismogram_decoder_forward.5} parent=0 // pred_region
    _
  $region17: #{seismogram_decoder_forward.5} parent=0 // pred_fallthru
    _
  // Predicated region
  $region18: #{seismogram_decoder_forward.5} parent=0 // pred_check
    _
  $region19: #{seismogram_decoder_forward.5} parent=0 // pred_check_branch
    %23 = sbr.rel (0) target = $region21
  $region20: #{seismogram_decoder_forward.5} parent=0 // pred_region
    _
  $region21: #{seismogram_decoder_forward.5} parent=0 // pred_fallthru
    _
  // Predicated region
  $region22: #{seismogram_decoder_forward.5} parent=0 // pred_check
    _
  $region23: #{seismogram_decoder_forward.5} parent=0 // pred_check_branch
    %25 = sbr.rel (0) target = $region25
  $region24: #{seismogram_decoder_forward.5} parent=0 // pred_region
    _
  $region25: #{seismogram_decoder_forward.5} parent=0 // pred_fallthru
    _
  // Predicated region
  $region26: #{seismogram_decoder_forward.5} parent=0 // pred_check
    _
  $region27: #{seismogram_decoder_forward.5} parent=0 // pred_check_branch
    %27 = sbr.rel (0) target = $region29
  $region28: #{seismogram_decoder_forward.5} parent=0 // pred_region
    _
  $region29: #{seismogram_decoder_forward.5} parent=0 // pred_fallthru
    _
  // Predicated region
  $region30: #{seismogram_decoder_forward.5} parent=0 // pred_check
    _
  $region31: #{seismogram_decoder_forward.5} parent=0 // pred_check_branch
    %29 = sbr.rel (0) target = $region33
  $region32: #{seismogram_decoder_forward.5} parent=0 // pred_region
    _
  $region33: #{seismogram_decoder_forward.5} parent=0 // pred_fallthru
    _
  // Predicated region
  $region34: #{seismogram_decoder_forward.5} parent=0 // pred_check
    _
  $region35: #{seismogram_decoder_forward.5} parent=0 // pred_check_branch
    %31 = sbr.rel (0) target = $region37
  $region36: #{seismogram_decoder_forward.5} parent=0 // pred_region
    _
  $region37: #{seismogram_decoder_forward.5} parent=0 // pred_fallthru
    _
  %v33 = vld [vmem:[%s2] sm:$0x1f]
  %v34 = vld [vmem:[%s0] sm:$0xff]
  %v35 = vld [vmem:[%s0 + $0x8] sm:$0xff]
  %v36 = vld [vmem:[%s0 + $0x10] sm:$0xff]
  %v37 = vld [vmem:[%s0 + $0x18] sm:$0xff]
  %v38 = vld [vmem:[%s0 + $0x20] sm:$0xff]
  %v39 = vld [vmem:[%s0 + $0x28] sm:$0xff]
  %v40 = vld [vmem:[%s0 + $0x30] sm:$0xff]
  %v41 = vld [vmem:[%s0 + $0x38] sm:$0xff]
  %v42 = vld [vmem:[%s0 + $0x40] sm:$0xff]
  %v43 = vld [vmem:[%s0 + $0x48] sm:$0xff]
  %v44 = vld [vmem:[%s0 + $0x50] sm:$0xff]
  %v45 = vld [vmem:[%s0 + $0x58] sm:$0xff]
  %v46 = vld [vmem:[%s0 + $0x60] sm:$0xff]
  %v47 = vld [vmem:[%s0 + $0x68] sm:$0xff]
  %v48 = vld [vmem:[%s0 + $0x70] sm:$0xff]
  %v49 = vld [vmem:[%s0 + $0x78] sm:$0xff]
  %v50 = vld [vmem:[%s0 + $0x80] sm:$0xff]
  %v51 = vld [vmem:[%s0 + $0x88] sm:$0xff]
  %v52 = vld [vmem:[%s0 + $0x90] sm:$0xff]
  %v53 = vld [vmem:[%s0 + $0x98] sm:$0xff]
  %v54 = vld [vmem:[%s1] sm:$0xff]
  %v55 = vld [vmem:[%s1 + $0x8] sm:$0xff]
  %v56 = vld [vmem:[%s1 + $0x10] sm:$0xff]
  %v57 = vld [vmem:[%s1 + $0x18] sm:$0xff]
  %v58 = vld [vmem:[%s1 + $0x20] sm:$0xff]
  %v59 = vld [vmem:[%s1 + $0x28] sm:$0xff]
  %v60 = vld [vmem:[%s1 + $0x30] sm:$0xff]
  %v61 = vld [vmem:[%s1 + $0x38] sm:$0xff]
  %v62 = vld [vmem:[%s1 + $0x40] sm:$0xff]
  %v63 = vld [vmem:[%s1 + $0x48] sm:$0xff]
  %v64 = vld [vmem:[%s1 + $0x50] sm:$0xff]
  %v65 = vld [vmem:[%s1 + $0x58] sm:$0xff]
  %v66 = vld [vmem:[%s1 + $0x60] sm:$0xff]
  %v67 = vld [vmem:[%s1 + $0x68] sm:$0xff]
  %v68 = vld [vmem:[%s1 + $0x70] sm:$0xff]
  %v69 = vld [vmem:[%s1 + $0x78] sm:$0xff]
  %v70 = vld [vmem:[%s1 + $0x80] sm:$0xff]
  %v71 = vld [vmem:[%s1 + $0x88] sm:$0xff]
  %v72 = vld [vmem:[%s1 + $0x90] sm:$0xff]
  %v73 = vld [vmem:[%s1 + $0x98] sm:$0xff]
  %v74 = vadd.f32 %v34, %v54
  %v75 = vadd.f32 %v35, %v55
  %v76 = vadd.f32 %v36, %v56
  %v77 = vadd.f32 %v37, %v57
  %v78 = vadd.f32 %v38, %v58
  %v79 = vadd.f32 %v39, %v59
  %v80 = vadd.f32 %v40, %v60
  %v81 = vadd.f32 %v41, %v61
  %v82 = vadd.f32 %v42, %v62
  %v83 = vadd.f32 %v43, %v63
  %v84 = vadd.f32 %v44, %v64
  %v85 = vadd.f32 %v45, %v65
  %v86 = vadd.f32 %v46, %v66
  %v87 = vadd.f32 %v47, %v67
  %v88 = vadd.f32 %v48, %v68
  %v89 = vadd.f32 %v49, %v69
  %v90 = vadd.f32 %v50, %v70
  %v91 = vadd.f32 %v51, %v71
  %v92 = vadd.f32 %v52, %v72
  %v93 = vadd.f32 %v53, %v73
  %v94 = vld [vmem:[%s3] sm:$0xff]
  %v95 = vld [vmem:[%s3 + $0x8] sm:$0xff]
  %v96 = vld [vmem:[%s3 + $0x10] sm:$0xff]
  %v97 = vld [vmem:[%s3 + $0x18] sm:$0xff]
  %v98 = vld [vmem:[%s4] sm:$0xff]
  %v99 = vld [vmem:[%s4 + $0x8] sm:$0xff]
  %v100 = vld [vmem:[%s4 + $0x10] sm:$0xff]
  %v101 = vld [vmem:[%s4 + $0x18] sm:$0xff]
  %v103 = vperm.slane %v33, 0
  %v104 = vperm.slane %v33, 1
  %v105 = vperm.slane %v33, 2
  %v106 = vperm.slane %v33, 3
  %v107 = vperm.slane %v33, 4
  %v113 = vmul.f32 %v74, %v103
  %v114 = vmul.f32 %v75, %v104
  %v115 = vmul.f32 %v76, %v105
  %v116 = vmul.f32 %v77, %v106
  %v117 = vmul.f32 %v78, %v107
  %v118 = vmul.f32 %v79, %v103
  %v119 = vmul.f32 %v80, %v104
  %v120 = vmul.f32 %v81, %v105
  %v121 = vmul.f32 %v82, %v106
  %v122 = vmul.f32 %v83, %v107
  %v123 = vmul.f32 %v84, %v103
  %v124 = vmul.f32 %v85, %v104
  %v125 = vmul.f32 %v86, %v105
  %v126 = vmul.f32 %v87, %v106
  %v127 = vmul.f32 %v88, %v107
  %v128 = vmul.f32 %v89, %v103
  %v129 = vmul.f32 %v90, %v104
  %v130 = vmul.f32 %v91, %v105
  %v131 = vmul.f32 %v92, %v106
  %v132 = vmul.f32 %v93, %v107
  %v133 = vadd.f32 %v113, %v114
  %v134 = vadd.f32 %v133, %v115
  %v135 = vadd.f32 %v134, %v116
  %vm136 = vcmask 31744
  %v137 = vsel %vm136, %v117, 0.0
  %v138 = vadd.f32 %v135, %v137
  %139 = vadd.xlane.f32.xlu0 %v138
  %v140 = vpop.xlane.xlu0 %139
  %v141 = vadd.f32 %v118, %v119
  %v142 = vadd.f32 %v141, %v120
  %v143 = vadd.f32 %v142, %v121
  %v144 = vsel %vm136, %v122, 0.0
  %v145 = vadd.f32 %v143, %v144
  %146 = vadd.xlane.f32.xlu0 %v145
  %v147 = vpop.xlane.xlu0 %146
  %v148 = vadd.f32 %v123, %v124
  %v149 = vadd.f32 %v148, %v125
  %v150 = vadd.f32 %v149, %v126
  %v151 = vsel %vm136, %v127, 0.0
  %v152 = vadd.f32 %v150, %v151
  %153 = vadd.xlane.f32.xlu0 %v152
  %v154 = vpop.xlane.xlu0 %153
  %v155 = vadd.f32 %v128, %v129
  %v156 = vadd.f32 %v155, %v130
  %v157 = vadd.f32 %v156, %v131
  %v158 = vsel %vm136, %v132, 0.0
  %v159 = vadd.f32 %v157, %v158
  %160 = vadd.xlane.f32.xlu0 %v159
  %v161 = vpop.xlane.xlu0 %160
  %v162 = vmul.f32 %v140, 0.001953125
  %v163 = vmul.f32 %v147, 0.001953125
  %v164 = vmul.f32 %v154, 0.001953125
  %v165 = vmul.f32 %v161, 0.001953125
  %v166 = vmul.f32 %v74, %v113
  %v167 = vmul.f32 %v75, %v114
  %v168 = vmul.f32 %v76, %v115
  %v169 = vmul.f32 %v77, %v116
  %v170 = vmul.f32 %v78, %v117
  %v171 = vmul.f32 %v79, %v118
  %v172 = vmul.f32 %v80, %v119
  %v173 = vmul.f32 %v81, %v120
  %v174 = vmul.f32 %v82, %v121
  %v175 = vmul.f32 %v83, %v122
  %v176 = vmul.f32 %v84, %v123
  %v177 = vmul.f32 %v85, %v124
  %v178 = vmul.f32 %v86, %v125
  %v179 = vmul.f32 %v87, %v126
  %v180 = vmul.f32 %v88, %v127
  %v181 = vmul.f32 %v89, %v128
  %v182 = vmul.f32 %v90, %v129
  %v183 = vmul.f32 %v91, %v130
  %v184 = vmul.f32 %v92, %v131
  %v185 = vmul.f32 %v93, %v132
  %v186 = vadd.f32 %v166, %v167
  %v187 = vadd.f32 %v186, %v168
  %v188 = vadd.f32 %v187, %v169
  %v189 = vsel %vm136, %v170, 0.0
  %v190 = vadd.f32 %v188, %v189
  %191 = vadd.xlane.f32.xlu0 %v190
  %v192 = vpop.xlane.xlu0 %191
  %v193 = vadd.f32 %v171, %v172
  %v194 = vadd.f32 %v193, %v173
  %v195 = vadd.f32 %v194, %v174
  %v196 = vsel %vm136, %v175, 0.0
  %v197 = vadd.f32 %v195, %v196
  %198 = vadd.xlane.f32.xlu0 %v197
  %v199 = vpop.xlane.xlu0 %198
  %v200 = vadd.f32 %v176, %v177
  %v201 = vadd.f32 %v200, %v178
  %v202 = vadd.f32 %v201, %v179
  %v203 = vsel %vm136, %v180, 0.0
  %v204 = vadd.f32 %v202, %v203
  %205 = vadd.xlane.f32.xlu0 %v204
  %v206 = vpop.xlane.xlu0 %205
  %v207 = vadd.f32 %v181, %v182
  %v208 = vadd.f32 %v207, %v183
  %v209 = vadd.f32 %v208, %v184
  %v210 = vsel %vm136, %v185, 0.0
  %v211 = vadd.f32 %v209, %v210
  %212 = vadd.xlane.f32.xlu0 %v211
  %v213 = vpop.xlane.xlu0 %212
  %v214 = vmul.f32 %v192, 0.001953125
  %v215 = vmul.f32 %v199, 0.001953125
  %v216 = vmul.f32 %v206, 0.001953125
  %v217 = vmul.f32 %v213, 0.001953125
  %v218 = vmul.f32 %v162, %v162
  %v219 = vmul.f32 %v163, %v163
  %v220 = vmul.f32 %v164, %v164
  %v221 = vmul.f32 %v165, %v165
  %v222 = vsub.f32 %v214, %v218
  %v223 = vsub.f32 %v215, %v219
  %v224 = vsub.f32 %v216, %v220
  %v225 = vsub.f32 %v217, %v221
  %v226 = vadd.f32 %v222, 1e-05
  %v227 = vadd.f32 %v223, 1e-05
  %v228 = vadd.f32 %v224, 1e-05
  %v229 = vadd.f32 %v225, 1e-05
  %v230 = vrsqrt.pop %v226
  %v231 = vmul.f32 %v230, %v226
  %v232 = vmul.f32 %v231, %v230
  %v233 = vmul.f32 0.5, %v232
  %v234 = vsub.f32 1.5, %v233
  %v235 = vmul.f32 %v230, %v234
  %vm236 = vweird.f32 %v226
  %vm237 = vweird.f32 %v230
  %vm238 = vmor %vm236, %vm237
  %v239 = vsel %vm238, %v230, %v235
  %v240 = vrsqrt.pop %v227
  %v241 = vmul.f32 %v240, %v227
  %v242 = vmul.f32 %v241, %v240
  %v243 = vmul.f32 0.5, %v242
  %v244 = vsub.f32 1.5, %v243
  %v245 = vmul.f32 %v240, %v244
  %vm246 = vweird.f32 %v227
  %vm247 = vweird.f32 %v240
  %vm248 = vmor %vm246, %vm247
  %v249 = vsel %vm248, %v240, %v245
  %v250 = vrsqrt.pop %v228
  %v251 = vmul.f32 %v250, %v228
  %v252 = vmul.f32 %v251, %v250
  %v253 = vmul.f32 0.5, %v252
  %v254 = vsub.f32 1.5, %v253
  %v255 = vmul.f32 %v250, %v254
  %vm256 = vweird.f32 %v228
  %vm257 = vweird.f32 %v250
  %vm258 = vmor %vm256, %vm257
  %v259 = vsel %vm258, %v250, %v255
  %v260 = vrsqrt.pop %v229
  %v261 = vmul.f32 %v260, %v229
  %v262 = vmul.f32 %v261, %v260
  %v263 = vmul.f32 0.5, %v262
  %v264 = vsub.f32 1.5, %v263
  %v265 = vmul.f32 %v260, %v264
  %vm266 = vweird.f32 %v229
  %vm267 = vweird.f32 %v260
  %vm268 = vmor %vm266, %vm267
  %v269 = vsel %vm268, %v260, %v265
  %v270 = vmul.f32 %v94, %v239
  %v271 = vmul.f32 %v95, %v249
  %v272 = vmul.f32 %v96, %v259
  %v273 = vmul.f32 %v97, %v269
  %v274 = vmul.f32 %v162, %v270
  %v275 = vmul.f32 %v163, %v271
  %v276 = vmul.f32 %v164, %v272
  %v277 = vmul.f32 %v165, %v273
  %v278 = vsub.f32 %v98, %v274
  %v279 = vsub.f32 %v99, %v275
  %v280 = vsub.f32 %v100, %v276
  %v281 = vsub.f32 %v101, %v277
  %283 = vset.pattern.permute.xlu0 0
  %284 = vperm.xlu0 %283, %v270
  %v285 = vpop.permute.xlu0 %284
  %288 = vset.pattern.permute.xlu0 0
  %289 = vperm.xlu0 %288, %v271
  %v290 = vpop.permute.xlu0 %289
  %293 = vset.pattern.permute.xlu0 0
  %294 = vperm.xlu0 %293, %v272
  %v295 = vpop.permute.xlu0 %294
  %298 = vset.pattern.permute.xlu0 0
  %299 = vperm.xlu0 %298, %v273
  %v300 = vpop.permute.xlu0 %299
  %v302 = vmul.f32 %v74, %v285
  %v303 = vmul.f32 %v75, %v285
  %v304 = vmul.f32 %v76, %v285
  %v305 = vmul.f32 %v77, %v285
  %v306 = vmul.f32 %v78, %v285
  %v307 = vmul.f32 %v79, %v290
  %v308 = vmul.f32 %v80, %v290
  %v309 = vmul.f32 %v81, %v290
  %v310 = vmul.f32 %v82, %v290
  %v311 = vmul.f32 %v83, %v290
  %v312 = vmul.f32 %v84, %v295
  %v313 = vmul.f32 %v85, %v295
  %v314 = vmul.f32 %v86, %v295
  %v315 = vmul.f32 %v87, %v295
  %v316 = vmul.f32 %v88, %v295
  %v317 = vmul.f32 %v89, %v300
  %v318 = vmul.f32 %v90, %v300
  %v319 = vmul.f32 %v91, %v300
  %v320 = vmul.f32 %v92, %v300
  %v321 = vmul.f32 %v93, %v300
  %323 = vset.pattern.permute.xlu0 0
  %324 = vperm.xlu0 %323, %v278
  %v325 = vpop.permute.xlu0 %324
  %328 = vset.pattern.permute.xlu0 0
  %329 = vperm.xlu0 %328, %v279
  %v330 = vpop.permute.xlu0 %329
  %333 = vset.pattern.permute.xlu0 0
  %334 = vperm.xlu0 %333, %v280
  %v335 = vpop.permute.xlu0 %334
  %338 = vset.pattern.permute.xlu0 0
  %339 = vperm.xlu0 %338, %v281
  %v340 = vpop.permute.xlu0 %339
  %v342 = vadd.f32 %v302, %v325
  %v343 = vadd.f32 %v303, %v325
  %v344 = vadd.f32 %v304, %v325
  %v345 = vadd.f32 %v305, %v325
  %v346 = vadd.f32 %v306, %v325
  %v347 = vadd.f32 %v307, %v330
  %v348 = vadd.f32 %v308, %v330
  %v349 = vadd.f32 %v309, %v330
  %v350 = vadd.f32 %v310, %v330
  %v351 = vadd.f32 %v311, %v330
  %v352 = vadd.f32 %v312, %v335
  %v353 = vadd.f32 %v313, %v335
  %v354 = vadd.f32 %v314, %v335
  %v355 = vadd.f32 %v315, %v335
  %v356 = vadd.f32 %v316, %v335
  %v357 = vadd.f32 %v317, %v340
  %v358 = vadd.f32 %v318, %v340
  %v359 = vadd.f32 %v319, %v340
  %v360 = vadd.f32 %v320, %v340
  %v361 = vadd.f32 %v321, %v340
  %v362 = vmax.f32 %v342, 0.0
  %v363 = vmax.f32 %v343, 0.0
  %v364 = vmax.f32 %v344, 0.0
  %v365 = vmax.f32 %v345, 0.0
  %v366 = vmax.f32 %v346, 0.0
  %v367 = vmax.f32 %v347, 0.0
  %v368 = vmax.f32 %v348, 0.0
  %v369 = vmax.f32 %v349, 0.0
  %v370 = vmax.f32 %v350, 0.0
  %v371 = vmax.f32 %v351, 0.0
  %v372 = vmax.f32 %v352, 0.0
  %v373 = vmax.f32 %v353, 0.0
  %v374 = vmax.f32 %v354, 0.0
  %v375 = vmax.f32 %v355, 0.0
  %v376 = vmax.f32 %v356, 0.0
  %v377 = vmax.f32 %v357, 0.0
  %v378 = vmax.f32 %v358, 0.0
  %v379 = vmax.f32 %v359, 0.0
  %v380 = vmax.f32 %v360, 0.0
  %v381 = vmax.f32 %v361, 0.0
  %v382 = vmul.f32 %v362, %v103
  %v383 = vmul.f32 %v363, %v104
  %v384 = vmul.f32 %v364, %v105
  %v385 = vmul.f32 %v365, %v106
  %v386 = vmul.f32 %v366, %v107
  %v387 = vmul.f32 %v367, %v103
  %v388 = vmul.f32 %v368, %v104
  %v389 = vmul.f32 %v369, %v105
  %v390 = vmul.f32 %v370, %v106
  %v391 = vmul.f32 %v371, %v107
  %v392 = vmul.f32 %v372, %v103
  %v393 = vmul.f32 %v373, %v104
  %v394 = vmul.f32 %v374, %v105
  %v395 = vmul.f32 %v375, %v106
  %v396 = vmul.f32 %v376, %v107
  %v397 = vmul.f32 %v377, %v103
  %v398 = vmul.f32 %v378, %v104
  %v399 = vmul.f32 %v379, %v105
  %v400 = vmul.f32 %v380, %v106
  %v401 = vmul.f32 %v381, %v107
  %v402 = vld [vmem:[%s5] sm:$0xff]
  %v403 = vld [vmem:[%s5 + $0x8] sm:$0xff]
  %v404 = vpack.c.bf16 %v383, %v382
  %v405 = vpack.c.bf16 %v385, %v384
  %v406 = vpack.c.bf16 %v386, %v386
  %v407 = vpack.c.bf16 %v388, %v387
  %v408 = vpack.c.bf16 %v390, %v389
  %v409 = vpack.c.bf16 %v391, %v391
  %v410 = vpack.c.bf16 %v393, %v392
  %v411 = vpack.c.bf16 %v395, %v394
  %v412 = vpack.c.bf16 %v396, %v396
  %v413 = vpack.c.bf16 %v398, %v397
  %v414 = vpack.c.bf16 %v400, %v399
  %v415 = vpack.c.bf16 %v401, %v401
  %v428 = vunpack.c.l.b16 %v404
  %v429 = vunpack.c.h.b16 %v404
  %v430 = vunpack.c.l.b16 %v405
  %v431 = vunpack.c.h.b16 %v405
  %v432 = vunpack.c.l.b16 %v406
  %v433 = vunpack.c.l.b16 %v407
  %v434 = vunpack.c.h.b16 %v407
  %v435 = vunpack.c.l.b16 %v408
  %v436 = vunpack.c.h.b16 %v408
  %v437 = vunpack.c.l.b16 %v409
  %v438 = vunpack.c.l.b16 %v410
  %v439 = vunpack.c.h.b16 %v410
  %v440 = vunpack.c.l.b16 %v411
  %v441 = vunpack.c.h.b16 %v411
  %v442 = vunpack.c.l.b16 %v412
  %v443 = vunpack.c.l.b16 %v413
  %v444 = vunpack.c.h.b16 %v413
  %v445 = vunpack.c.l.b16 %v414
  %v446 = vunpack.c.h.b16 %v414
  %v447 = vunpack.c.l.b16 %v415
  %v448 = vpack.c.b16 %v433, %v428
  %v449 = vpack.c.b16 %v434, %v429
  %v450 = vpack.c.b16 %v435, %v430
  %v451 = vpack.c.b16 %v436, %v431
  %v452 = vpack.c.b16 %v437, %v432
  %v453 = vpack.c.b16 %v443, %v438
  %v454 = vpack.c.b16 %v444, %v439
  %v455 = vpack.c.b16 %v445, %v440
  %v456 = vpack.c.b16 %v446, %v441
  %v457 = vpack.c.b16 %v447, %v442
  %458 = vrot.lane.b32.xlu0 %v448, 2
  %v459 = vpop.permute.xlu0 %458
  %460 = vrot.lane.b32.xlu0 %v449, 2
  %v461 = vpop.permute.xlu0 %460
  %462 = vrot.lane.b32.xlu0 %v450, 2
  %v463 = vpop.permute.xlu0 %462
  %464 = vrot.lane.b32.xlu0 %v451, 2
  %v465 = vpop.permute.xlu0 %464
  %466 = vrot.lane.b32.xlu0 %v452, 2
  %v467 = vpop.permute.xlu0 %466
  %468 = vrot.lane.b32.xlu0 %v453, 2
  %v469 = vpop.permute.xlu0 %468
  %470 = vrot.lane.b32.xlu0 %v454, 2
  %v471 = vpop.permute.xlu0 %470
  %472 = vrot.lane.b32.xlu0 %v455, 2
  %v473 = vpop.permute.xlu0 %472
  %474 = vrot.lane.b32.xlu0 %v456, 2
  %v475 = vpop.permute.xlu0 %474
  %476 = vrot.lane.b32.xlu0 %v457, 2
  %v477 = vpop.permute.xlu0 %476
  %vm478 = vcmask 15360
  %v479 = vsel %vm478, %v459, %v461
  %v480 = vsel %vm478, %v461, %v463
  %v481 = vsel %vm478, %v463, %v465
  %v482 = vsel %vm478, %v465, %v467
  %v483 = vsel %vm478, %v469, %v471
  %v484 = vsel %vm478, %v471, %v473
  %v485 = vsel %vm478, %v473, %v475
  %v486 = vsel %vm478, %v475, %v477
  %vm493 = vcmask 15360
  %v496 = vsel %vm493, 0, %v459
  %v499 = vsel %vm493, 0, %v469
  %vm501 = vcmask 48128
  %v503 = vsel %vm501, %v482, 0
  %v506 = vsel %vm501, %v486, 0
  %512 = vrot.lane.b32.xlu0 %v496, 127
  %v513 = vpop.permute.xlu0 %512
  %514 = vrot.lane.b32.xlu0 %v479, 127
  %v515 = vpop.permute.xlu0 %514
  %516 = vrot.lane.b32.xlu0 %v480, 127
  %v517 = vpop.permute.xlu0 %516
  %518 = vrot.lane.b32.xlu0 %v481, 127
  %v519 = vpop.permute.xlu0 %518
  %520 = vrot.lane.b32.xlu0 %v503, 127
  %v521 = vpop.permute.xlu0 %520
  %522 = vrot.lane.b32.xlu0 %v499, 127
  %v523 = vpop.permute.xlu0 %522
  %524 = vrot.lane.b32.xlu0 %v483, 127
  %v525 = vpop.permute.xlu0 %524
  %526 = vrot.lane.b32.xlu0 %v484, 127
  %v527 = vpop.permute.xlu0 %526
  %528 = vrot.lane.b32.xlu0 %v485, 127
  %v529 = vpop.permute.xlu0 %528
  %530 = vrot.lane.b32.xlu0 %v506, 127
  %v531 = vpop.permute.xlu0 %530
  %vm532 = vcmask 1039360
  %v533 = vsel %vm532, %v513, %v515
  %v534 = vsel %vm532, %v515, %v517
  %v535 = vsel %vm532, %v517, %v519
  %v536 = vsel %vm532, %v519, %v521
  %v537 = vsel %vm532, %v523, %v525
  %v538 = vsel %vm532, %v525, %v527
  %v539 = vsel %vm532, %v527, %v529
  %v540 = vsel %vm532, %v529, %v531
  %551 = vrot.lane.b32.xlu0 %v496, 126
  %v552 = vpop.permute.xlu0 %551
  %553 = vrot.lane.b32.xlu0 %v479, 126
  %v554 = vpop.permute.xlu0 %553
  %555 = vrot.lane.b32.xlu0 %v480, 126
  %v556 = vpop.permute.xlu0 %555
  %557 = vrot.lane.b32.xlu0 %v481, 126
  %v558 = vpop.permute.xlu0 %557
  %559 = vrot.lane.b32.xlu0 %v503, 126
  %v560 = vpop.permute.xlu0 %559
  %561 = vrot.lane.b32.xlu0 %v499, 126
  %v562 = vpop.permute.xlu0 %561
  %563 = vrot.lane.b32.xlu0 %v483, 126
  %v564 = vpop.permute.xlu0 %563
  %565 = vrot.lane.b32.xlu0 %v484, 126
  %v566 = vpop.permute.xlu0 %565
  %567 = vrot.lane.b32.xlu0 %v485, 126
  %v568 = vpop.permute.xlu0 %567
  %569 = vrot.lane.b32.xlu0 %v506, 126
  %v570 = vpop.permute.xlu0 %569
  %vm571 = vcmask 1031168
  %v572 = vsel %vm571, %v552, %v554
  %v573 = vsel %vm571, %v554, %v556
  %v574 = vsel %vm571, %v556, %v558
  %v575 = vsel %vm571, %v558, %v560
  %v576 = vsel %vm571, %v562, %v564
  %v577 = vsel %vm571, %v564, %v566
  %v578 = vsel %vm571, %v566, %v568
  %v579 = vsel %vm571, %v568, %v570
  %590 = vrot.lane.b32.xlu0 %v496, 125
  %v591 = vpop.permute.xlu0 %590
  %592 = vrot.lane.b32.xlu0 %v479, 125
  %v593 = vpop.permute.xlu0 %592
  %594 = vrot.lane.b32.xlu0 %v480, 125
  %v595 = vpop.permute.xlu0 %594
  %596 = vrot.lane.b32.xlu0 %v481, 125
  %v597 = vpop.permute.xlu0 %596
  %598 = vrot.lane.b32.xlu0 %v503, 125
  %v599 = vpop.permute.xlu0 %598
  %600 = vrot.lane.b32.xlu0 %v499, 125
  %v601 = vpop.permute.xlu0 %600
  %602 = vrot.lane.b32.xlu0 %v483, 125
  %v603 = vpop.permute.xlu0 %602
  %604 = vrot.lane.b32.xlu0 %v484, 125
  %v605 = vpop.permute.xlu0 %604
  %606 = vrot.lane.b32.xlu0 %v485, 125
  %v607 = vpop.permute.xlu0 %606
  %608 = vrot.lane.b32.xlu0 %v506, 125
  %v609 = vpop.permute.xlu0 %608
  %vm610 = vcmask 1022976
  %v611 = vsel %vm610, %v591, %v593
  %v612 = vsel %vm610, %v593, %v595
  %v613 = vsel %vm610, %v595, %v597
  %v614 = vsel %vm610, %v597, %v599
  %v615 = vsel %vm610, %v601, %v603
  %v616 = vsel %vm610, %v603, %v605
  %v617 = vsel %vm610, %v605, %v607
  %v618 = vsel %vm610, %v607, %v609
  %629 = vrot.lane.b32.xlu0 %v496, 124
  %v630 = vpop.permute.xlu0 %629
  %631 = vrot.lane.b32.xlu0 %v479, 124
  %v632 = vpop.permute.xlu0 %631
  %633 = vrot.lane.b32.xlu0 %v480, 124
  %v634 = vpop.permute.xlu0 %633
  %635 = vrot.lane.b32.xlu0 %v481, 124
  %v636 = vpop.permute.xlu0 %635
  %637 = vrot.lane.b32.xlu0 %v503, 124
  %v638 = vpop.permute.xlu0 %637
  %639 = vrot.lane.b32.xlu0 %v499, 124
  %v640 = vpop.permute.xlu0 %639
  %641 = vrot.lane.b32.xlu0 %v483, 124
  %v642 = vpop.permute.xlu0 %641
  %643 = vrot.lane.b32.xlu0 %v484, 124
  %v644 = vpop.permute.xlu0 %643
  %645 = vrot.lane.b32.xlu0 %v485, 124
  %v646 = vpop.permute.xlu0 %645
  %647 = vrot.lane.b32.xlu0 %v506, 124
  %v648 = vpop.permute.xlu0 %647
  %vm649 = vcmask 1014784
  %v650 = vsel %vm649, %v630, %v632
  %v651 = vsel %vm649, %v632, %v634
  %v652 = vsel %vm649, %v634, %v636
  %v653 = vsel %vm649, %v636, %v638
  %v654 = vsel %vm649, %v640, %v642
  %v655 = vsel %vm649, %v642, %v644
  %v656 = vsel %vm649, %v644, %v646
  %v657 = vsel %vm649, %v646, %v648
  %v670 = vunpack.c.l.b16 %v402
  %v671 = vunpack.c.h.b16 %v402
  %v672 = vunpack.c.l.b16 %v403
  %v673 = vunpack.c.h.b16 %v403
  %v674 = vpack.c.b16 %v672, %v670
  %v675 = vpack.c.b16 %v673, %v671
  %vm677 = vcmask 261120
  %v679 = vsel %vm677, %v675, 0
  %681 = vmatpush.bf16.msra.mxu0 %v615
  %682 = vmatpush.bf16.msra.mxu0 %v611
  %683 = vmatpush.bf16.msra.mxu0 %v576
  %684 = vmatpush.bf16.msra.mxu0 %v572
  %685 = vmatpush.bf16.msra.mxu0 %v537
  %686 = vmatpush.bf16.msra.mxu0 %v533
  %687 = vmatpush.bf16.msra.mxu0 %v499
  %688 = vmatpush.bf16.msra.mxu0 %v496
  %689 = vmatmul.bf16.gmra.mxu0 %v674
  %v690 = vpop.f32.mrf.mxu0
  %v691 = vadd.f32 0.0, %v690
  %v692 = vpop.f32.mrf.mxu0
  %v693 = vadd.f32 0.0, %v692
  %694 = vdwg.mxu0
  %695 = vmatpush.bf16.msra.mxu0 0
  %696 = vmatpush.bf16.msra.mxu0 0
  %697 = vmatpush.bf16.msra.mxu0 0
  %698 = vmatpush.bf16.msra.mxu0 0
  %699 = vmatpush.bf16.msra.mxu0 0
  %700 = vmatpush.bf16.msra.mxu0 0
  %701 = vmatpush.bf16.msra.mxu0 %v654
  %702 = vmatpush.bf16.msra.mxu0 %v650
  %703 = vmatmul.bf16.gmra.mxu0 %v679
  %v704 = vpop.f32.mrf.mxu0
  %v705 = vadd.f32 %v691, %v704
  %v706 = vpop.f32.mrf.mxu0
  %v707 = vadd.f32 %v693, %v706
  %708 = vdwg.mxu0
  %709 = vmatpush.bf16.msra.mxu0 %v616
  %710 = vmatpush.bf16.msra.mxu0 %v612
  %711 = vmatpush.bf16.msra.mxu0 %v577
  %712 = vmatpush.bf16.msra.mxu0 %v573
  %713 = vmatpush.bf16.msra.mxu0 %v538
  %714 = vmatpush.bf16.msra.mxu0 %v534
  %715 = vmatpush.bf16.msra.mxu0 %v483
  %716 = vmatpush.bf16.msra.mxu0 %v479
  %717 = vmatmul.bf16.gmra.mxu0 %v674
  %v718 = vpop.f32.mrf.mxu0
  %v719 = vadd.f32 0.0, %v718
  %v720 = vpop.f32.mrf.mxu0
  %v721 = vadd.f32 0.0, %v720
  %722 = vdwg.mxu0
  %723 = vmatpush.bf16.msra.mxu0 0
  %724 = vmatpush.bf16.msra.mxu0 0
  %725 = vmatpush.bf16.msra.mxu0 0
  %726 = vmatpush.bf16.msra.mxu0 0
  %727 = vmatpush.bf16.msra.mxu0 0
  %728 = vmatpush.bf16.msra.mxu0 0
  %729 = vmatpush.bf16.msra.mxu0 %v655
  %730 = vmatpush.bf16.msra.mxu0 %v651
  %731 = vmatmul.bf16.gmra.mxu0 %v679
  %v732 = vpop.f32.mrf.mxu0
  %v733 = vadd.f32 %v719, %v732
  %v734 = vpop.f32.mrf.mxu0
  %v735 = vadd.f32 %v721, %v734
  %736 = vdwg.mxu0
  %737 = vmatpush.bf16.msra.mxu0 %v617
  %738 = vmatpush.bf16.msra.mxu0 %v613
  %739 = vmatpush.bf16.msra.mxu0 %v578
  %740 = vmatpush.bf16.msra.mxu0 %v574
  %741 = vmatpush.bf16.msra.mxu0 %v539
  %742 = vmatpush.bf16.msra.mxu0 %v535
  %743 = vmatpush.bf16.msra.mxu0 %v484
  %744 = vmatpush.bf16.msra.mxu0 %v480
  %745 = vmatmul.bf16.gmra.mxu0 %v674
  %v746 = vpop.f32.mrf.mxu0
  %v747 = vadd.f32 0.0, %v746
  %v748 = vpop.f32.mrf.mxu0
  %v749 = vadd.f32 0.0, %v748
  %750 = vdwg.mxu0
  %751 = vmatpush.bf16.msra.mxu0 0
  %752 = vmatpush.bf16.msra.mxu0 0
  %753 = vmatpush.bf16.msra.mxu0 0
  %754 = vmatpush.bf16.msra.mxu0 0
  %755 = vmatpush.bf16.msra.mxu0 0
  %756 = vmatpush.bf16.msra.mxu0 0
  %757 = vmatpush.bf16.msra.mxu0 %v656
  %758 = vmatpush.bf16.msra.mxu0 %v652
  %759 = vmatmul.bf16.gmra.mxu0 %v679
  %v760 = vpop.f32.mrf.mxu0
  %v761 = vadd.f32 %v747, %v760
  %v762 = vpop.f32.mrf.mxu0
  %v763 = vadd.f32 %v749, %v762
  %764 = vdwg.mxu0
  %765 = vmatpush.bf16.msra.mxu0 %v618
  %766 = vmatpush.bf16.msra.mxu0 %v614
  %767 = vmatpush.bf16.msra.mxu0 %v579
  %768 = vmatpush.bf16.msra.mxu0 %v575
  %769 = vmatpush.bf16.msra.mxu0 %v540
  %770 = vmatpush.bf16.msra.mxu0 %v536
  %771 = vmatpush.bf16.msra.mxu0 %v485
  %772 = vmatpush.bf16.msra.mxu0 %v481
  %773 = vmatmul.bf16.gmra.mxu0 %v674
  %v774 = vpop.f32.mrf.mxu0
  %v775 = vadd.f32 0.0, %v774
  %v776 = vpop.f32.mrf.mxu0
  %v777 = vadd.f32 0.0, %v776
  %778 = vdwg.mxu0
  %779 = vmatpush.bf16.msra.mxu0 0
  %780 = vmatpush.bf16.msra.mxu0 0
  %781 = vmatpush.bf16.msra.mxu0 0
  %782 = vmatpush.bf16.msra.mxu0 0
  %783 = vmatpush.bf16.msra.mxu0 0
  %784 = vmatpush.bf16.msra.mxu0 0
  %785 = vmatpush.bf16.msra.mxu0 %v657
  %786 = vmatpush.bf16.msra.mxu0 %v653
  %787 = vmatmul.bf16.gmra.mxu0 %v679
  %v788 = vpop.f32.mrf.mxu0
  %v789 = vadd.f32 %v775, %v788
  %v790 = vpop.f32.mrf.mxu0
  %v791 = vadd.f32 %v777, %v790
  %792 = vdwg.mxu0
  %793 = vmatpush.bf16.msra.mxu0 %v609
  %794 = vmatpush.bf16.msra.mxu0 %v599
  %795 = vmatpush.bf16.msra.mxu0 %v570
  %796 = vmatpush.bf16.msra.mxu0 %v560
  %797 = vmatpush.bf16.msra.mxu0 %v531
  %798 = vmatpush.bf16.msra.mxu0 %v521
  %799 = vmatpush.bf16.msra.mxu0 %v506
  %800 = vmatpush.bf16.msra.mxu0 %v503
  %801 = vmatmul.bf16.gmra.mxu0 %v674
  %v802 = vpop.f32.mrf.mxu0
  %v803 = vadd.f32 0.0, %v802
  %v804 = vpop.f32.mrf.mxu0
  %v805 = vadd.f32 0.0, %v804
  %806 = vdwg.mxu0
  %807 = vmatpush.bf16.msra.mxu0 0
  %808 = vmatpush.bf16.msra.mxu0 0
  %809 = vmatpush.bf16.msra.mxu0 0
  %810 = vmatpush.bf16.msra.mxu0 0
  %811 = vmatpush.bf16.msra.mxu0 0
  %812 = vmatpush.bf16.msra.mxu0 0
  %813 = vmatpush.bf16.msra.mxu0 %v648
  %814 = vmatpush.bf16.msra.mxu0 %v638
  %815 = vmatmul.bf16.gmra.mxu0 %v679
  %v816 = vpop.f32.mrf.mxu0
  %v817 = vadd.f32 %v803, %v816
  %v818 = vpop.f32.mrf.mxu0
  %v819 = vadd.f32 %v805, %v818
  %820 = vdwg.mxu0
  %v821 = vld [vmem:[%s6] sm:$0xff]
  %v822 = vld [vmem:[%s6 + $0x8] sm:$0xff]
  %v823 = vld [vmem:[%s7] sm:$0xff]
  %v824 = vld [vmem:[%s7 + $0x8] sm:$0xff]
  %v825 = vmul.f32 %v705, %v103
  %v826 = vmul.f32 %v733, %v104
  %v827 = vmul.f32 %v761, %v105
  %v828 = vmul.f32 %v789, %v106
  %v829 = vmul.f32 %v817, %v107
  %v830 = vmul.f32 %v707, %v103
  %v831 = vmul.f32 %v735, %v104
  %v832 = vmul.f32 %v763, %v105
  %v833 = vmul.f32 %v791, %v106
  %v834 = vmul.f32 %v819, %v107
  %v835 = vadd.f32 %v825, %v826
  %v836 = vadd.f32 %v835, %v827
  %v837 = vadd.f32 %v836, %v828
  %v838 = vsel %vm136, %v829, 0.0
  %v839 = vadd.f32 %v837, %v838
  %840 = vadd.xlane.f32.xlu0 %v839
  %v841 = vpop.xlane.xlu0 %840
  %v842 = vadd.f32 %v830, %v831
  %v843 = vadd.f32 %v842, %v832
  %v844 = vadd.f32 %v843, %v833
  %v845 = vsel %vm136, %v834, 0.0
  %v846 = vadd.f32 %v844, %v845
  %847 = vadd.xlane.f32.xlu0 %v846
  %v848 = vpop.xlane.xlu0 %847
  %v849 = vmul.f32 %v841, 0.001953125
  %v850 = vmul.f32 %v848, 0.001953125
  %v851 = vmul.f32 %v705, %v825
  %v852 = vmul.f32 %v733, %v826
  %v853 = vmul.f32 %v761, %v827
  %v854 = vmul.f32 %v789, %v828
  %v855 = vmul.f32 %v817, %v829
  %v856 = vmul.f32 %v707, %v830
  %v857 = vmul.f32 %v735, %v831
  %v858 = vmul.f32 %v763, %v832
  %v859 = vmul.f32 %v791, %v833
  %v860 = vmul.f32 %v819, %v834
  %v861 = vadd.f32 %v851, %v852
  %v862 = vadd.f32 %v861, %v853
  %v863 = vadd.f32 %v862, %v854
  %v864 = vsel %vm136, %v855, 0.0
  %v865 = vadd.f32 %v863, %v864
  %866 = vadd.xlane.f32.xlu0 %v865
  %v867 = vpop.xlane.xlu0 %866
  %v868 = vadd.f32 %v856, %v857
  %v869 = vadd.f32 %v868, %v858
  %v870 = vadd.f32 %v869, %v859
  %v871 = vsel %vm136, %v860, 0.0
  %v872 = vadd.f32 %v870, %v871
  %873 = vadd.xlane.f32.xlu0 %v872
  %v874 = vpop.xlane.xlu0 %873
  %v875 = vmul.f32 %v867, 0.001953125
  %v876 = vmul.f32 %v874, 0.001953125
  %v877 = vmul.f32 %v849, %v849
  %v878 = vmul.f32 %v850, %v850
  %v879 = vsub.f32 %v875, %v877
  %v880 = vsub.f32 %v876, %v878
  %v881 = vadd.f32 %v879, 1e-05
  %v882 = vadd.f32 %v880, 1e-05
  %v883 = vrsqrt.pop %v881
  %v884 = vmul.f32 %v883, %v881
  %v885 = vmul.f32 %v884, %v883
  %v886 = vmul.f32 0.5, %v885
  %v887 = vsub.f32 1.5, %v886
  %v888 = vmul.f32 %v883, %v887
  %vm889 = vweird.f32 %v881
  %vm890 = vweird.f32 %v883
  %vm891 = vmor %vm889, %vm890
  %v892 = vsel %vm891, %v883, %v888
  %v893 = vrsqrt.pop %v882
  %v894 = vmul.f32 %v893, %v882
  %v895 = vmul.f32 %v894, %v893
  %v896 = vmul.f32 0.5, %v895
  %v897 = vsub.f32 1.5, %v896
  %v898 = vmul.f32 %v893, %v897
  %vm899 = vweird.f32 %v882
  %vm900 = vweird.f32 %v893
  %vm901 = vmor %vm899, %vm900
  %v902 = vsel %vm901, %v893, %v898
  %v903 = vmul.f32 %v821, %v892
  %v904 = vmul.f32 %v822, %v902
  %v905 = vmul.f32 %v849, %v903
  %v906 = vmul.f32 %v850, %v904
  %v907 = vsub.f32 %v823, %v905
  %v908 = vsub.f32 %v824, %v906
  %910 = vset.pattern.permute.xlu0 0
  %911 = vperm.xlu0 %910, %v903
  %v912 = vpop.permute.xlu0 %911
  %915 = vset.pattern.permute.xlu0 0
  %916 = vperm.xlu0 %915, %v904
  %v917 = vpop.permute.xlu0 %916
  %v919 = vmul.f32 %v705, %v912
  %v920 = vmul.f32 %v733, %v912
  %v921 = vmul.f32 %v761, %v912
  %v922 = vmul.f32 %v789, %v912
  %v923 = vmul.f32 %v817, %v912
  %v924 = vmul.f32 %v707, %v917
  %v925 = vmul.f32 %v735, %v917
  %v926 = vmul.f32 %v763, %v917
  %v927 = vmul.f32 %v791, %v917
  %v928 = vmul.f32 %v819, %v917
  %930 = vset.pattern.permute.xlu0 0
  %931 = vperm.xlu0 %930, %v907
  %v932 = vpop.permute.xlu0 %931
  %935 = vset.pattern.permute.xlu0 0
  %936 = vperm.xlu0 %935, %v908
  %v937 = vpop.permute.xlu0 %936
  %v939 = vadd.f32 %v919, %v932
  %v940 = vadd.f32 %v920, %v932
  %v941 = vadd.f32 %v921, %v932
  %v942 = vadd.f32 %v922, %v932
  %v943 = vadd.f32 %v923, %v932
  %v944 = vadd.f32 %v924, %v937
  %v945 = vadd.f32 %v925, %v937
  %v946 = vadd.f32 %v926, %v937
  %v947 = vadd.f32 %v927, %v937
  %v948 = vadd.f32 %v928, %v937
  %v949 = vmax.f32 %v939, 0.0
  %v950 = vmax.f32 %v940, 0.0
  %v951 = vmax.f32 %v941, 0.0
  %v952 = vmax.f32 %v942, 0.0
  %v953 = vmax.f32 %v943, 0.0
  %v954 = vmax.f32 %v944, 0.0
  %v955 = vmax.f32 %v945, 0.0
  %v956 = vmax.f32 %v946, 0.0
  %v957 = vmax.f32 %v947, 0.0
  %v958 = vmax.f32 %v948, 0.0
  %v959 = vmul.f32 %v949, %v103
  %v960 = vmul.f32 %v950, %v104
  %v961 = vmul.f32 %v951, %v105
  %v962 = vmul.f32 %v952, %v106
  %v963 = vmul.f32 %v953, %v107
  %v964 = vmul.f32 %v954, %v103
  %v965 = vmul.f32 %v955, %v104
  %v966 = vmul.f32 %v956, %v105
  %v967 = vmul.f32 %v957, %v106
  %v968 = vmul.f32 %v958, %v107
  %v969 = vld [vmem:[%s8] sm:$0xf]
  %v970 = vld [vmem:[%s8 + $0x4] sm:$0xf]
  %v971 = vld [vmem:[%s8 + $0x8] sm:$0xf]
  %v972 = vld [vmem:[%s8 + $0xc] sm:$0xf]
  %v973 = vpack.c.bf16 %v960, %v959
  %v974 = vpack.c.bf16 %v962, %v961
  %v975 = vpack.c.bf16 %v963, %v963
  %v976 = vpack.c.bf16 %v965, %v964
  %v977 = vpack.c.bf16 %v967, %v966
  %v978 = vpack.c.bf16 %v968, %v968
  %v985 = vunpack.c.l.b16 %v973
  %v986 = vunpack.c.h.b16 %v973
  %v987 = vunpack.c.l.b16 %v974
  %v988 = vunpack.c.h.b16 %v974
  %v989 = vunpack.c.l.b16 %v975
  %v990 = vunpack.c.l.b16 %v976
  %v991 = vunpack.c.h.b16 %v976
  %v992 = vunpack.c.l.b16 %v977
  %v993 = vunpack.c.h.b16 %v977
  %v994 = vunpack.c.l.b16 %v978
  %v995 = vpack.c.b16 %v990, %v985
  %v996 = vpack.c.b16 %v991, %v986
  %v997 = vpack.c.b16 %v992, %v987
  %v998 = vpack.c.b16 %v993, %v988
  %v999 = vpack.c.b16 %v994, %v989
  %1000 = vrot.lane.b32.xlu0 %v995, 1
  %v1001 = vpop.permute.xlu0 %1000
  %1002 = vrot.lane.b32.xlu0 %v996, 1
  %v1003 = vpop.permute.xlu0 %1002
  %1004 = vrot.lane.b32.xlu0 %v997, 1
  %v1005 = vpop.permute.xlu0 %1004
  %1006 = vrot.lane.b32.xlu0 %v998, 1
  %v1007 = vpop.permute.xlu0 %1006
  %1008 = vrot.lane.b32.xlu0 %v999, 1
  %v1009 = vpop.permute.xlu0 %1008
  %vm1010 = vcmask 7168
  %v1011 = vsel %vm1010, %v1001, %v1003
  %v1012 = vsel %vm1010, %v1003, %v1005
  %v1013 = vsel %vm1010, %v1005, %v1007
  %v1014 = vsel %vm1010, %v1007, %v1009
  %vm1018 = vcmask 7168
  %v1020 = vsel %vm1018, 0, %v1001
  %vm1022 = vcmask 39936
  %v1024 = vsel %vm1022, %v1014, 0
  %1028 = vrot.lane.b32.xlu0 %v1020, 127
  %v1029 = vpop.permute.xlu0 %1028
  %1030 = vrot.lane.b32.xlu0 %v1011, 127
  %v1031 = vpop.permute.xlu0 %1030
  %1032 = vrot.lane.b32.xlu0 %v1012, 127
  %v1033 = vpop.permute.xlu0 %1032
  %1034 = vrot.lane.b32.xlu0 %v1013, 127
  %v1035 = vpop.permute.xlu0 %1034
  %1036 = vrot.lane.b32.xlu0 %v1024, 127
  %v1037 = vpop.permute.xlu0 %1036
  %v1038 = vsel %vm532, %v1029, %v1031
  %v1039 = vsel %vm532, %v1031, %v1033
  %v1040 = vsel %vm532, %v1033, %v1035
  %v1041 = vsel %vm532, %v1035, %v1037
  %1047 = vrot.lane.b32.xlu0 %v1020, 126
  %v1048 = vpop.permute.xlu0 %1047
  %1049 = vrot.lane.b32.xlu0 %v1011, 126
  %v1050 = vpop.permute.xlu0 %1049
  %1051 = vrot.lane.b32.xlu0 %v1012, 126
  %v1052 = vpop.permute.xlu0 %1051
  %1053 = vrot.lane.b32.xlu0 %v1013, 126
  %v1054 = vpop.permute.xlu0 %1053
  %1055 = vrot.lane.b32.xlu0 %v1024, 126
  %v1056 = vpop.permute.xlu0 %1055
  %v1057 = vsel %vm571, %v1048, %v1050
  %v1058 = vsel %vm571, %v1050, %v1052
  %v1059 = vsel %vm571, %v1052, %v1054
  %v1060 = vsel %vm571, %v1054, %v1056
  %1066 = vrot.lane.b32.xlu0 %v1020, 125
  %v1067 = vpop.permute.xlu0 %1066
  %1068 = vrot.lane.b32.xlu0 %v1011, 125
  %v1069 = vpop.permute.xlu0 %1068
  %1070 = vrot.lane.b32.xlu0 %v1012, 125
  %v1071 = vpop.permute.xlu0 %1070
  %1072 = vrot.lane.b32.xlu0 %v1013, 125
  %v1073 = vpop.permute.xlu0 %1072
  %1074 = vrot.lane.b32.xlu0 %v1024, 125
  %v1075 = vpop.permute.xlu0 %1074
  %v1076 = vsel %vm610, %v1067, %v1069
  %v1077 = vsel %vm610, %v1069, %v1071
  %v1078 = vsel %vm610, %v1071, %v1073
  %v1079 = vsel %vm610, %v1073, %v1075
  %v1089 = vunpack.c.l.b16 %v969
  %v1090 = vunpack.c.l.b16 %v970
  %v1091 = vunpack.c.l.b16 %v971
  %v1092 = vunpack.c.l.b16 %v972
  %v1093 = vpack.c.b16 %v1090, %v1089
  %v1094 = vpack.c.b16 %v1092, %v1091
  %vm1095 = vcmask 523264
  %v1097 = vsel %vm1095, %v1093, 0
  %v1100 = vsel %vm1095, %v1094, 0
  %1102 = vmatpush.bf16.msra.mxu0 0
  %1103 = vmatpush.bf16.msra.mxu0 0
  %1104 = vmatpush.bf16.msra.mxu0 0
  %1105 = vmatpush.bf16.msra.mxu0 0
  %1106 = vmatpush.bf16.msra.mxu0 %v1076
  %1107 = vmatpush.bf16.msra.mxu0 %v1057
  %1108 = vmatpush.bf16.msra.mxu0 %v1038
  %1109 = vmatpush.bf16.msra.mxu0 %v1020
  %1110 = vmatmul.bf16.gmra.mxu0 %v1097
  %v1111 = vpop.f32.mrf.mxu0
  %v1112 = vadd.f32 0.0, %v1111
  %v1113 = vpop.f32.mrf.mxu0
  %v1114 = vadd.f32 0.0, %v1113
  %1115 = vmatmul.bf16.gmra.mxu0 %v1100
  %v1116 = vpop.f32.mrf.mxu0
  %v1117 = vadd.f32 0.0, %v1116
  %v1118 = vpop.f32.mrf.mxu0
  %v1119 = vadd.f32 0.0, %v1118
  %1120 = vdwg.mxu0
  %1121 = vmatpush.bf16.msra.mxu0 0
  %1122 = vmatpush.bf16.msra.mxu0 0
  %1123 = vmatpush.bf16.msra.mxu0 0
  %1124 = vmatpush.bf16.msra.mxu0 0
  %1125 = vmatpush.bf16.msra.mxu0 %v1077
  %1126 = vmatpush.bf16.msra.mxu0 %v1058
  %1127 = vmatpush.bf16.msra.mxu0 %v1039
  %1128 = vmatpush.bf16.msra.mxu0 %v1011
  %1129 = vmatmul.bf16.gmra.mxu0 %v1097
  %v1130 = vpop.f32.mrf.mxu0
  %v1131 = vadd.f32 0.0, %v1130
  %v1132 = vpop.f32.mrf.mxu0
  %v1133 = vadd.f32 0.0, %v1132
  %1134 = vmatmul.bf16.gmra.mxu0 %v1100
  %v1135 = vpop.f32.mrf.mxu0
  %v1136 = vadd.f32 0.0, %v1135
  %v1137 = vpop.f32.mrf.mxu0
  %v1138 = vadd.f32 0.0, %v1137
  %1139 = vdwg.mxu0
  %1140 = vmatpush.bf16.msra.mxu0 0
  %1141 = vmatpush.bf16.msra.mxu0 0
  %1142 = vmatpush.bf16.msra.mxu0 0
  %1143 = vmatpush.bf16.msra.mxu0 0
  %1144 = vmatpush.bf16.msra.mxu0 %v1078
  %1145 = vmatpush.bf16.msra.mxu0 %v1059
  %1146 = vmatpush.bf16.msra.mxu0 %v1040
  %1147 = vmatpush.bf16.msra.mxu0 %v1012
  %1148 = vmatmul.bf16.gmra.mxu0 %v1097
  %v1149 = vpop.f32.mrf.mxu0
  %v1150 = vadd.f32 0.0, %v1149
  %v1151 = vpop.f32.mrf.mxu0
  %v1152 = vadd.f32 0.0, %v1151
  %1153 = vmatmul.bf16.gmra.mxu0 %v1100
  %v1154 = vpop.f32.mrf.mxu0
  %v1155 = vadd.f32 0.0, %v1154
  %v1156 = vpop.f32.mrf.mxu0
  %v1157 = vadd.f32 0.0, %v1156
  %1158 = vdwg.mxu0
  %1159 = vmatpush.bf16.msra.mxu0 0
  %1160 = vmatpush.bf16.msra.mxu0 0
  %1161 = vmatpush.bf16.msra.mxu0 0
  %1162 = vmatpush.bf16.msra.mxu0 0
  %1163 = vmatpush.bf16.msra.mxu0 %v1079
  %1164 = vmatpush.bf16.msra.mxu0 %v1060
  %1165 = vmatpush.bf16.msra.mxu0 %v1041
  %1166 = vmatpush.bf16.msra.mxu0 %v1013
  %1167 = vmatmul.bf16.gmra.mxu0 %v1097
  %v1168 = vpop.f32.mrf.mxu0
  %v1169 = vadd.f32 0.0, %v1168
  %v1170 = vpop.f32.mrf.mxu0
  %v1171 = vadd.f32 0.0, %v1170
  %1172 = vmatmul.bf16.gmra.mxu0 %v1100
  %v1173 = vpop.f32.mrf.mxu0
  %v1174 = vadd.f32 0.0, %v1173
  %v1175 = vpop.f32.mrf.mxu0
  %v1176 = vadd.f32 0.0, %v1175
  %1177 = vdwg.mxu0
  %1178 = vmatpush.bf16.msra.mxu0 0
  %1179 = vmatpush.bf16.msra.mxu0 0
  %1180 = vmatpush.bf16.msra.mxu0 0
  %1181 = vmatpush.bf16.msra.mxu0 0
  %1182 = vmatpush.bf16.msra.mxu0 %v1075
  %1183 = vmatpush.bf16.msra.mxu0 %v1056
  %1184 = vmatpush.bf16.msra.mxu0 %v1037
  %1185 = vmatpush.bf16.msra.mxu0 %v1024
  %1186 = vmatmul.bf16.gmra.mxu0 %v1097
  %v1187 = vpop.f32.mrf.mxu0
  %v1188 = vadd.f32 0.0, %v1187
  %v1189 = vpop.f32.mrf.mxu0
  %v1190 = vadd.f32 0.0, %v1189
  %1191 = vmatmul.bf16.gmra.mxu0 %v1100
  %v1192 = vpop.f32.mrf.mxu0
  %v1193 = vadd.f32 0.0, %v1192
  %v1194 = vpop.f32.mrf.mxu0
  %v1195 = vadd.f32 0.0, %v1194
  %1196 = vdwg.mxu0
  %1197 = vst [vmem:[%s9] sm:$0xff] %v1112
  %1198 = vst [vmem:[%s9 + $0x8] sm:$0xff] %v1131
  %1199 = vst [vmem:[%s9 + $0x10] sm:$0xff] %v1150
  %1200 = vst [vmem:[%s9 + $0x18] sm:$0xff] %v1169
  %1201 = vst.msk [vmem:[%s9 + $0x20] sm:$0xff] %vm136, %v1188
  %1202 = vst [vmem:[%s9 + $0x28] sm:$0xff] %v1114
  %1203 = vst [vmem:[%s9 + $0x30] sm:$0xff] %v1133
  %1204 = vst [vmem:[%s9 + $0x38] sm:$0xff] %v1152
  %1205 = vst [vmem:[%s9 + $0x40] sm:$0xff] %v1171
  %1206 = vst.msk [vmem:[%s9 + $0x48] sm:$0xff] %vm136, %v1190
  %1207 = vst [vmem:[%s9 + $0x50] sm:$0xff] %v1117
  %1208 = vst [vmem:[%s9 + $0x58] sm:$0xff] %v1136
  %1209 = vst [vmem:[%s9 + $0x60] sm:$0xff] %v1155
  %1210 = vst [vmem:[%s9 + $0x68] sm:$0xff] %v1174
  %1211 = vst.msk [vmem:[%s9 + $0x70] sm:$0xff] %vm136, %v1193
  %1212 = vst [vmem:[%s9 + $0x78] sm:$0xff] %v1119
  %1213 = vst [vmem:[%s9 + $0x80] sm:$0xff] %v1138
  %1214 = vst [vmem:[%s9 + $0x88] sm:$0xff] %v1157
  %1215 = vst [vmem:[%s9 + $0x90] sm:$0xff] %v1176
  %1216 = vst.msk [vmem:[%s9 + $0x98] sm:$0xff] %vm136, %v1195
  // Predicated region
  $region38: #{seismogram_decoder_forward.5} parent=0 // pred_check
    _
  $region39: #{seismogram_decoder_forward.5} parent=0 // pred_check_branch
    %1218 = sbr.rel (0) target = $region41
  $region40: #{seismogram_decoder_forward.5} parent=0 // pred_region
    _
  $region41: #{seismogram_decoder_forward.5} parent=0 // pred_fallthru
    _
  // Predicated region
  $region42: #{seismogram_decoder_forward.5} parent=0 // pred_check
    _
  $region43: #{seismogram_decoder_forward.5} parent=0 // pred_check_branch
    %1220 = sbr.rel (0) target = $region45
  $region44: #{seismogram_decoder_forward.5} parent=0 // pred_region
    _
  $region45: #{seismogram_decoder_forward.5} parent=0 // pred_fallthru
    _

// kernel: seismogram_decoder_forward.6
$region0: #{seismogram_decoder_forward.6}
  #allocation0 [shape = 'u32[]', space=smem, size = 0x4, offset = 0x4, fixed_abs, tag = 'smem constant byte address 0x4 - core index']
  #allocation1 [shape = 'u32[72,128]{1,0:T(1,128)}', space=vmem, size = 0x9000, scoped, tag = 'internal scratch']
  %s0 = inlined_call_operand.vmem [shape: f32[16,1032], index: 0, kind: input, shape index: {}]
  %s1 = inlined_call_operand.vmem [shape: f32[16,1032], index: 1, kind: input, shape index: {}]
  %s2 = inlined_call_operand.vmem [shape: f32[1,1032], index: 2, kind: input, shape index: {}]
  %s3 = inlined_call_operand.vmem [shape: f32[16,1], index: 3, kind: input, shape index: {}]
  %s4 = inlined_call_operand.vmem [shape: f32[16,1], index: 4, kind: input, shape index: {}]
  %s5 = inlined_call_operand.vmem [shape: bf16[8,112], index: 5, kind: input, shape index: {}]
  %s6 = inlined_call_operand.vmem [shape: f32[8,1], index: 6, kind: input, shape index: {}]
  %s7 = inlined_call_operand.vmem [shape: f32[8,1], index: 7, kind: input, shape index: {}]
  %s8 = inlined_call_operand.vmem [shape: bf16[16,40], index: 8, kind: input, shape index: {}]
  %s9 = inlined_call_operand.vmem [shape: f32[16,1032], index: 9, kind: output, shape index: {}]
  %s10 = sld [smem:[#allocation0]]
  $region46: #{seismogram_decoder_forward.6} parent=0
    _
  %s12 = ssub.s32 1, %s10
  %s13 = scalar_select 0, %s12, %s10
  // Predicated region
  $region2: #{seismogram_decoder_forward.6} parent=0 // pred_check
    _
  $region3: #{seismogram_decoder_forward.6} parent=0 // pred_check_branch
    %15 = sbr.rel (0) target = $region5
  $region4: #{seismogram_decoder_forward.6} parent=0 // pred_region
    _
  $region5: #{seismogram_decoder_forward.6} parent=0 // pred_fallthru
    _
  // Predicated region
  $region6: #{seismogram_decoder_forward.6} parent=0 // pred_check
    _
  $region7: #{seismogram_decoder_forward.6} parent=0 // pred_check_branch
    %17 = sbr.rel (0) target = $region9
  $region8: #{seismogram_decoder_forward.6} parent=0 // pred_region
    _
  $region9: #{seismogram_decoder_forward.6} parent=0 // pred_fallthru
    _
  // Predicated region
  $region10: #{seismogram_decoder_forward.6} parent=0 // pred_check
    _
  $region11: #{seismogram_decoder_forward.6} parent=0 // pred_check_branch
    %19 = sbr.rel (0) target = $region13
  $region12: #{seismogram_decoder_forward.6} parent=0 // pred_region
    _
  $region13: #{seismogram_decoder_forward.6} parent=0 // pred_fallthru
    _
  // Predicated region
  $region14: #{seismogram_decoder_forward.6} parent=0 // pred_check
    _
  $region15: #{seismogram_decoder_forward.6} parent=0 // pred_check_branch
    %21 = sbr.rel (0) target = $region17
  $region16: #{seismogram_decoder_forward.6} parent=0 // pred_region
    _
  $region17: #{seismogram_decoder_forward.6} parent=0 // pred_fallthru
    _
  // Predicated region
  $region18: #{seismogram_decoder_forward.6} parent=0 // pred_check
    _
  $region19: #{seismogram_decoder_forward.6} parent=0 // pred_check_branch
    %23 = sbr.rel (0) target = $region21
  $region20: #{seismogram_decoder_forward.6} parent=0 // pred_region
    _
  $region21: #{seismogram_decoder_forward.6} parent=0 // pred_fallthru
    _
  // Predicated region
  $region22: #{seismogram_decoder_forward.6} parent=0 // pred_check
    _
  $region23: #{seismogram_decoder_forward.6} parent=0 // pred_check_branch
    %25 = sbr.rel (0) target = $region25
  $region24: #{seismogram_decoder_forward.6} parent=0 // pred_region
    _
  $region25: #{seismogram_decoder_forward.6} parent=0 // pred_fallthru
    _
  // Predicated region
  $region26: #{seismogram_decoder_forward.6} parent=0 // pred_check
    _
  $region27: #{seismogram_decoder_forward.6} parent=0 // pred_check_branch
    %27 = sbr.rel (0) target = $region29
  $region28: #{seismogram_decoder_forward.6} parent=0 // pred_region
    _
  $region29: #{seismogram_decoder_forward.6} parent=0 // pred_fallthru
    _
  // Predicated region
  $region30: #{seismogram_decoder_forward.6} parent=0 // pred_check
    _
  $region31: #{seismogram_decoder_forward.6} parent=0 // pred_check_branch
    %29 = sbr.rel (0) target = $region33
  $region32: #{seismogram_decoder_forward.6} parent=0 // pred_region
    _
  $region33: #{seismogram_decoder_forward.6} parent=0 // pred_fallthru
    _
  // Predicated region
  $region34: #{seismogram_decoder_forward.6} parent=0 // pred_check
    _
  $region35: #{seismogram_decoder_forward.6} parent=0 // pred_check_branch
    %31 = sbr.rel (0) target = $region37
  $region36: #{seismogram_decoder_forward.6} parent=0 // pred_region
    _
  $region37: #{seismogram_decoder_forward.6} parent=0 // pred_fallthru
    _
  %v33 = vld [vmem:[%s2] sm:$0xff]
  %v34 = vld [vmem:[%s2 + $0x8] sm:$0x1]
  %v35 = vld [vmem:[%s0] sm:$0xff]
  %v36 = vld [vmem:[%s0 + $0x8] sm:$0xff]
  %v37 = vld [vmem:[%s0 + $0x10] sm:$0xff]
  %v38 = vld [vmem:[%s0 + $0x18] sm:$0xff]
  %v39 = vld [vmem:[%s0 + $0x20] sm:$0xff]
  %v40 = vld [vmem:[%s0 + $0x28] sm:$0xff]
  %v41 = vld [vmem:[%s0 + $0x30] sm:$0xff]
  %v42 = vld [vmem:[%s0 + $0x38] sm:$0xff]
  %v43 = vld [vmem:[%s0 + $0x40] sm:$0xff]
  %v44 = vld [vmem:[%s0 + $0x48] sm:$0xff]
  %v45 = vld [vmem:[%s0 + $0x50] sm:$0xff]
  %v46 = vld [vmem:[%s0 + $0x58] sm:$0xff]
  %v47 = vld [vmem:[%s0 + $0x60] sm:$0xff]
  %v48 = vld [vmem:[%s0 + $0x68] sm:$0xff]
  %v49 = vld [vmem:[%s0 + $0x70] sm:$0xff]
  %v50 = vld [vmem:[%s0 + $0x78] sm:$0xff]
  %v51 = vld [vmem:[%s0 + $0x80] sm:$0xff]
  %v52 = vld [vmem:[%s0 + $0x88] sm:$0xff]
  %v53 = vld [vmem:[%s1] sm:$0xff]
  %v54 = vld [vmem:[%s1 + $0x8] sm:$0xff]
  %v55 = vld [vmem:[%s1 + $0x10] sm:$0xff]
  %v56 = vld [vmem:[%s1 + $0x18] sm:$0xff]
  %v57 = vld [vmem:[%s1 + $0x20] sm:$0xff]
  %v58 = vld [vmem:[%s1 + $0x28] sm:$0xff]
  %v59 = vld [vmem:[%s1 + $0x30] sm:$0xff]
  %v60 = vld [vmem:[%s1 + $0x38] sm:$0xff]
  %v61 = vld [vmem:[%s1 + $0x40] sm:$0xff]
  %v62 = vld [vmem:[%s1 + $0x48] sm:$0xff]
  %v63 = vld [vmem:[%s1 + $0x50] sm:$0xff]
  %v64 = vld [vmem:[%s1 + $0x58] sm:$0xff]
  %v65 = vld [vmem:[%s1 + $0x60] sm:$0xff]
  %v66 = vld [vmem:[%s1 + $0x68] sm:$0xff]
  %v67 = vld [vmem:[%s1 + $0x70] sm:$0xff]
  %v68 = vld [vmem:[%s1 + $0x78] sm:$0xff]
  %v69 = vld [vmem:[%s1 + $0x80] sm:$0xff]
  %v70 = vld [vmem:[%s1 + $0x88] sm:$0xff]
  %v71 = vadd.f32 %v35, %v53
  %v72 = vadd.f32 %v36, %v54
  %v73 = vadd.f32 %v37, %v55
  %v74 = vadd.f32 %v38, %v56
  %v75 = vadd.f32 %v39, %v57
  %v76 = vadd.f32 %v40, %v58
  %v77 = vadd.f32 %v41, %v59
  %v78 = vadd.f32 %v42, %v60
  %v79 = vadd.f32 %v43, %v61
  %v80 = vadd.f32 %v44, %v62
  %v81 = vadd.f32 %v45, %v63
  %v82 = vadd.f32 %v46, %v64
  %v83 = vadd.f32 %v47, %v65
  %v84 = vadd.f32 %v48, %v66
  %v85 = vadd.f32 %v49, %v67
  %v86 = vadd.f32 %v50, %v68
  %v87 = vadd.f32 %v51, %v69
  %v88 = vadd.f32 %v52, %v70
  %v89 = vld [vmem:[%s3] sm:$0xff]
  %v90 = vld [vmem:[%s3 + $0x8] sm:$0xff]
  %v91 = vld [vmem:[%s4] sm:$0xff]
  %v92 = vld [vmem:[%s4 + $0x8] sm:$0xff]
  %v95 = vperm.slane %v33, 0
  %v96 = vperm.slane %v33, 1
  %v97 = vperm.slane %v33, 2
  %v98 = vperm.slane %v33, 3
  %v99 = vperm.slane %v33, 4
  %v100 = vperm.slane %v33, 5
  %v101 = vperm.slane %v33, 6
  %v102 = vperm.slane %v33, 7
  %v103 = vperm.slane %v34, 0
  %v113 = vmul.f32 %v71, %v95
  %v114 = vmul.f32 %v72, %v96
  %v115 = vmul.f32 %v73, %v97
  %v116 = vmul.f32 %v74, %v98
  %v117 = vmul.f32 %v75, %v99
  %v118 = vmul.f32 %v76, %v100
  %v119 = vmul.f32 %v77, %v101
  %v120 = vmul.f32 %v78, %v102
  %v121 = vmul.f32 %v79, %v103
  %v122 = vmul.f32 %v80, %v95
  %v123 = vmul.f32 %v81, %v96
  %v124 = vmul.f32 %v82, %v97
  %v125 = vmul.f32 %v83, %v98
  %v126 = vmul.f32 %v84, %v99
  %v127 = vmul.f32 %v85, %v100
  %v128 = vmul.f32 %v86, %v101
  %v129 = vmul.f32 %v87, %v102
  %v130 = vmul.f32 %v88, %v103
  %v131 = vadd.f32 %v113, %v114
  %v132 = vadd.f32 %v131, %v115
  %v133 = vadd.f32 %v132, %v116
  %v134 = vadd.f32 %v133, %v117
  %v135 = vadd.f32 %v134, %v118
  %v136 = vadd.f32 %v135, %v119
  %v137 = vadd.f32 %v136, %v120
  %vm138 = vcmask 64512
  %v139 = vsel %vm138, %v121, 0.0
  %v140 = vadd.f32 %v137, %v139
  %141 = vadd.xlane.f32.xlu0 %v140
  %v142 = vpop.xlane.xlu0 %141
  %v143 = vadd.f32 %v122, %v123
  %v144 = vadd.f32 %v143, %v124
  %v145 = vadd.f32 %v144, %v125
  %v146 = vadd.f32 %v145, %v126
  %v147 = vadd.f32 %v146, %v127
  %v148 = vadd.f32 %v147, %v128
  %v149 = vadd.f32 %v148, %v129
  %v150 = vsel %vm138, %v130, 0.0
  %v151 = vadd.f32 %v149, %v150
  %152 = vadd.xlane.f32.xlu0 %v151
  %v153 = vpop.xlane.xlu0 %152
  %v154 = vmul.f32 %v142, 0.0009765625
  %v155 = vmul.f32 %v153, 0.0009765625
  %v156 = vmul.f32 %v71, %v113
  %v157 = vmul.f32 %v72, %v114
  %v158 = vmul.f32 %v73, %v115
  %v159 = vmul.f32 %v74, %v116
  %v160 = vmul.f32 %v75, %v117
  %v161 = vmul.f32 %v76, %v118
  %v162 = vmul.f32 %v77, %v119
  %v163 = vmul.f32 %v78, %v120
  %v164 = vmul.f32 %v79, %v121
  %v165 = vmul.f32 %v80, %v122
  %v166 = vmul.f32 %v81, %v123
  %v167 = vmul.f32 %v82, %v124
  %v168 = vmul.f32 %v83, %v125
  %v169 = vmul.f32 %v84, %v126
  %v170 = vmul.f32 %v85, %v127
  %v171 = vmul.f32 %v86, %v128
  %v172 = vmul.f32 %v87, %v129
  %v173 = vmul.f32 %v88, %v130
  %v174 = vadd.f32 %v156, %v157
  %v175 = vadd.f32 %v174, %v158
  %v176 = vadd.f32 %v175, %v159
  %v177 = vadd.f32 %v176, %v160
  %v178 = vadd.f32 %v177, %v161
  %v179 = vadd.f32 %v178, %v162
  %v180 = vadd.f32 %v179, %v163
  %v181 = vsel %vm138, %v164, 0.0
  %v182 = vadd.f32 %v180, %v181
  %183 = vadd.xlane.f32.xlu0 %v182
  %v184 = vpop.xlane.xlu0 %183
  %v185 = vadd.f32 %v165, %v166
  %v186 = vadd.f32 %v185, %v167
  %v187 = vadd.f32 %v186, %v168
  %v188 = vadd.f32 %v187, %v169
  %v189 = vadd.f32 %v188, %v170
  %v190 = vadd.f32 %v189, %v171
  %v191 = vadd.f32 %v190, %v172
  %v192 = vsel %vm138, %v173, 0.0
  %v193 = vadd.f32 %v191, %v192
  %194 = vadd.xlane.f32.xlu0 %v193
  %v195 = vpop.xlane.xlu0 %194
  %v196 = vmul.f32 %v184, 0.0009765625
  %v197 = vmul.f32 %v195, 0.0009765625
  %v198 = vmul.f32 %v154, %v154
  %v199 = vmul.f32 %v155, %v155
  %v200 = vsub.f32 %v196, %v198
  %v201 = vsub.f32 %v197, %v199
  %v202 = vadd.f32 %v200, 1e-05
  %v203 = vadd.f32 %v201, 1e-05
  %v204 = vrsqrt.pop %v202
  %v205 = vmul.f32 %v204, %v202
  %v206 = vmul.f32 %v205, %v204
  %v207 = vmul.f32 0.5, %v206
  %v208 = vsub.f32 1.5, %v207
  %v209 = vmul.f32 %v204, %v208
  %vm210 = vweird.f32 %v202
  %vm211 = vweird.f32 %v204
  %vm212 = vmor %vm210, %vm211
  %v213 = vsel %vm212, %v204, %v209
  %v214 = vrsqrt.pop %v203
  %v215 = vmul.f32 %v214, %v203
  %v216 = vmul.f32 %v215, %v214
  %v217 = vmul.f32 0.5, %v216
  %v218 = vsub.f32 1.5, %v217
  %v219 = vmul.f32 %v214, %v218
  %vm220 = vweird.f32 %v203
  %vm221 = vweird.f32 %v214
  %vm222 = vmor %vm220, %vm221
  %v223 = vsel %vm222, %v214, %v219
  %v224 = vmul.f32 %v89, %v213
  %v225 = vmul.f32 %v90, %v223
  %v226 = vmul.f32 %v154, %v224
  %v227 = vmul.f32 %v155, %v225
  %v228 = vsub.f32 %v91, %v226
  %v229 = vsub.f32 %v92, %v227
  %231 = vset.pattern.permute.xlu0 0
  %232 = vperm.xlu0 %231, %v224
  %v233 = vpop.permute.xlu0 %232
  %236 = vset.pattern.permute.xlu0 0
  %237 = vperm.xlu0 %236, %v225
  %v238 = vpop.permute.xlu0 %237
  %v240 = vmul.f32 %v71, %v233
  %v241 = vmul.f32 %v72, %v233
  %v242 = vmul.f32 %v73, %v233
  %v243 = vmul.f32 %v74, %v233
  %v244 = vmul.f32 %v75, %v233
  %v245 = vmul.f32 %v76, %v233
  %v246 = vmul.f32 %v77, %v233
  %v247 = vmul.f32 %v78, %v233
  %v248 = vmul.f32 %v79, %v233
  %v249 = vmul.f32 %v80, %v238
  %v250 = vmul.f32 %v81, %v238
  %v251 = vmul.f32 %v82, %v238
  %v252 = vmul.f32 %v83, %v238
  %v253 = vmul.f32 %v84, %v238
  %v254 = vmul.f32 %v85, %v238
  %v255 = vmul.f32 %v86, %v238
  %v256 = vmul.f32 %v87, %v238
  %v257 = vmul.f32 %v88, %v238
  %259 = vset.pattern.permute.xlu0 0
  %260 = vperm.xlu0 %259, %v228
  %v261 = vpop.permute.xlu0 %260
  %264 = vset.pattern.permute.xlu0 0
  %265 = vperm.xlu0 %264, %v229
  %v266 = vpop.permute.xlu0 %265
  %v268 = vadd.f32 %v240, %v261
  %v269 = vadd.f32 %v241, %v261
  %v270 = vadd.f32 %v242, %v261
  %v271 = vadd.f32 %v243, %v261
  %v272 = vadd.f32 %v244, %v261
  %v273 = vadd.f32 %v245, %v261
  %v274 = vadd.f32 %v246, %v261
  %v275 = vadd.f32 %v247, %v261
  %v276 = vadd.f32 %v248, %v261
  %v277 = vadd.f32 %v249, %v266
  %v278 = vadd.f32 %v250, %v266
  %v279 = vadd.f32 %v251, %v266
  %v280 = vadd.f32 %v252, %v266
  %v281 = vadd.f32 %v253, %v266
  %v282 = vadd.f32 %v254, %v266
  %v283 = vadd.f32 %v255, %v266
  %v284 = vadd.f32 %v256, %v266
  %v285 = vadd.f32 %v257, %v266
  %v286 = vmax.f32 %v268, 0.0
  %v287 = vmax.f32 %v269, 0.0
  %v288 = vmax.f32 %v270, 0.0
  %v289 = vmax.f32 %v271, 0.0
  %v290 = vmax.f32 %v272, 0.0
  %v291 = vmax.f32 %v273, 0.0
  %v292 = vmax.f32 %v274, 0.0
  %v293 = vmax.f32 %v275, 0.0
  %v294 = vmax.f32 %v276, 0.0
  %v295 = vmax.f32 %v277, 0.0
  %v296 = vmax.f32 %v278, 0.0
  %v297 = vmax.f32 %v279, 0.0
  %v298 = vmax.f32 %v280, 0.0
  %v299 = vmax.f32 %v281, 0.0
  %v300 = vmax.f32 %v282, 0.0
  %v301 = vmax.f32 %v283, 0.0
  %v302 = vmax.f32 %v284, 0.0
  %v303 = vmax.f32 %v285, 0.0
  %v304 = vmul.f32 %v286, %v95
  %v305 = vmul.f32 %v287, %v96
  %v306 = vmul.f32 %v288, %v97
  %v307 = vmul.f32 %v289, %v98
  %v308 = vmul.f32 %v290, %v99
  %v309 = vmul.f32 %v291, %v100
  %v310 = vmul.f32 %v292, %v101
  %v311 = vmul.f32 %v293, %v102
  %v312 = vmul.f32 %v294, %v103
  %v313 = vmul.f32 %v295, %v95
  %v314 = vmul.f32 %v296, %v96
  %v315 = vmul.f32 %v297, %v97
  %v316 = vmul.f32 %v298, %v98
  %v317 = vmul.f32 %v299, %v99
  %v318 = vmul.f32 %v300, %v100
  %v319 = vmul.f32 %v301, %v101
  %v320 = vmul.f32 %v302, %v102
  %v321 = vmul.f32 %v303, %v103
  %v322 = vld [vmem:[%s5] sm:$0xf]
  %v323 = vpack.c.bf16 %v305, %v304
  %v324 = vpack.c.bf16 %v307, %v306
  %v325 = vpack.c.bf16 %v309, %v308
  %v326 = vpack.c.bf16 %v311, %v310
  %v327 = vpack.c.bf16 %v312, %v312
  %v328 = vpack.c.bf16 %v314, %v313
  %v329 = vpack.c.bf16 %v316, %v315
  %v330 = vpack.c.bf16 %v318, %v317
  %v331 = vpack.c.bf16 %v320, %v319
  %v332 = vpack.c.bf16 %v321, %v321
  %v343 = vunpack.c.l.b16 %v323
  %v344 = vunpack.c.h.b16 %v323
  %v345 = vunpack.c.l.b16 %v324
  %v346 = vunpack.c.h.b16 %v324
  %v347 = vunpack.c.l.b16 %v325
  %v348 = vunpack.c.h.b16 %v325
  %v349 = vunpack.c.l.b16 %v326
  %v350 = vunpack.c.h.b16 %v326
  %v351 = vunpack.c.l.b16 %v327
  %v352 = vunpack.c.l.b16 %v328
  %v353 = vunpack.c.h.b16 %v328
  %v354 = vunpack.c.l.b16 %v329
  %v355 = vunpack.c.h.b16 %v329
  %v356 = vunpack.c.l.b16 %v330
  %v357 = vunpack.c.h.b16 %v330
  %v358 = vunpack.c.l.b16 %v331
  %v359 = vunpack.c.h.b16 %v331
  %v360 = vunpack.c.l.b16 %v332
  %v361 = vpack.c.b16 %v352, %v343
  %v362 = vpack.c.b16 %v353, %v344
  %v363 = vpack.c.b16 %v354, %v345
  %v364 = vpack.c.b16 %v355, %v346
  %v365 = vpack.c.b16 %v356, %v347
  %v366 = vpack.c.b16 %v357, %v348
  %v367 = vpack.c.b16 %v358, %v349
  %v368 = vpack.c.b16 %v359, %v350
  %v369 = vpack.c.b16 %v360, %v351
  %370 = vrot.lane.b32.xlu0 %v361, 3
  %v371 = vpop.permute.xlu0 %370
  %372 = vrot.lane.b32.xlu0 %v362, 3
  %v373 = vpop.permute.xlu0 %372
  %374 = vrot.lane.b32.xlu0 %v363, 3
  %v375 = vpop.permute.xlu0 %374
  %376 = vrot.lane.b32.xlu0 %v364, 3
  %v377 = vpop.permute.xlu0 %376
  %378 = vrot.lane.b32.xlu0 %v365, 3
  %v379 = vpop.permute.xlu0 %378
  %380 = vrot.lane.b32.xlu0 %v366, 3
  %v381 = vpop.permute.xlu0 %380
  %382 = vrot.lane.b32.xlu0 %v367, 3
  %v383 = vpop.permute.xlu0 %382
  %384 = vrot.lane.b32.xlu0 %v368, 3
  %v385 = vpop.permute.xlu0 %384
  %386 = vrot.lane.b32.xlu0 %v369, 3
  %v387 = vpop.permute.xlu0 %386
  %vm388 = vcmask 23552
  %v389 = vsel %vm388, %v371, %v373
  %v390 = vsel %vm388, %v373, %v375
  %v391 = vsel %vm388, %v375, %v377
  %v392 = vsel %vm388, %v377, %v379
  %v393 = vsel %vm388, %v379, %v381
  %v394 = vsel %vm388, %v381, %v383
  %v395 = vsel %vm388, %v383, %v385
  %v396 = vsel %vm388, %v385, %v387
  %vm404 = vcmask 23552
  %v407 = vsel %vm404, 0, %v371
  %vm409 = vcmask 89088
  %v411 = vsel %vm409, %v396, 0
  %415 = vrot.lane.b32.xlu0 %v407, 127
  %v416 = vpop.permute.xlu0 %415
  %417 = vrot.lane.b32.xlu0 %v389, 127
  %v418 = vpop.permute.xlu0 %417
  %419 = vrot.lane.b32.xlu0 %v390, 127
  %v420 = vpop.permute.xlu0 %419
  %421 = vrot.lane.b32.xlu0 %v391, 127
  %v422 = vpop.permute.xlu0 %421
  %423 = vrot.lane.b32.xlu0 %v392, 127
  %v424 = vpop.permute.xlu0 %423
  %425 = vrot.lane.b32.xlu0 %v393, 127
  %v426 = vpop.permute.xlu0 %425
  %427 = vrot.lane.b32.xlu0 %v394, 127
  %v428 = vpop.permute.xlu0 %427
  %429 = vrot.lane.b32.xlu0 %v395, 127
  %v430 = vpop.permute.xlu0 %429
  %431 = vrot.lane.b32.xlu0 %v411, 127
  %v432 = vpop.permute.xlu0 %431
  %vm433 = vcmask 1039360
  %v434 = vsel %vm433, %v416, %v418
  %v435 = vsel %vm433, %v418, %v420
  %v436 = vsel %vm433, %v420, %v422
  %v437 = vsel %vm433, %v422, %v424
  %v438 = vsel %vm433, %v424, %v426
  %v439 = vsel %vm433, %v426, %v428
  %v440 = vsel %vm433, %v428, %v430
  %v441 = vsel %vm433, %v430, %v432
  %451 = vrot.lane.b32.xlu0 %v407, 126
  %v452 = vpop.permute.xlu0 %451
  %453 = vrot.lane.b32.xlu0 %v389, 126
  %v454 = vpop.permute.xlu0 %453
  %455 = vrot.lane.b32.xlu0 %v390, 126
  %v456 = vpop.permute.xlu0 %455
  %457 = vrot.lane.b32.xlu0 %v391, 126
  %v458 = vpop.permute.xlu0 %457
  %459 = vrot.lane.b32.xlu0 %v392, 126
  %v460 = vpop.permute.xlu0 %459
  %461 = vrot.lane.b32.xlu0 %v393, 126
  %v462 = vpop.permute.xlu0 %461
  %463 = vrot.lane.b32.xlu0 %v394, 126
  %v464 = vpop.permute.xlu0 %463
  %465 = vrot.lane.b32.xlu0 %v395, 126
  %v466 = vpop.permute.xlu0 %465
  %467 = vrot.lane.b32.xlu0 %v411, 126
  %v468 = vpop.permute.xlu0 %467
  %vm469 = vcmask 1031168
  %v470 = vsel %vm469, %v452, %v454
  %v471 = vsel %vm469, %v454, %v456
  %v472 = vsel %vm469, %v456, %v458
  %v473 = vsel %vm469, %v458, %v460
  %v474 = vsel %vm469, %v460, %v462
  %v475 = vsel %vm469, %v462, %v464
  %v476 = vsel %vm469, %v464, %v466
  %v477 = vsel %vm469, %v466, %v468
  %487 = vrot.lane.b32.xlu0 %v407, 125
  %v488 = vpop.permute.xlu0 %487
  %489 = vrot.lane.b32.xlu0 %v389, 125
  %v490 = vpop.permute.xlu0 %489
  %491 = vrot.lane.b32.xlu0 %v390, 125
  %v492 = vpop.permute.xlu0 %491
  %493 = vrot.lane.b32.xlu0 %v391, 125
  %v494 = vpop.permute.xlu0 %493
  %495 = vrot.lane.b32.xlu0 %v392, 125
  %v496 = vpop.permute.xlu0 %495
  %497 = vrot.lane.b32.xlu0 %v393, 125
  %v498 = vpop.permute.xlu0 %497
  %499 = vrot.lane.b32.xlu0 %v394, 125
  %v500 = vpop.permute.xlu0 %499
  %501 = vrot.lane.b32.xlu0 %v395, 125
  %v502 = vpop.permute.xlu0 %501
  %503 = vrot.lane.b32.xlu0 %v411, 125
  %v504 = vpop.permute.xlu0 %503
  %vm505 = vcmask 1022976
  %v506 = vsel %vm505, %v488, %v490
  %v507 = vsel %vm505, %v490, %v492
  %v508 = vsel %vm505, %v492, %v494
  %v509 = vsel %vm505, %v494, %v496
  %v510 = vsel %vm505, %v496, %v498
  %v511 = vsel %vm505, %v498, %v500
  %v512 = vsel %vm505, %v500, %v502
  %v513 = vsel %vm505, %v502, %v504
  %523 = vrot.lane.b32.xlu0 %v407, 124
  %v524 = vpop.permute.xlu0 %523
  %525 = vrot.lane.b32.xlu0 %v389, 124
  %v526 = vpop.permute.xlu0 %525
  %527 = vrot.lane.b32.xlu0 %v390, 124
  %v528 = vpop.permute.xlu0 %527
  %529 = vrot.lane.b32.xlu0 %v391, 124
  %v530 = vpop.permute.xlu0 %529
  %531 = vrot.lane.b32.xlu0 %v392, 124
  %v532 = vpop.permute.xlu0 %531
  %533 = vrot.lane.b32.xlu0 %v393, 124
  %v534 = vpop.permute.xlu0 %533
  %535 = vrot.lane.b32.xlu0 %v394, 124
  %v536 = vpop.permute.xlu0 %535
  %537 = vrot.lane.b32.xlu0 %v395, 124
  %v538 = vpop.permute.xlu0 %537
  %539 = vrot.lane.b32.xlu0 %v411, 124
  %v540 = vpop.permute.xlu0 %539
  %vm541 = vcmask 1014784
  %v542 = vsel %vm541, %v524, %v526
  %v543 = vsel %vm541, %v526, %v528
  %v544 = vsel %vm541, %v528, %v530
  %v545 = vsel %vm541, %v530, %v532
  %v546 = vsel %vm541, %v532, %v534
  %v547 = vsel %vm541, %v534, %v536
  %v548 = vsel %vm541, %v536, %v538
  %v549 = vsel %vm541, %v538, %v540
  %559 = vrot.lane.b32.xlu0 %v407, 123
  %v560 = vpop.permute.xlu0 %559
  %561 = vrot.lane.b32.xlu0 %v389, 123
  %v562 = vpop.permute.xlu0 %561
  %563 = vrot.lane.b32.xlu0 %v390, 123
  %v564 = vpop.permute.xlu0 %563
  %565 = vrot.lane.b32.xlu0 %v391, 123
  %v566 = vpop.permute.xlu0 %565
  %567 = vrot.lane.b32.xlu0 %v392, 123
  %v568 = vpop.permute.xlu0 %567
  %569 = vrot.lane.b32.xlu0 %v393, 123
  %v570 = vpop.permute.xlu0 %569
  %571 = vrot.lane.b32.xlu0 %v394, 123
  %v572 = vpop.permute.xlu0 %571
  %573 = vrot.lane.b32.xlu0 %v395, 123
  %v574 = vpop.permute.xlu0 %573
  %575 = vrot.lane.b32.xlu0 %v411, 123
  %v576 = vpop.permute.xlu0 %575
  %vm577 = vcmask 1006592
  %v578 = vsel %vm577, %v560, %v562
  %v579 = vsel %vm577, %v562, %v564
  %v580 = vsel %vm577, %v564, %v566
  %v581 = vsel %vm577, %v566, %v568
  %v582 = vsel %vm577, %v568, %v570
  %v583 = vsel %vm577, %v570, %v572
  %v584 = vsel %vm577, %v572, %v574
  %v585 = vsel %vm577, %v574, %v576
  %595 = vrot.lane.b32.xlu0 %v407, 122
  %v596 = vpop.permute.xlu0 %595
  %597 = vrot.lane.b32.xlu0 %v389, 122
  %v598 = vpop.permute.xlu0 %597
  %599 = vrot.lane.b32.xlu0 %v390, 122
  %v600 = vpop.permute.xlu0 %599
  %601 = vrot.lane.b32.xlu0 %v391, 122
  %v602 = vpop.permute.xlu0 %601
  %603 = vrot.lane.b32.xlu0 %v392, 122
  %v604 = vpop.permute.xlu0 %603
  %605 = vrot.lane.b32.xlu0 %v393, 122
  %v606 = vpop.permute.xlu0 %605
  %607 = vrot.lane.b32.xlu0 %v394, 122
  %v608 = vpop.permute.xlu0 %607
  %609 = vrot.lane.b32.xlu0 %v395, 122
  %v610 = vpop.permute.xlu0 %609
  %611 = vrot.lane.b32.xlu0 %v411, 122
  %v612 = vpop.permute.xlu0 %611
  %vm613 = vcmask 998400
  %v614 = vsel %vm613, %v596, %v598
  %v615 = vsel %vm613, %v598, %v600
  %v616 = vsel %vm613, %v600, %v602
  %v617 = vsel %vm613, %v602, %v604
  %v618 = vsel %vm613, %v604, %v606
  %v619 = vsel %vm613, %v606, %v608
  %v620 = vsel %vm613, %v608, %v610
  %v621 = vsel %vm613, %v610, %v612
  %vm631 = vcmask 916480
  %v633 = vsel %vm631, %v322, 0
  %635 = vmatpush.bf16.msra.mxu0 0
  %636 = vmatpush.bf16.msra.mxu0 %v614
  %637 = vmatpush.bf16.msra.mxu0 %v578
  %638 = vmatpush.bf16.msra.mxu0 %v542
  %639 = vmatpush.bf16.msra.mxu0 %v506
  %640 = vmatpush.bf16.msra.mxu0 %v470
  %641 = vmatpush.bf16.msra.mxu0 %v434
  %642 = vmatpush.bf16.msra.mxu0 %v407
  %643 = vmatmul.bf16.gmra.mxu0 %v633
  %v644 = vpop.f32.mrf.mxu0
  %v645 = vadd.f32 0.0, %v644
  %v646 = vpop.f32.mrf.mxu0
  %647 = vdwg.mxu0
  %648 = vmatpush.bf16.msra.mxu0 0
  %649 = vmatpush.bf16.msra.mxu0 %v615
  %650 = vmatpush.bf16.msra.mxu0 %v579
  %651 = vmatpush.bf16.msra.mxu0 %v543
  %652 = vmatpush.bf16.msra.mxu0 %v507
  %653 = vmatpush.bf16.msra.mxu0 %v471
  %654 = vmatpush.bf16.msra.mxu0 %v435
  %655 = vmatpush.bf16.msra.mxu0 %v389
  %656 = vmatmul.bf16.gmra.mxu0 %v633
  %v657 = vpop.f32.mrf.mxu0
  %v658 = vadd.f32 0.0, %v657
  %v659 = vpop.f32.mrf.mxu0
  %660 = vdwg.mxu0
  %661 = vmatpush.bf16.msra.mxu0 0
  %662 = vmatpush.bf16.msra.mxu0 %v616
  %663 = vmatpush.bf16.msra.mxu0 %v580
  %664 = vmatpush.bf16.msra.mxu0 %v544
  %665 = vmatpush.bf16.msra.mxu0 %v508
  %666 = vmatpush.bf16.msra.mxu0 %v472
  %667 = vmatpush.bf16.msra.mxu0 %v436
  %668 = vmatpush.bf16.msra.mxu0 %v390
  %669 = vmatmul.bf16.gmra.mxu0 %v633
  %v670 = vpop.f32.mrf.mxu0
  %v671 = vadd.f32 0.0, %v670
  %v672 = vpop.f32.mrf.mxu0
  %673 = vdwg.mxu0
  %674 = vmatpush.bf16.msra.mxu0 0
  %675 = vmatpush.bf16.msra.mxu0 %v617
  %676 = vmatpush.bf16.msra.mxu0 %v581
  %677 = vmatpush.bf16.msra.mxu0 %v545
  %678 = vmatpush.bf16.msra.mxu0 %v509
  %679 = vmatpush.bf16.msra.mxu0 %v473
  %680 = vmatpush.bf16.msra.mxu0 %v437
  %681 = vmatpush.bf16.msra.mxu0 %v391
  %682 = vmatmul.bf16.gmra.mxu0 %v633
  %v683 = vpop.f32.mrf.mxu0
  %v684 = vadd.f32 0.0, %v683
  %v685 = vpop.f32.mrf.mxu0
  %686 = vdwg.mxu0
  %687 = vmatpush.bf16.msra.mxu0 0
  %688 = vmatpush.bf16.msra.mxu0 %v618
  %689 = vmatpush.bf16.msra.mxu0 %v582
  %690 = vmatpush.bf16.msra.mxu0 %v546
  %691 = vmatpush.bf16.msra.mxu0 %v510
  %692 = vmatpush.bf16.msra.mxu0 %v474
  %693 = vmatpush.bf16.msra.mxu0 %v438
  %694 = vmatpush.bf16.msra.mxu0 %v392
  %695 = vmatmul.bf16.gmra.mxu0 %v633
  %v696 = vpop.f32.mrf.mxu0
  %v697 = vadd.f32 0.0, %v696
  %v698 = vpop.f32.mrf.mxu0
  %699 = vdwg.mxu0
  %700 = vmatpush.bf16.msra.mxu0 0
  %701 = vmatpush.bf16.msra.mxu0 %v619
  %702 = vmatpush.bf16.msra.mxu0 %v583
  %703 = vmatpush.bf16.msra.mxu0 %v547
  %704 = vmatpush.bf16.msra.mxu0 %v511
  %705 = vmatpush.bf16.msra.mxu0 %v475
  %706 = vmatpush.bf16.msra.mxu0 %v439
  %707 = vmatpush.bf16.msra.mxu0 %v393
  %708 = vmatmul.bf16.gmra.mxu0 %v633
  %v709 = vpop.f32.mrf.mxu0
  %v710 = vadd.f32 0.0, %v709
  %v711 = vpop.f32.mrf.mxu0
  %712 = vdwg.mxu0
  %713 = vmatpush.bf16.msra.mxu0 0
  %714 = vmatpush.bf16.msra.mxu0 %v620
  %715 = vmatpush.bf16.msra.mxu0 %v584
  %716 = vmatpush.bf16.msra.mxu0 %v548
  %717 = vmatpush.bf16.msra.mxu0 %v512
  %718 = vmatpush.bf16.msra.mxu0 %v476
  %719 = vmatpush.bf16.msra.mxu0 %v440
  %720 = vmatpush.bf16.msra.mxu0 %v394
  %721 = vmatmul.bf16.gmra.mxu0 %v633
  %v722 = vpop.f32.mrf.mxu0
  %v723 = vadd.f32 0.0, %v722
  %v724 = vpop.f32.mrf.mxu0
  %725 = vdwg.mxu0
  %726 = vmatpush.bf16.msra.mxu0 0
  %727 = vmatpush.bf16.msra.mxu0 %v621
  %728 = vmatpush.bf16.msra.mxu0 %v585
  %729 = vmatpush.bf16.msra.mxu0 %v549
  %730 = vmatpush.bf16.msra.mxu0 %v513
  %731 = vmatpush.bf16.msra.mxu0 %v477
  %732 = vmatpush.bf16.msra.mxu0 %v441
  %733 = vmatpush.bf16.msra.mxu0 %v395
  %734 = vmatmul.bf16.gmra.mxu0 %v633
  %v735 = vpop.f32.mrf.mxu0
  %v736 = vadd.f32 0.0, %v735
  %v737 = vpop.f32.mrf.mxu0
  %738 = vdwg.mxu0
  %739 = vmatpush.bf16.msra.mxu0 0
  %740 = vmatpush.bf16.msra.mxu0 %v612
  %741 = vmatpush.bf16.msra.mxu0 %v576
  %742 = vmatpush.bf16.msra.mxu0 %v540
  %743 = vmatpush.bf16.msra.mxu0 %v504
  %744 = vmatpush.bf16.msra.mxu0 %v468
  %745 = vmatpush.bf16.msra.mxu0 %v432
  %746 = vmatpush.bf16.msra.mxu0 %v411
  %747 = vmatmul.bf16.gmra.mxu0 %v633
  %v748 = vpop.f32.mrf.mxu0
  %v749 = vadd.f32 0.0, %v748
  %v750 = vpop.f32.mrf.mxu0
  %751 = vdwg.mxu0
  %v752 = vld [vmem:[%s6] sm:$0xff]
  %v753 = vld [vmem:[%s7] sm:$0xff]
  %v754 = vmul.f32 %v645, %v95
  %v755 = vmul.f32 %v658, %v96
  %v756 = vmul.f32 %v671, %v97
  %v757 = vmul.f32 %v684, %v98
  %v758 = vmul.f32 %v697, %v99
  %v759 = vmul.f32 %v710, %v100
  %v760 = vmul.f32 %v723, %v101
  %v761 = vmul.f32 %v736, %v102
  %v762 = vmul.f32 %v749, %v103
  %v763 = vadd.f32 %v754, %v755
  %v764 = vadd.f32 %v763, %v756
  %v765 = vadd.f32 %v764, %v757
  %v766 = vadd.f32 %v765, %v758
  %v767 = vadd.f32 %v766, %v759
  %v768 = vadd.f32 %v767, %v760
  %v769 = vadd.f32 %v768, %v761
  %v770 = vsel %vm138, %v762, 0.0
  %v771 = vadd.f32 %v769, %v770
  %772 = vadd.xlane.f32.xlu0 %v771
  %v773 = vpop.xlane.xlu0 %772
  %v774 = vmul.f32 %v773, 0.0009765625
  %v775 = vmul.f32 %v645, %v754
  %v776 = vmul.f32 %v658, %v755
  %v777 = vmul.f32 %v671, %v756
  %v778 = vmul.f32 %v684, %v757
  %v779 = vmul.f32 %v697, %v758
  %v780 = vmul.f32 %v710, %v759
  %v781 = vmul.f32 %v723, %v760
  %v782 = vmul.f32 %v736, %v761
  %v783 = vmul.f32 %v749, %v762
  %v784 = vadd.f32 %v775, %v776
  %v785 = vadd.f32 %v784, %v777
  %v786 = vadd.f32 %v785, %v778
  %v787 = vadd.f32 %v786, %v779
  %v788 = vadd.f32 %v787, %v780
  %v789 = vadd.f32 %v788, %v781
  %v790 = vadd.f32 %v789, %v782
  %v791 = vsel %vm138, %v783, 0.0
  %v792 = vadd.f32 %v790, %v791
  %793 = vadd.xlane.f32.xlu0 %v792
  %v794 = vpop.xlane.xlu0 %793
  %v795 = vmul.f32 %v794, 0.0009765625
  %v796 = vmul.f32 %v774, %v774
  %v797 = vsub.f32 %v795, %v796
  %v798 = vadd.f32 %v797, 1e-05
  %v799 = vrsqrt.pop %v798
  %v800 = vmul.f32 %v799, %v798
  %v801 = vmul.f32 %v800, %v799
  %v802 = vmul.f32 0.5, %v801
  %v803 = vsub.f32 1.5, %v802
  %v804 = vmul.f32 %v799, %v803
  %vm805 = vweird.f32 %v798
  %vm806 = vweird.f32 %v799
  %vm807 = vmor %vm805, %vm806
  %v808 = vsel %vm807, %v799, %v804
  %v809 = vmul.f32 %v752, %v808
  %v810 = vmul.f32 %v774, %v809
  %v811 = vsub.f32 %v753, %v810
  %813 = vset.pattern.permute.xlu0 0
  %814 = vperm.xlu0 %813, %v809
  %v815 = vpop.permute.xlu0 %814
  %v817 = vmul.f32 %v645, %v815
  %v818 = vmul.f32 %v658, %v815
  %v819 = vmul.f32 %v671, %v815
  %v820 = vmul.f32 %v684, %v815
  %v821 = vmul.f32 %v697, %v815
  %v822 = vmul.f32 %v710, %v815
  %v823 = vmul.f32 %v723, %v815
  %v824 = vmul.f32 %v736, %v815
  %v825 = vmul.f32 %v749, %v815
  %827 = vset.pattern.permute.xlu0 0
  %828 = vperm.xlu0 %827, %v811
  %v829 = vpop.permute.xlu0 %828
  %v831 = vadd.f32 %v817, %v829
  %v832 = vadd.f32 %v818, %v829
  %v833 = vadd.f32 %v819, %v829
  %v834 = vadd.f32 %v820, %v829
  %v835 = vadd.f32 %v821, %v829
  %v836 = vadd.f32 %v822, %v829
  %v837 = vadd.f32 %v823, %v829
  %v838 = vadd.f32 %v824, %v829
  %v839 = vadd.f32 %v825, %v829
  %v840 = vmax.f32 %v831, 0.0
  %v841 = vmax.f32 %v832, 0.0
  %v842 = vmax.f32 %v833, 0.0
  %v843 = vmax.f32 %v834, 0.0
  %v844 = vmax.f32 %v835, 0.0
  %v845 = vmax.f32 %v836, 0.0
  %v846 = vmax.f32 %v837, 0.0
  %v847 = vmax.f32 %v838, 0.0
  %v848 = vmax.f32 %v839, 0.0
  %v849 = vmul.f32 %v840, %v95
  %v850 = vmul.f32 %v841, %v96
  %v851 = vmul.f32 %v842, %v97
  %v852 = vmul.f32 %v843, %v98
  %v853 = vmul.f32 %v844, %v99
  %v854 = vmul.f32 %v845, %v100
  %v855 = vmul.f32 %v846, %v101
  %v856 = vmul.f32 %v847, %v102
  %v857 = vmul.f32 %v848, %v103
  %v858 = vld [vmem:[%s8] sm:$0xf]
  %v859 = vld [vmem:[%s8 + $0x4] sm:$0xf]
  %v860 = vpack.c.bf16 %v850, %v849
  %v861 = vpack.c.bf16 %v852, %v851
  %v862 = vpack.c.bf16 %v854, %v853
  %v863 = vpack.c.bf16 %v856, %v855
  %v864 = vpack.c.bf16 %v857, %v857
  %v870 = vunpack.c.l.b16 %v860
  %v871 = vunpack.c.h.b16 %v860
  %v872 = vunpack.c.l.b16 %v861
  %v873 = vunpack.c.h.b16 %v861
  %v874 = vunpack.c.l.b16 %v862
  %v875 = vunpack.c.h.b16 %v862
  %v876 = vunpack.c.l.b16 %v863
  %v877 = vunpack.c.h.b16 %v863
  %v878 = vunpack.c.l.b16 %v864
  %v879 = vpack.c.b16 %v870, %v870
  %v880 = vpack.c.b16 %v871, %v871
  %v881 = vpack.c.b16 %v872, %v872
  %v882 = vpack.c.b16 %v873, %v873
  %v883 = vpack.c.b16 %v874, %v874
  %v884 = vpack.c.b16 %v875, %v875
  %v885 = vpack.c.b16 %v876, %v876
  %v886 = vpack.c.b16 %v877, %v877
  %v887 = vpack.c.b16 %v878, %v878
  %888 = vrot.lane.b32.xlu0 %v879, 2
  %v889 = vpop.permute.xlu0 %888
  %890 = vrot.lane.b32.xlu0 %v880, 2
  %v891 = vpop.permute.xlu0 %890
  %892 = vrot.lane.b32.xlu0 %v881, 2
  %v893 = vpop.permute.xlu0 %892
  %894 = vrot.lane.b32.xlu0 %v882, 2
  %v895 = vpop.permute.xlu0 %894
  %896 = vrot.lane.b32.xlu0 %v883, 2
  %v897 = vpop.permute.xlu0 %896
  %898 = vrot.lane.b32.xlu0 %v884, 2
  %v899 = vpop.permute.xlu0 %898
  %900 = vrot.lane.b32.xlu0 %v885, 2
  %v901 = vpop.permute.xlu0 %900
  %902 = vrot.lane.b32.xlu0 %v886, 2
  %v903 = vpop.permute.xlu0 %902
  %904 = vrot.lane.b32.xlu0 %v887, 2
  %v905 = vpop.permute.xlu0 %904
  %vm906 = vcmask 15360
  %v907 = vsel %vm906, %v889, %v891
  %v908 = vsel %vm906, %v891, %v893
  %v909 = vsel %vm906, %v893, %v895
  %v910 = vsel %vm906, %v895, %v897
  %v911 = vsel %vm906, %v897, %v899
  %v912 = vsel %vm906, %v899, %v901
  %v913 = vsel %vm906, %v901, %v903
  %v914 = vsel %vm906, %v903, %v905
  %vm915 = vcmask 15360
  %v917 = vsel %vm915, 0, %v889
  %vm918 = vcmask 80896
  %v920 = vsel %vm918, %v914, 0
  %v923 = vrot.slane %v917, 4
  %v924 = vrot.slane %v907, 4
  %v925 = vrot.slane %v908, 4
  %v926 = vrot.slane %v909, 4
  %v927 = vrot.slane %v910, 4
  %v928 = vrot.slane %v911, 4
  %v929 = vrot.slane %v912, 4
  %v930 = vrot.slane %v913, 4
  %v931 = vrot.slane %v920, 4
  %932 = vrot.lane.b32.xlu0 %v923, 127
  %v933 = vpop.permute.xlu0 %932
  %934 = vrot.lane.b32.xlu0 %v924, 127
  %v935 = vpop.permute.xlu0 %934
  %936 = vrot.lane.b32.xlu0 %v925, 127
  %v937 = vpop.permute.xlu0 %936
  %938 = vrot.lane.b32.xlu0 %v926, 127
  %v939 = vpop.permute.xlu0 %938
  %940 = vrot.lane.b32.xlu0 %v927, 127
  %v941 = vpop.permute.xlu0 %940
  %942 = vrot.lane.b32.xlu0 %v928, 127
  %v943 = vpop.permute.xlu0 %942
  %944 = vrot.lane.b32.xlu0 %v929, 127
  %v945 = vpop.permute.xlu0 %944
  %946 = vrot.lane.b32.xlu0 %v930, 127
  %v947 = vpop.permute.xlu0 %946
  %948 = vrot.lane.b32.xlu0 %v931, 127
  %v949 = vpop.permute.xlu0 %948
  %v950 = vsel %vm433, %v933, %v935
  %v951 = vsel %vm433, %v935, %v937
  %v952 = vsel %vm433, %v937, %v939
  %v953 = vsel %vm433, %v939, %v941
  %v954 = vsel %vm433, %v941, %v943
  %v955 = vsel %vm433, %v943, %v945
  %v956 = vsel %vm433, %v945, %v947
  %v957 = vsel %vm433, %v947, %v949
  %958 = vrot.lane.b32.xlu0 %v917, 126
  %v959 = vpop.permute.xlu0 %958
  %960 = vrot.lane.b32.xlu0 %v907, 126
  %v961 = vpop.permute.xlu0 %960
  %962 = vrot.lane.b32.xlu0 %v908, 126
  %v963 = vpop.permute.xlu0 %962
  %964 = vrot.lane.b32.xlu0 %v909, 126
  %v965 = vpop.permute.xlu0 %964
  %966 = vrot.lane.b32.xlu0 %v910, 126
  %v967 = vpop.permute.xlu0 %966
  %968 = vrot.lane.b32.xlu0 %v911, 126
  %v969 = vpop.permute.xlu0 %968
  %970 = vrot.lane.b32.xlu0 %v912, 126
  %v971 = vpop.permute.xlu0 %970
  %972 = vrot.lane.b32.xlu0 %v913, 126
  %v973 = vpop.permute.xlu0 %972
  %974 = vrot.lane.b32.xlu0 %v920, 126
  %v975 = vpop.permute.xlu0 %974
  %v976 = vsel %vm469, %v959, %v961
  %v977 = vsel %vm469, %v961, %v963
  %v978 = vsel %vm469, %v963, %v965
  %v979 = vsel %vm469, %v965, %v967
  %v980 = vsel %vm469, %v967, %v969
  %v981 = vsel %vm469, %v969, %v971
  %v982 = vsel %vm469, %v971, %v973
  %v983 = vsel %vm469, %v973, %v975
  %984 = vrot.lane.b32.xlu0 %v923, 125
  %v985 = vpop.permute.xlu0 %984
  %986 = vrot.lane.b32.xlu0 %v924, 125
  %v987 = vpop.permute.xlu0 %986
  %988 = vrot.lane.b32.xlu0 %v925, 125
  %v989 = vpop.permute.xlu0 %988
  %990 = vrot.lane.b32.xlu0 %v926, 125
  %v991 = vpop.permute.xlu0 %990
  %992 = vrot.lane.b32.xlu0 %v927, 125
  %v993 = vpop.permute.xlu0 %992
  %994 = vrot.lane.b32.xlu0 %v928, 125
  %v995 = vpop.permute.xlu0 %994
  %996 = vrot.lane.b32.xlu0 %v929, 125
  %v997 = vpop.permute.xlu0 %996
  %998 = vrot.lane.b32.xlu0 %v930, 125
  %v999 = vpop.permute.xlu0 %998
  %1000 = vrot.lane.b32.xlu0 %v931, 125
  %v1001 = vpop.permute.xlu0 %1000
  %v1002 = vsel %vm505, %v985, %v987
  %v1003 = vsel %vm505, %v987, %v989
  %v1004 = vsel %vm505, %v989, %v991
  %v1005 = vsel %vm505, %v991, %v993
  %v1006 = vsel %vm505, %v993, %v995
  %v1007 = vsel %vm505, %v995, %v997
  %v1008 = vsel %vm505, %v997, %v999
  %v1009 = vsel %vm505, %v999, %v1001
  %1010 = vrot.lane.b32.xlu0 %v917, 124
  %v1011 = vpop.permute.xlu0 %1010
  %1012 = vrot.lane.b32.xlu0 %v907, 124
  %v1013 = vpop.permute.xlu0 %1012
  %1014 = vrot.lane.b32.xlu0 %v908, 124
  %v1015 = vpop.permute.xlu0 %1014
  %1016 = vrot.lane.b32.xlu0 %v909, 124
  %v1017 = vpop.permute.xlu0 %1016
  %1018 = vrot.lane.b32.xlu0 %v910, 124
  %v1019 = vpop.permute.xlu0 %1018
  %1020 = vrot.lane.b32.xlu0 %v911, 124
  %v1021 = vpop.permute.xlu0 %1020
  %1022 = vrot.lane.b32.xlu0 %v912, 124
  %v1023 = vpop.permute.xlu0 %1022
  %1024 = vrot.lane.b32.xlu0 %v913, 124
  %v1025 = vpop.permute.xlu0 %1024
  %1026 = vrot.lane.b32.xlu0 %v920, 124
  %v1027 = vpop.permute.xlu0 %1026
  %v1028 = vsel %vm541, %v1011, %v1013
  %v1029 = vsel %vm541, %v1013, %v1015
  %v1030 = vsel %vm541, %v1015, %v1017
  %v1031 = vsel %vm541, %v1017, %v1019
  %v1032 = vsel %vm541, %v1019, %v1021
  %v1033 = vsel %vm541, %v1021, %v1023
  %v1034 = vsel %vm541, %v1023, %v1025
  %v1035 = vsel %vm541, %v1025, %v1027
  %vm1036 = vcmask 1043456
  %v1038 = vsel %vm1036, %v917, %v950
  %v1042 = vsel %vm1036, %v907, %v951
  %v1046 = vsel %vm1036, %v908, %v952
  %v1050 = vsel %vm1036, %v909, %v953
  %v1054 = vsel %vm1036, %v910, %v954
  %v1058 = vsel %vm1036, %v911, %v955
  %v1062 = vsel %vm1036, %v912, %v956
  %v1066 = vsel %vm1036, %v913, %v957
  %v1069 = vsel %vm1036, %v920, %v949
  %v1073 = vsel %vm1036, %v976, %v1002
  %v1077 = vsel %vm1036, %v977, %v1003
  %v1081 = vsel %vm1036, %v978, %v1004
  %v1085 = vsel %vm1036, %v979, %v1005
  %v1089 = vsel %vm1036, %v980, %v1006
  %v1093 = vsel %vm1036, %v981, %v1007
  %v1097 = vsel %vm1036, %v982, %v1008
  %v1101 = vsel %vm1036, %v983, %v1009
  %v1105 = vsel %vm1036, %v975, %v1001
  %v1109 = vunpack.c.l.b16 %v858
  %v1110 = vunpack.c.l.b16 %v859
  %v1111 = vpack.c.b16 %v1110, %v1109
  %vm1112 = vcmask 326656
  %v1114 = vsel %vm1112, %v1111, 0
  %v1117 = vsel %vm1036, %v1028, 0
  %v1120 = vsel %vm1036, %v1029, 0
  %v1123 = vsel %vm1036, %v1030, 0
  %v1126 = vsel %vm1036, %v1031, 0
  %v1129 = vsel %vm1036, %v1032, 0
  %v1132 = vsel %vm1036, %v1033, 0
  %v1135 = vsel %vm1036, %v1034, 0
  %v1138 = vsel %vm1036, %v1035, 0
  %v1141 = vsel %vm1036, %v1027, 0
  %1143 = vmatpush.bf16.msra.mxu0 0
  %1144 = vmatpush.bf16.msra.mxu0 0
  %1145 = vmatpush.bf16.msra.mxu0 0
  %1146 = vmatpush.bf16.msra.mxu0 0
  %1147 = vmatpush.bf16.msra.mxu0 0
  %1148 = vmatpush.bf16.msra.mxu0 %v1117
  %1149 = vmatpush.bf16.msra.mxu0 %v1073
  %1150 = vmatpush.bf16.msra.mxu0 %v1038
  %1151 = vmatmul.bf16.gmra.mxu0 %v1114
  %v1152 = vpop.f32.mrf.mxu0
  %v1153 = vadd.f32 0.0, %v1152
  %v1154 = vpop.f32.mrf.mxu0
  %v1155 = vadd.f32 0.0, %v1154
  %1156 = vdwg.mxu0
  %1157 = vmatpush.bf16.msra.mxu0 0
  %1158 = vmatpush.bf16.msra.mxu0 0
  %1159 = vmatpush.bf16.msra.mxu0 0
  %1160 = vmatpush.bf16.msra.mxu0 0
  %1161 = vmatpush.bf16.msra.mxu0 0
  %1162 = vmatpush.bf16.msra.mxu0 %v1120
  %1163 = vmatpush.bf16.msra.mxu0 %v1077
  %1164 = vmatpush.bf16.msra.mxu0 %v1042
  %1165 = vmatmul.bf16.gmra.mxu0 %v1114
  %v1166 = vpop.f32.mrf.mxu0
  %v1167 = vadd.f32 0.0, %v1166
  %v1168 = vpop.f32.mrf.mxu0
  %v1169 = vadd.f32 0.0, %v1168
  %1170 = vdwg.mxu0
  %1171 = vmatpush.bf16.msra.mxu0 0
  %1172 = vmatpush.bf16.msra.mxu0 0
  %1173 = vmatpush.bf16.msra.mxu0 0
  %1174 = vmatpush.bf16.msra.mxu0 0
  %1175 = vmatpush.bf16.msra.mxu0 0
  %1176 = vmatpush.bf16.msra.mxu0 %v1123
  %1177 = vmatpush.bf16.msra.mxu0 %v1081
  %1178 = vmatpush.bf16.msra.mxu0 %v1046
  %1179 = vmatmul.bf16.gmra.mxu0 %v1114
  %v1180 = vpop.f32.mrf.mxu0
  %v1181 = vadd.f32 0.0, %v1180
  %v1182 = vpop.f32.mrf.mxu0
  %v1183 = vadd.f32 0.0, %v1182
  %1184 = vdwg.mxu0
  %1185 = vmatpush.bf16.msra.mxu0 0
  %1186 = vmatpush.bf16.msra.mxu0 0
  %1187 = vmatpush.bf16.msra.mxu0 0
  %1188 = vmatpush.bf16.msra.mxu0 0
  %1189 = vmatpush.bf16.msra.mxu0 0
  %1190 = vmatpush.bf16.msra.mxu0 %v1126
  %1191 = vmatpush.bf16.msra.mxu0 %v1085
  %1192 = vmatpush.bf16.msra.mxu0 %v1050
  %1193 = vmatmul.bf16.gmra.mxu0 %v1114
  %v1194 = vpop.f32.mrf.mxu0
  %v1195 = vadd.f32 0.0, %v1194
  %v1196 = vpop.f32.mrf.mxu0
  %v1197 = vadd.f32 0.0, %v1196
  %1198 = vdwg.mxu0
  %1199 = vmatpush.bf16.msra.mxu0 0
  %1200 = vmatpush.bf16.msra.mxu0 0
  %1201 = vmatpush.bf16.msra.mxu0 0
  %1202 = vmatpush.bf16.msra.mxu0 0
  %1203 = vmatpush.bf16.msra.mxu0 0
  %1204 = vmatpush.bf16.msra.mxu0 %v1129
  %1205 = vmatpush.bf16.msra.mxu0 %v1089
  %1206 = vmatpush.bf16.msra.mxu0 %v1054
  %1207 = vmatmul.bf16.gmra.mxu0 %v1114
  %v1208 = vpop.f32.mrf.mxu0
  %v1209 = vadd.f32 0.0, %v1208
  %v1210 = vpop.f32.mrf.mxu0
  %v1211 = vadd.f32 0.0, %v1210
  %1212 = vdwg.mxu0
  %1213 = vmatpush.bf16.msra.mxu0 0
  %1214 = vmatpush.bf16.msra.mxu0 0
  %1215 = vmatpush.bf16.msra.mxu0 0
  %1216 = vmatpush.bf16.msra.mxu0 0
  %1217 = vmatpush.bf16.msra.mxu0 0
  %1218 = vmatpush.bf16.msra.mxu0 %v1132
  %1219 = vmatpush.bf16.msra.mxu0 %v1093
  %1220 = vmatpush.bf16.msra.mxu0 %v1058
  %1221 = vmatmul.bf16.gmra.mxu0 %v1114
  %v1222 = vpop.f32.mrf.mxu0
  %v1223 = vadd.f32 0.0, %v1222
  %v1224 = vpop.f32.mrf.mxu0
  %v1225 = vadd.f32 0.0, %v1224
  %1226 = vdwg.mxu0
  %1227 = vmatpush.bf16.msra.mxu0 0
  %1228 = vmatpush.bf16.msra.mxu0 0
  %1229 = vmatpush.bf16.msra.mxu0 0
  %1230 = vmatpush.bf16.msra.mxu0 0
  %1231 = vmatpush.bf16.msra.mxu0 0
  %1232 = vmatpush.bf16.msra.mxu0 %v1135
  %1233 = vmatpush.bf16.msra.mxu0 %v1097
  %1234 = vmatpush.bf16.msra.mxu0 %v1062
  %1235 = vmatmul.bf16.gmra.mxu0 %v1114
  %v1236 = vpop.f32.mrf.mxu0
  %v1237 = vadd.f32 0.0, %v1236
  %v1238 = vpop.f32.mrf.mxu0
  %v1239 = vadd.f32 0.0, %v1238
  %1240 = vdwg.mxu0
  %1241 = vmatpush.bf16.msra.mxu0 0
  %1242 = vmatpush.bf16.msra.mxu0 0
  %1243 = vmatpush.bf16.msra.mxu0 0
  %1244 = vmatpush.bf16.msra.mxu0 0
  %1245 = vmatpush.bf16.msra.mxu0 0
  %1246 = vmatpush.bf16.msra.mxu0 %v1138
  %1247 = vmatpush.bf16.msra.mxu0 %v1101
  %1248 = vmatpush.bf16.msra.mxu0 %v1066
  %1249 = vmatmul.bf16.gmra.mxu0 %v1114
  %v1250 = vpop.f32.mrf.mxu0
  %v1251 = vadd.f32 0.0, %v1250
  %v1252 = vpop.f32.mrf.mxu0
  %v1253 = vadd.f32 0.0, %v1252
  %1254 = vdwg.mxu0
  %1255 = vmatpush.bf16.msra.mxu0 0
  %1256 = vmatpush.bf16.msra.mxu0 0
  %1257 = vmatpush.bf16.msra.mxu0 0
  %1258 = vmatpush.bf16.msra.mxu0 0
  %1259 = vmatpush.bf16.msra.mxu0 0
  %1260 = vmatpush.bf16.msra.mxu0 %v1141
  %1261 = vmatpush.bf16.msra.mxu0 %v1105
  %1262 = vmatpush.bf16.msra.mxu0 %v1069
  %1263 = vmatmul.bf16.gmra.mxu0 %v1114
  %v1264 = vpop.f32.mrf.mxu0
  %v1265 = vadd.f32 0.0, %v1264
  %v1266 = vpop.f32.mrf.mxu0
  %v1267 = vadd.f32 0.0, %v1266
  %1268 = vdwg.mxu0
  %1269 = vst [vmem:[%s9] sm:$0xff] %v1153
  %1270 = vst [vmem:[%s9 + $0x8] sm:$0xff] %v1167
  %1271 = vst [vmem:[%s9 + $0x10] sm:$0xff] %v1181
  %1272 = vst [vmem:[%s9 + $0x18] sm:$0xff] %v1195
  %1273 = vst [vmem:[%s9 + $0x20] sm:$0xff] %v1209
  %1274 = vst [vmem:[%s9 + $0x28] sm:$0xff] %v1223
  %1275 = vst [vmem:[%s9 + $0x30] sm:$0xff] %v1237
  %1276 = vst [vmem:[%s9 + $0x38] sm:$0xff] %v1251
  %1277 = vst.msk [vmem:[%s9 + $0x40] sm:$0xff] %vm138, %v1265
  %1278 = vst [vmem:[%s9 + $0x48] sm:$0xff] %v1155
  %1279 = vst [vmem:[%s9 + $0x50] sm:$0xff] %v1169
  %1280 = vst [vmem:[%s9 + $0x58] sm:$0xff] %v1183
  %1281 = vst [vmem:[%s9 + $0x60] sm:$0xff] %v1197
  %1282 = vst [vmem:[%s9 + $0x68] sm:$0xff] %v1211
  %1283 = vst [vmem:[%s9 + $0x70] sm:$0xff] %v1225
  %1284 = vst [vmem:[%s9 + $0x78] sm:$0xff] %v1239
  %1285 = vst [vmem:[%s9 + $0x80] sm:$0xff] %v1253
  %1286 = vst.msk [vmem:[%s9 + $0x88] sm:$0xff] %vm138, %v1267
  // Predicated region
  $region38: #{seismogram_decoder_forward.6} parent=0 // pred_check
    _
  $region39: #{seismogram_decoder_forward.6} parent=0 // pred_check_branch
    %1288 = sbr.rel (0) target = $region41
  $region40: #{seismogram_decoder_forward.6} parent=0 // pred_region
    _
  $region41: #{seismogram_decoder_forward.6} parent=0 // pred_fallthru
    _
  // Predicated region
  $region42: #{seismogram_decoder_forward.6} parent=0 // pred_check
    _
  $region43: #{seismogram_decoder_forward.6} parent=0 // pred_check_branch
    %1290 = sbr.rel (0) target = $region45
  $region44: #{seismogram_decoder_forward.6} parent=0 // pred_region
    _
  $region45: #{seismogram_decoder_forward.6} parent=0 // pred_fallthru
    _

// kernel: seismogram_decoder_forward.7
$region0: #{seismogram_decoder_forward.7}
  #allocation0 [shape = 'u32[]', space=smem, size = 0x4, offset = 0x4, fixed_abs, tag = 'smem constant byte address 0x4 - core index']
  #allocation1 [shape = 'u32[72,128]{1,0:T(1,128)}', space=vmem, size = 0x9000, scoped, tag = 'internal scratch']
  %s0 = inlined_call_operand.vmem [shape: f32[8,2064], index: 0, kind: input, shape index: {}]
  %s1 = inlined_call_operand.vmem [shape: f32[1,2064], index: 1, kind: input, shape index: {}]
  %s2 = inlined_call_operand.vmem [shape: f32[8,1], index: 2, kind: input, shape index: {}]
  %s3 = inlined_call_operand.vmem [shape: f32[8,1], index: 3, kind: input, shape index: {}]
  %s4 = inlined_call_operand.vmem [shape: bf16[3,72], index: 4, kind: input, shape index: {}]
  %s5 = inlined_call_operand.vmem [shape: f32[3,1], index: 5, kind: input, shape index: {}]
  %s6 = inlined_call_operand.vmem [shape: f32[3,1], index: 6, kind: input, shape index: {}]
  %s7 = inlined_call_operand.vmem [shape: f32[3,2064], index: 7, kind: output, shape index: {}]
  %s8 = sld [smem:[#allocation0]]
  $region38: #{seismogram_decoder_forward.7} parent=0
    _
  %s10 = ssub.s32 1, %s8
  %s11 = scalar_select 0, %s10, %s8
  // Predicated region
  $region2: #{seismogram_decoder_forward.7} parent=0 // pred_check
    _
  $region3: #{seismogram_decoder_forward.7} parent=0 // pred_check_branch
    %13 = sbr.rel (0) target = $region5
  $region4: #{seismogram_decoder_forward.7} parent=0 // pred_region
    _
  $region5: #{seismogram_decoder_forward.7} parent=0 // pred_fallthru
    _
  // Predicated region
  $region6: #{seismogram_decoder_forward.7} parent=0 // pred_check
    _
  $region7: #{seismogram_decoder_forward.7} parent=0 // pred_check_branch
    %15 = sbr.rel (0) target = $region9
  $region8: #{seismogram_decoder_forward.7} parent=0 // pred_region
    _
  $region9: #{seismogram_decoder_forward.7} parent=0 // pred_fallthru
    _
  // Predicated region
  $region10: #{seismogram_decoder_forward.7} parent=0 // pred_check
    _
  $region11: #{seismogram_decoder_forward.7} parent=0 // pred_check_branch
    %17 = sbr.rel (0) target = $region13
  $region12: #{seismogram_decoder_forward.7} parent=0 // pred_region
    _
  $region13: #{seismogram_decoder_forward.7} parent=0 // pred_fallthru
    _
  // Predicated region
  $region14: #{seismogram_decoder_forward.7} parent=0 // pred_check
    _
  $region15: #{seismogram_decoder_forward.7} parent=0 // pred_check_branch
    %19 = sbr.rel (0) target = $region17
  $region16: #{seismogram_decoder_forward.7} parent=0 // pred_region
    _
  $region17: #{seismogram_decoder_forward.7} parent=0 // pred_fallthru
    _
  // Predicated region
  $region18: #{seismogram_decoder_forward.7} parent=0 // pred_check
    _
  $region19: #{seismogram_decoder_forward.7} parent=0 // pred_check_branch
    %21 = sbr.rel (0) target = $region21
  $region20: #{seismogram_decoder_forward.7} parent=0 // pred_region
    _
  $region21: #{seismogram_decoder_forward.7} parent=0 // pred_fallthru
    _
  // Predicated region
  $region22: #{seismogram_decoder_forward.7} parent=0 // pred_check
    _
  $region23: #{seismogram_decoder_forward.7} parent=0 // pred_check_branch
    %23 = sbr.rel (0) target = $region25
  $region24: #{seismogram_decoder_forward.7} parent=0 // pred_region
    _
  $region25: #{seismogram_decoder_forward.7} parent=0 // pred_fallthru
    _
  // Predicated region
  $region26: #{seismogram_decoder_forward.7} parent=0 // pred_check
    _
  $region27: #{seismogram_decoder_forward.7} parent=0 // pred_check_branch
    %25 = sbr.rel (0) target = $region29
  $region28: #{seismogram_decoder_forward.7} parent=0 // pred_region
    _
  $region29: #{seismogram_decoder_forward.7} parent=0 // pred_fallthru
    _
  %v27 = vld [vmem:[%s1] sm:$0xff]
  %v28 = vld [vmem:[%s1 + $0x8] sm:$0xff]
  %v29 = vld [vmem:[%s1 + $0x10] sm:$0x1]
  %v30 = vld [vmem:[%s0] sm:$0xff]
  %v31 = vld [vmem:[%s0 + $0x8] sm:$0xff]
  %v32 = vld [vmem:[%s0 + $0x10] sm:$0xff]
  %v33 = vld [vmem:[%s0 + $0x18] sm:$0xff]
  %v34 = vld [vmem:[%s0 + $0x20] sm:$0xff]
  %v35 = vld [vmem:[%s0 + $0x28] sm:$0xff]
  %v36 = vld [vmem:[%s0 + $0x30] sm:$0xff]
  %v37 = vld [vmem:[%s0 + $0x38] sm:$0xff]
  %v38 = vld [vmem:[%s0 + $0x40] sm:$0xff]
  %v39 = vld [vmem:[%s0 + $0x48] sm:$0xff]
  %v40 = vld [vmem:[%s0 + $0x50] sm:$0xff]
  %v41 = vld [vmem:[%s0 + $0x58] sm:$0xff]
  %v42 = vld [vmem:[%s0 + $0x60] sm:$0xff]
  %v43 = vld [vmem:[%s0 + $0x68] sm:$0xff]
  %v44 = vld [vmem:[%s0 + $0x70] sm:$0xff]
  %v45 = vld [vmem:[%s0 + $0x78] sm:$0xff]
  %v46 = vld [vmem:[%s0 + $0x80] sm:$0xff]
  %v47 = vld [vmem:[%s2] sm:$0xff]
  %v48 = vld [vmem:[%s3] sm:$0xff]
  %v52 = vperm.slane %v27, 0
  %v53 = vperm.slane %v27, 1
  %v54 = vperm.slane %v27, 2
  %v55 = vperm.slane %v27, 3
  %v56 = vperm.slane %v27, 4
  %v57 = vperm.slane %v27, 5
  %v58 = vperm.slane %v27, 6
  %v59 = vperm.slane %v27, 7
  %v60 = vperm.slane %v28, 0
  %v61 = vperm.slane %v28, 1
  %v62 = vperm.slane %v28, 2
  %v63 = vperm.slane %v28, 3
  %v64 = vperm.slane %v28, 4
  %v65 = vperm.slane %v28, 5
  %v66 = vperm.slane %v28, 6
  %v67 = vperm.slane %v28, 7
  %v68 = vperm.slane %v29, 0
  %v86 = vmul.f32 %v30, %v52
  %v87 = vmul.f32 %v31, %v53
  %v88 = vmul.f32 %v32, %v54
  %v89 = vmul.f32 %v33, %v55
  %v90 = vmul.f32 %v34, %v56
  %v91 = vmul.f32 %v35, %v57
  %v92 = vmul.f32 %v36, %v58
  %v93 = vmul.f32 %v37, %v59
  %v94 = vmul.f32 %v38, %v60
  %v95 = vmul.f32 %v39, %v61
  %v96 = vmul.f32 %v40, %v62
  %v97 = vmul.f32 %v41, %v63
  %v98 = vmul.f32 %v42, %v64
  %v99 = vmul.f32 %v43, %v65
  %v100 = vmul.f32 %v44, %v66
  %v101 = vmul.f32 %v45, %v67
  %v102 = vmul.f32 %v46, %v68
  %v103 = vadd.f32 %v86, %v87
  %v104 = vadd.f32 %v103, %v88
  %v105 = vadd.f32 %v104, %v89
  %v106 = vadd.f32 %v105, %v90
  %v107 = vadd.f32 %v106, %v91
  %v108 = vadd.f32 %v107, %v92
  %v109 = vadd.f32 %v108, %v93
  %v110 = vadd.f32 %v109, %v94
  %v111 = vadd.f32 %v110, %v95
  %v112 = vadd.f32 %v111, %v96
  %v113 = vadd.f32 %v112, %v97
  %v114 = vadd.f32 %v113, %v98
  %v115 = vadd.f32 %v114, %v99
  %v116 = vadd.f32 %v115, %v100
  %v117 = vadd.f32 %v116, %v101
  %vm118 = vcmask 130048
  %v119 = vsel %vm118, %v102, 0.0
  %v120 = vadd.f32 %v117, %v119
  %121 = vadd.xlane.f32.xlu0 %v120
  %v122 = vpop.xlane.xlu0 %121
  %v123 = vmul.f32 %v122, 0.00048828125
  %v124 = vmul.f32 %v30, %v86
  %v125 = vmul.f32 %v31, %v87
  %v126 = vmul.f32 %v32, %v88
  %v127 = vmul.f32 %v33, %v89
  %v128 = vmul.f32 %v34, %v90
  %v129 = vmul.f32 %v35, %v91
  %v130 = vmul.f32 %v36, %v92
  %v131 = vmul.f32 %v37, %v93
  %v132 = vmul.f32 %v38, %v94
  %v133 = vmul.f32 %v39, %v95
  %v134 = vmul.f32 %v40, %v96
  %v135 = vmul.f32 %v41, %v97
  %v136 = vmul.f32 %v42, %v98
  %v137 = vmul.f32 %v43, %v99
  %v138 = vmul.f32 %v44, %v100
  %v139 = vmul.f32 %v45, %v101
  %v140 = vmul.f32 %v46, %v102
  %v141 = vadd.f32 %v124, %v125
  %v142 = vadd.f32 %v141, %v126
  %v143 = vadd.f32 %v142, %v127
  %v144 = vadd.f32 %v143, %v128
  %v145 = vadd.f32 %v144, %v129
  %v146 = vadd.f32 %v145, %v130
  %v147 = vadd.f32 %v146, %v131
  %v148 = vadd.f32 %v147, %v132
  %v149 = vadd.f32 %v148, %v133
  %v150 = vadd.f32 %v149, %v134
  %v151 = vadd.f32 %v150, %v135
  %v152 = vadd.f32 %v151, %v136
  %v153 = vadd.f32 %v152, %v137
  %v154 = vadd.f32 %v153, %v138
  %v155 = vadd.f32 %v154, %v139
  %v156 = vsel %vm118, %v140, 0.0
  %v157 = vadd.f32 %v155, %v156
  %158 = vadd.xlane.f32.xlu0 %v157
  %v159 = vpop.xlane.xlu0 %158
  %v160 = vmul.f32 %v159, 0.00048828125
  %v161 = vmul.f32 %v123, %v123
  %v162 = vsub.f32 %v160, %v161
  %v163 = vadd.f32 %v162, 1e-05
  %v164 = vrsqrt.pop %v163
  %v165 = vmul.f32 %v164, %v163
  %v166 = vmul.f32 %v165, %v164
  %v167 = vmul.f32 0.5, %v166
  %v168 = vsub.f32 1.5, %v167
  %v169 = vmul.f32 %v164, %v168
  %vm170 = vweird.f32 %v163
  %vm171 = vweird.f32 %v164
  %vm172 = vmor %vm170, %vm171
  %v173 = vsel %vm172, %v164, %v169
  %v174 = vmul.f32 %v47, %v173
  %v175 = vmul.f32 %v123, %v174
  %v176 = vsub.f32 %v48, %v175
  %178 = vset.pattern.permute.xlu0 0
  %179 = vperm.xlu0 %178, %v174
  %v180 = vpop.permute.xlu0 %179
  %v182 = vmul.f32 %v30, %v180
  %v183 = vmul.f32 %v31, %v180
  %v184 = vmul.f32 %v32, %v180
  %v185 = vmul.f32 %v33, %v180
  %v186 = vmul.f32 %v34, %v180
  %v187 = vmul.f32 %v35, %v180
  %v188 = vmul.f32 %v36, %v180
  %v189 = vmul.f32 %v37, %v180
  %v190 = vmul.f32 %v38, %v180
  %v191 = vmul.f32 %v39, %v180
  %v192 = vmul.f32 %v40, %v180
  %v193 = vmul.f32 %v41, %v180
  %v194 = vmul.f32 %v42, %v180
  %v195 = vmul.f32 %v43, %v180
  %v196 = vmul.f32 %v44, %v180
  %v197 = vmul.f32 %v45, %v180
  %v198 = vmul.f32 %v46, %v180
  %200 = vset.pattern.permute.xlu0 0
  %201 = vperm.xlu0 %200, %v176
  %v202 = vpop.permute.xlu0 %201
  %v204 = vadd.f32 %v182, %v202
  %v205 = vadd.f32 %v183, %v202
  %v206 = vadd.f32 %v184, %v202
  %v207 = vadd.f32 %v185, %v202
  %v208 = vadd.f32 %v186, %v202
  %v209 = vadd.f32 %v187, %v202
  %v210 = vadd.f32 %v188, %v202
  %v211 = vadd.f32 %v189, %v202
  %v212 = vadd.f32 %v190, %v202
  %v213 = vadd.f32 %v191, %v202
  %v214 = vadd.f32 %v192, %v202
  %v215 = vadd.f32 %v193, %v202
  %v216 = vadd.f32 %v194, %v202
  %v217 = vadd.f32 %v195, %v202
  %v218 = vadd.f32 %v196, %v202
  %v219 = vadd.f32 %v197, %v202
  %v220 = vadd.f32 %v198, %v202
  %v221 = vmax.f32 %v204, 0.0
  %v222 = vmax.f32 %v205, 0.0
  %v223 = vmax.f32 %v206, 0.0
  %v224 = vmax.f32 %v207, 0.0
  %v225 = vmax.f32 %v208, 0.0
  %v226 = vmax.f32 %v209, 0.0
  %v227 = vmax.f32 %v210, 0.0
  %v228 = vmax.f32 %v211, 0.0
  %v229 = vmax.f32 %v212, 0.0
  %v230 = vmax.f32 %v213, 0.0
  %v231 = vmax.f32 %v214, 0.0
  %v232 = vmax.f32 %v215, 0.0
  %v233 = vmax.f32 %v216, 0.0
  %v234 = vmax.f32 %v217, 0.0
  %v235 = vmax.f32 %v218, 0.0
  %v236 = vmax.f32 %v219, 0.0
  %v237 = vmax.f32 %v220, 0.0
  %v238 = vmul.f32 %v221, %v52
  %v239 = vmul.f32 %v222, %v53
  %v240 = vmul.f32 %v223, %v54
  %v241 = vmul.f32 %v224, %v55
  %v242 = vmul.f32 %v225, %v56
  %v243 = vmul.f32 %v226, %v57
  %v244 = vmul.f32 %v227, %v58
  %v245 = vmul.f32 %v228, %v59
  %v246 = vmul.f32 %v229, %v60
  %v247 = vmul.f32 %v230, %v61
  %v248 = vmul.f32 %v231, %v62
  %v249 = vmul.f32 %v232, %v63
  %v250 = vmul.f32 %v233, %v64
  %v251 = vmul.f32 %v234, %v65
  %v252 = vmul.f32 %v235, %v66
  %v253 = vmul.f32 %v236, %v67
  %v254 = vmul.f32 %v237, %v68
  %v255 = vld [vmem:[%s4] sm:$0x3]
  %v256 = vpack.c.bf16 %v239, %v238
  %v257 = vpack.c.bf16 %v241, %v240
  %v258 = vpack.c.bf16 %v243, %v242
  %v259 = vpack.c.bf16 %v245, %v244
  %v260 = vpack.c.bf16 %v247, %v246
  %v261 = vpack.c.bf16 %v249, %v248
  %v262 = vpack.c.bf16 %v251, %v250
  %v263 = vpack.c.bf16 %v253, %v252
  %v264 = vpack.c.bf16 %v254, %v254
  %v274 = vunpack.c.l.b16 %v256
  %v275 = vunpack.c.h.b16 %v256
  %v276 = vunpack.c.l.b16 %v257
  %v277 = vunpack.c.h.b16 %v257
  %v278 = vunpack.c.l.b16 %v258
  %v279 = vunpack.c.h.b16 %v258
  %v280 = vunpack.c.l.b16 %v259
  %v281 = vunpack.c.h.b16 %v259
  %v282 = vunpack.c.l.b16 %v260
  %v283 = vunpack.c.h.b16 %v260
  %v284 = vunpack.c.l.b16 %v261
  %v285 = vunpack.c.h.b16 %v261
  %v286 = vunpack.c.l.b16 %v262
  %v287 = vunpack.c.h.b16 %v262
  %v288 = vunpack.c.l.b16 %v263
  %v289 = vunpack.c.h.b16 %v263
  %v290 = vunpack.c.l.b16 %v264
  %v291 = vpack.c.b16 %v274, %v274
  %v292 = vpack.c.b16 %v275, %v275
  %v293 = vpack.c.b16 %v276, %v276
  %v294 = vpack.c.b16 %v277, %v277
  %v295 = vpack.c.b16 %v278, %v278
  %v296 = vpack.c.b16 %v279, %v279
  %v297 = vpack.c.b16 %v280, %v280
  %v298 = vpack.c.b16 %v281, %v281
  %v299 = vpack.c.b16 %v282, %v282
  %v300 = vpack.c.b16 %v283, %v283
  %v301 = vpack.c.b16 %v284, %v284
  %v302 = vpack.c.b16 %v285, %v285
  %v303 = vpack.c.b16 %v286, %v286
  %v304 = vpack.c.b16 %v287, %v287
  %v305 = vpack.c.b16 %v288, %v288
  %v306 = vpack.c.b16 %v289, %v289
  %v307 = vpack.c.b16 %v290, %v290
  %308 = vrot.lane.b32.xlu0 %v291, 4
  %v309 = vpop.permute.xlu0 %308
  %310 = vrot.lane.b32.xlu0 %v292, 4
  %v311 = vpop.permute.xlu0 %310
  %312 = vrot.lane.b32.xlu0 %v293, 4
  %v313 = vpop.permute.xlu0 %312
  %314 = vrot.lane.b32.xlu0 %v294, 4
  %v315 = vpop.permute.xlu0 %314
  %316 = vrot.lane.b32.xlu0 %v295, 4
  %v317 = vpop.permute.xlu0 %316
  %318 = vrot.lane.b32.xlu0 %v296, 4
  %v319 = vpop.permute.xlu0 %318
  %320 = vrot.lane.b32.xlu0 %v297, 4
  %v321 = vpop.permute.xlu0 %320
  %322 = vrot.lane.b32.xlu0 %v298, 4
  %v323 = vpop.permute.xlu0 %322
  %324 = vrot.lane.b32.xlu0 %v299, 4
  %v325 = vpop.permute.xlu0 %324
  %326 = vrot.lane.b32.xlu0 %v300, 4
  %v327 = vpop.permute.xlu0 %326
  %328 = vrot.lane.b32.xlu0 %v301, 4
  %v329 = vpop.permute.xlu0 %328
  %330 = vrot.lane.b32.xlu0 %v302, 4
  %v331 = vpop.permute.xlu0 %330
  %332 = vrot.lane.b32.xlu0 %v303, 4
  %v333 = vpop.permute.xlu0 %332
  %334 = vrot.lane.b32.xlu0 %v304, 4
  %v335 = vpop.permute.xlu0 %334
  %336 = vrot.lane.b32.xlu0 %v305, 4
  %v337 = vpop.permute.xlu0 %336
  %338 = vrot.lane.b32.xlu0 %v306, 4
  %v339 = vpop.permute.xlu0 %338
  %340 = vrot.lane.b32.xlu0 %v307, 4
  %v341 = vpop.permute.xlu0 %340
  %vm342 = vcmask 31744
  %v343 = vsel %vm342, %v309, %v311
  %v344 = vsel %vm342, %v311, %v313
  %v345 = vsel %vm342, %v313, %v315
  %v346 = vsel %vm342, %v315, %v317
  %v347 = vsel %vm342, %v317, %v319
  %v348 = vsel %vm342, %v319, %v321
  %v349 = vsel %vm342, %v321, %v323
  %v350 = vsel %vm342, %v323, %v325
  %v351 = vsel %vm342, %v325, %v327
  %v352 = vsel %vm342, %v327, %v329
  %v353 = vsel %vm342, %v329, %v331
  %v354 = vsel %vm342, %v331, %v333
  %v355 = vsel %vm342, %v333, %v335
  %v356 = vsel %vm342, %v335, %v337
  %v357 = vsel %vm342, %v337, %v339
  %v358 = vsel %vm342, %v339, %v341
  %vm359 = vcmask 31744
  %v362 = vsel %vm359, 0, %v309
  %vm363 = vcmask 162816
  %v365 = vsel %vm363, %v358, 0
  %v368 = vrot.slane %v362, 4
  %v369 = vrot.slane %v343, 4
  %v370 = vrot.slane %v344, 4
  %v371 = vrot.slane %v345, 4
  %v372 = vrot.slane %v346, 4
  %v373 = vrot.slane %v347, 4
  %v374 = vrot.slane %v348, 4
  %v375 = vrot.slane %v349, 4
  %v376 = vrot.slane %v350, 4
  %v377 = vrot.slane %v351, 4
  %v378 = vrot.slane %v352, 4
  %v379 = vrot.slane %v353, 4
  %v380 = vrot.slane %v354, 4
  %v381 = vrot.slane %v355, 4
  %v382 = vrot.slane %v356, 4
  %v383 = vrot.slane %v357, 4
  %v384 = vrot.slane %v365, 4
  %385 = vrot.lane.b32.xlu0 %v368, 127
  %v386 = vpop.permute.xlu0 %385
  %387 = vrot.lane.b32.xlu0 %v369, 127
  %v388 = vpop.permute.xlu0 %387
  %389 = vrot.lane.b32.xlu0 %v370, 127
  %v390 = vpop.permute.xlu0 %389
  %391 = vrot.lane.b32.xlu0 %v371, 127
  %v392 = vpop.permute.xlu0 %391
  %393 = vrot.lane.b32.xlu0 %v372, 127
  %v394 = vpop.permute.xlu0 %393
  %395 = vrot.lane.b32.xlu0 %v373, 127
  %v396 = vpop.permute.xlu0 %395
  %397 = vrot.lane.b32.xlu0 %v374, 127
  %v398 = vpop.permute.xlu0 %397
  %399 = vrot.lane.b32.xlu0 %v375, 127
  %v400 = vpop.permute.xlu0 %399
  %401 = vrot.lane.b32.xlu0 %v376, 127
  %v402 = vpop.permute.xlu0 %401
  %403 = vrot.lane.b32.xlu0 %v377, 127
  %v404 = vpop.permute.xlu0 %403
  %405 = vrot.lane.b32.xlu0 %v378, 127
  %v406 = vpop.permute.xlu0 %405
  %407 = vrot.lane.b32.xlu0 %v379, 127
  %v408 = vpop.permute.xlu0 %407
  %409 = vrot.lane.b32.xlu0 %v380, 127
  %v410 = vpop.permute.xlu0 %409
  %411 = vrot.lane.b32.xlu0 %v381, 127
  %v412 = vpop.permute.xlu0 %411
  %413 = vrot.lane.b32.xlu0 %v382, 127
  %v414 = vpop.permute.xlu0 %413
  %415 = vrot.lane.b32.xlu0 %v383, 127
  %v416 = vpop.permute.xlu0 %415
  %417 = vrot.lane.b32.xlu0 %v384, 127
  %v418 = vpop.permute.xlu0 %417
  %vm419 = vcmask 1039360
  %v420 = vsel %vm419, %v386, %v388
  %v421 = vsel %vm419, %v388, %v390
  %v422 = vsel %vm419, %v390, %v392
  %v423 = vsel %vm419, %v392, %v394
  %v424 = vsel %vm419, %v394, %v396
  %v425 = vsel %vm419, %v396, %v398
  %v426 = vsel %vm419, %v398, %v400
  %v427 = vsel %vm419, %v400, %v402
  %v428 = vsel %vm419, %v402, %v404
  %v429 = vsel %vm419, %v404, %v406
  %v430 = vsel %vm419, %v406, %v408
  %v431 = vsel %vm419, %v408, %v410
  %v432 = vsel %vm419, %v410, %v412
  %v433 = vsel %vm419, %v412, %v414
  %v434 = vsel %vm419, %v414, %v416
  %v435 = vsel %vm419, %v416, %v418
  %436 = vrot.lane.b32.xlu0 %v362, 126
  %v437 = vpop.permute.xlu0 %436
  %438 = vrot.lane.b32.xlu0 %v343, 126
  %v439 = vpop.permute.xlu0 %438
  %440 = vrot.lane.b32.xlu0 %v344, 126
  %v441 = vpop.permute.xlu0 %440
  %442 = vrot.lane.b32.xlu0 %v345, 126
  %v443 = vpop.permute.xlu0 %442
  %444 = vrot.lane.b32.xlu0 %v346, 126
  %v445 = vpop.permute.xlu0 %444
  %446 = vrot.lane.b32.xlu0 %v347, 126
  %v447 = vpop.permute.xlu0 %446
  %448 = vrot.lane.b32.xlu0 %v348, 126
  %v449 = vpop.permute.xlu0 %448
  %450 = vrot.lane.b32.xlu0 %v349, 126
  %v451 = vpop.permute.xlu0 %450
  %452 = vrot.lane.b32.xlu0 %v350, 126
  %v453 = vpop.permute.xlu0 %452
  %454 = vrot.lane.b32.xlu0 %v351, 126
  %v455 = vpop.permute.xlu0 %454
  %456 = vrot.lane.b32.xlu0 %v352, 126
  %v457 = vpop.permute.xlu0 %456
  %458 = vrot.lane.b32.xlu0 %v353, 126
  %v459 = vpop.permute.xlu0 %458
  %460 = vrot.lane.b32.xlu0 %v354, 126
  %v461 = vpop.permute.xlu0 %460
  %462 = vrot.lane.b32.xlu0 %v355, 126
  %v463 = vpop.permute.xlu0 %462
  %464 = vrot.lane.b32.xlu0 %v356, 126
  %v465 = vpop.permute.xlu0 %464
  %466 = vrot.lane.b32.xlu0 %v357, 126
  %v467 = vpop.permute.xlu0 %466
  %468 = vrot.lane.b32.xlu0 %v365, 126
  %v469 = vpop.permute.xlu0 %468
  %vm470 = vcmask 1031168
  %v471 = vsel %vm470, %v437, %v439
  %v472 = vsel %vm470, %v439, %v441
  %v473 = vsel %vm470, %v441, %v443
  %v474 = vsel %vm470, %v443, %v445
  %v475 = vsel %vm470, %v445, %v447
  %v476 = vsel %vm470, %v447, %v449
  %v477 = vsel %vm470, %v449, %v451
  %v478 = vsel %vm470, %v451, %v453
  %v479 = vsel %vm470, %v453, %v455
  %v480 = vsel %vm470, %v455, %v457
  %v481 = vsel %vm470, %v457, %v459
  %v482 = vsel %vm470, %v459, %v461
  %v483 = vsel %vm470, %v461, %v463
  %v484 = vsel %vm470, %v463, %v465
  %v485 = vsel %vm470, %v465, %v467
  %v486 = vsel %vm470, %v467, %v469
  %487 = vrot.lane.b32.xlu0 %v368, 125
  %v488 = vpop.permute.xlu0 %487
  %489 = vrot.lane.b32.xlu0 %v369, 125
  %v490 = vpop.permute.xlu0 %489
  %491 = vrot.lane.b32.xlu0 %v370, 125
  %v492 = vpop.permute.xlu0 %491
  %493 = vrot.lane.b32.xlu0 %v371, 125
  %v494 = vpop.permute.xlu0 %493
  %495 = vrot.lane.b32.xlu0 %v372, 125
  %v496 = vpop.permute.xlu0 %495
  %497 = vrot.lane.b32.xlu0 %v373, 125
  %v498 = vpop.permute.xlu0 %497
  %499 = vrot.lane.b32.xlu0 %v374, 125
  %v500 = vpop.permute.xlu0 %499
  %501 = vrot.lane.b32.xlu0 %v375, 125
  %v502 = vpop.permute.xlu0 %501
  %503 = vrot.lane.b32.xlu0 %v376, 125
  %v504 = vpop.permute.xlu0 %503
  %505 = vrot.lane.b32.xlu0 %v377, 125
  %v506 = vpop.permute.xlu0 %505
  %507 = vrot.lane.b32.xlu0 %v378, 125
  %v508 = vpop.permute.xlu0 %507
  %509 = vrot.lane.b32.xlu0 %v379, 125
  %v510 = vpop.permute.xlu0 %509
  %511 = vrot.lane.b32.xlu0 %v380, 125
  %v512 = vpop.permute.xlu0 %511
  %513 = vrot.lane.b32.xlu0 %v381, 125
  %v514 = vpop.permute.xlu0 %513
  %515 = vrot.lane.b32.xlu0 %v382, 125
  %v516 = vpop.permute.xlu0 %515
  %517 = vrot.lane.b32.xlu0 %v383, 125
  %v518 = vpop.permute.xlu0 %517
  %519 = vrot.lane.b32.xlu0 %v384, 125
  %v520 = vpop.permute.xlu0 %519
  %vm521 = vcmask 1022976
  %v522 = vsel %vm521, %v488, %v490
  %v523 = vsel %vm521, %v490, %v492
  %v524 = vsel %vm521, %v492, %v494
  %v525 = vsel %vm521, %v494, %v496
  %v526 = vsel %vm521, %v496, %v498
  %v527 = vsel %vm521, %v498, %v500
  %v528 = vsel %vm521, %v500, %v502
  %v529 = vsel %vm521, %v502, %v504
  %v530 = vsel %vm521, %v504, %v506
  %v531 = vsel %vm521, %v506, %v508
  %v532 = vsel %vm521, %v508, %v510
  %v533 = vsel %vm521, %v510, %v512
  %v534 = vsel %vm521, %v512, %v514
  %v535 = vsel %vm521, %v514, %v516
  %v536 = vsel %vm521, %v516, %v518
  %v537 = vsel %vm521, %v518, %v520
  %538 = vrot.lane.b32.xlu0 %v362, 124
  %v539 = vpop.permute.xlu0 %538
  %540 = vrot.lane.b32.xlu0 %v343, 124
  %v541 = vpop.permute.xlu0 %540
  %542 = vrot.lane.b32.xlu0 %v344, 124
  %v543 = vpop.permute.xlu0 %542
  %544 = vrot.lane.b32.xlu0 %v345, 124
  %v545 = vpop.permute.xlu0 %544
  %546 = vrot.lane.b32.xlu0 %v346, 124
  %v547 = vpop.permute.xlu0 %546
  %548 = vrot.lane.b32.xlu0 %v347, 124
  %v549 = vpop.permute.xlu0 %548
  %550 = vrot.lane.b32.xlu0 %v348, 124
  %v551 = vpop.permute.xlu0 %550
  %552 = vrot.lane.b32.xlu0 %v349, 124
  %v553 = vpop.permute.xlu0 %552
  %554 = vrot.lane.b32.xlu0 %v350, 124
  %v555 = vpop.permute.xlu0 %554
  %556 = vrot.lane.b32.xlu0 %v351, 124
  %v557 = vpop.permute.xlu0 %556
  %558 = vrot.lane.b32.xlu0 %v352, 124
  %v559 = vpop.permute.xlu0 %558
  %560 = vrot.lane.b32.xlu0 %v353, 124
  %v561 = vpop.permute.xlu0 %560
  %562 = vrot.lane.b32.xlu0 %v354, 124
  %v563 = vpop.permute.xlu0 %562
  %564 = vrot.lane.b32.xlu0 %v355, 124
  %v565 = vpop.permute.xlu0 %564
  %566 = vrot.lane.b32.xlu0 %v356, 124
  %v567 = vpop.permute.xlu0 %566
  %568 = vrot.lane.b32.xlu0 %v357, 124
  %v569 = vpop.permute.xlu0 %568
  %570 = vrot.lane.b32.xlu0 %v365, 124
  %v571 = vpop.permute.xlu0 %570
  %vm572 = vcmask 1014784
  %v573 = vsel %vm572, %v539, %v541
  %v574 = vsel %vm572, %v541, %v543
  %v575 = vsel %vm572, %v543, %v545
  %v576 = vsel %vm572, %v545, %v547
  %v577 = vsel %vm572, %v547, %v549
  %v578 = vsel %vm572, %v549, %v551
  %v579 = vsel %vm572, %v551, %v553
  %v580 = vsel %vm572, %v553, %v555
  %v581 = vsel %vm572, %v555, %v557
  %v582 = vsel %vm572, %v557, %v559
  %v583 = vsel %vm572, %v559, %v561
  %v584 = vsel %vm572, %v561, %v563
  %v585 = vsel %vm572, %v563, %v565
  %v586 = vsel %vm572, %v565, %v567
  %v587 = vsel %vm572, %v567, %v569
  %v588 = vsel %vm572, %v569, %v571
  %589 = vrot.lane.b32.xlu0 %v368, 123
  %v590 = vpop.permute.xlu0 %589
  %591 = vrot.lane.b32.xlu0 %v369, 123
  %v592 = vpop.permute.xlu0 %591
  %593 = vrot.lane.b32.xlu0 %v370, 123
  %v594 = vpop.permute.xlu0 %593
  %595 = vrot.lane.b32.xlu0 %v371, 123
  %v596 = vpop.permute.xlu0 %595
  %597 = vrot.lane.b32.xlu0 %v372, 123
  %v598 = vpop.permute.xlu0 %597
  %599 = vrot.lane.b32.xlu0 %v373, 123
  %v600 = vpop.permute.xlu0 %599
  %601 = vrot.lane.b32.xlu0 %v374, 123
  %v602 = vpop.permute.xlu0 %601
  %603 = vrot.lane.b32.xlu0 %v375, 123
  %v604 = vpop.permute.xlu0 %603
  %605 = vrot.lane.b32.xlu0 %v376, 123
  %v606 = vpop.permute.xlu0 %605
  %607 = vrot.lane.b32.xlu0 %v377, 123
  %v608 = vpop.permute.xlu0 %607
  %609 = vrot.lane.b32.xlu0 %v378, 123
  %v610 = vpop.permute.xlu0 %609
  %611 = vrot.lane.b32.xlu0 %v379, 123
  %v612 = vpop.permute.xlu0 %611
  %613 = vrot.lane.b32.xlu0 %v380, 123
  %v614 = vpop.permute.xlu0 %613
  %615 = vrot.lane.b32.xlu0 %v381, 123
  %v616 = vpop.permute.xlu0 %615
  %617 = vrot.lane.b32.xlu0 %v382, 123
  %v618 = vpop.permute.xlu0 %617
  %619 = vrot.lane.b32.xlu0 %v383, 123
  %v620 = vpop.permute.xlu0 %619
  %621 = vrot.lane.b32.xlu0 %v384, 123
  %v622 = vpop.permute.xlu0 %621
  %vm623 = vcmask 1006592
  %v624 = vsel %vm623, %v590, %v592
  %v625 = vsel %vm623, %v592, %v594
  %v626 = vsel %vm623, %v594, %v596
  %v627 = vsel %vm623, %v596, %v598
  %v628 = vsel %vm623, %v598, %v600
  %v629 = vsel %vm623, %v600, %v602
  %v630 = vsel %vm623, %v602, %v604
  %v631 = vsel %vm623, %v604, %v606
  %v632 = vsel %vm623, %v606, %v608
  %v633 = vsel %vm623, %v608, %v610
  %v634 = vsel %vm623, %v610, %v612
  %v635 = vsel %vm623, %v612, %v614
  %v636 = vsel %vm623, %v614, %v616
  %v637 = vsel %vm623, %v616, %v618
  %v638 = vsel %vm623, %v618, %v620
  %v639 = vsel %vm623, %v620, %v622
  %640 = vrot.lane.b32.xlu0 %v362, 122
  %v641 = vpop.permute.xlu0 %640
  %642 = vrot.lane.b32.xlu0 %v343, 122
  %v643 = vpop.permute.xlu0 %642
  %644 = vrot.lane.b32.xlu0 %v344, 122
  %v645 = vpop.permute.xlu0 %644
  %646 = vrot.lane.b32.xlu0 %v345, 122
  %v647 = vpop.permute.xlu0 %646
  %648 = vrot.lane.b32.xlu0 %v346, 122
  %v649 = vpop.permute.xlu0 %648
  %650 = vrot.lane.b32.xlu0 %v347, 122
  %v651 = vpop.permute.xlu0 %650
  %652 = vrot.lane.b32.xlu0 %v348, 122
  %v653 = vpop.permute.xlu0 %652
  %654 = vrot.lane.b32.xlu0 %v349, 122
  %v655 = vpop.permute.xlu0 %654
  %656 = vrot.lane.b32.xlu0 %v350, 122
  %v657 = vpop.permute.xlu0 %656
  %658 = vrot.lane.b32.xlu0 %v351, 122
  %v659 = vpop.permute.xlu0 %658
  %660 = vrot.lane.b32.xlu0 %v352, 122
  %v661 = vpop.permute.xlu0 %660
  %662 = vrot.lane.b32.xlu0 %v353, 122
  %v663 = vpop.permute.xlu0 %662
  %664 = vrot.lane.b32.xlu0 %v354, 122
  %v665 = vpop.permute.xlu0 %664
  %666 = vrot.lane.b32.xlu0 %v355, 122
  %v667 = vpop.permute.xlu0 %666
  %668 = vrot.lane.b32.xlu0 %v356, 122
  %v669 = vpop.permute.xlu0 %668
  %670 = vrot.lane.b32.xlu0 %v357, 122
  %v671 = vpop.permute.xlu0 %670
  %672 = vrot.lane.b32.xlu0 %v365, 122
  %v673 = vpop.permute.xlu0 %672
  %vm674 = vcmask 998400
  %v675 = vsel %vm674, %v641, %v643
  %v676 = vsel %vm674, %v643, %v645
  %v677 = vsel %vm674, %v645, %v647
  %v678 = vsel %vm674, %v647, %v649
  %v679 = vsel %vm674, %v649, %v651
  %v680 = vsel %vm674, %v651, %v653
  %v681 = vsel %vm674, %v653, %v655
  %v682 = vsel %vm674, %v655, %v657
  %v683 = vsel %vm674, %v657, %v659
  %v684 = vsel %vm674, %v659, %v661
  %v685 = vsel %vm674, %v661, %v663
  %v686 = vsel %vm674, %v663, %v665
  %v687 = vsel %vm674, %v665, %v667
  %v688 = vsel %vm674, %v667, %v669
  %v689 = vsel %vm674, %v669, %v671
  %v690 = vsel %vm674, %v671, %v673
  %691 = vrot.lane.b32.xlu0 %v368, 121
  %v692 = vpop.permute.xlu0 %691
  %693 = vrot.lane.b32.xlu0 %v369, 121
  %v694 = vpop.permute.xlu0 %693
  %695 = vrot.lane.b32.xlu0 %v370, 121
  %v696 = vpop.permute.xlu0 %695
  %697 = vrot.lane.b32.xlu0 %v371, 121
  %v698 = vpop.permute.xlu0 %697
  %699 = vrot.lane.b32.xlu0 %v372, 121
  %v700 = vpop.permute.xlu0 %699
  %701 = vrot.lane.b32.xlu0 %v373, 121
  %v702 = vpop.permute.xlu0 %701
  %703 = vrot.lane.b32.xlu0 %v374, 121
  %v704 = vpop.permute.xlu0 %703
  %705 = vrot.lane.b32.xlu0 %v375, 121
  %v706 = vpop.permute.xlu0 %705
  %707 = vrot.lane.b32.xlu0 %v376, 121
  %v708 = vpop.permute.xlu0 %707
  %709 = vrot.lane.b32.xlu0 %v377, 121
  %v710 = vpop.permute.xlu0 %709
  %711 = vrot.lane.b32.xlu0 %v378, 121
  %v712 = vpop.permute.xlu0 %711
  %713 = vrot.lane.b32.xlu0 %v379, 121
  %v714 = vpop.permute.xlu0 %713
  %715 = vrot.lane.b32.xlu0 %v380, 121
  %v716 = vpop.permute.xlu0 %715
  %717 = vrot.lane.b32.xlu0 %v381, 121
  %v718 = vpop.permute.xlu0 %717
  %719 = vrot.lane.b32.xlu0 %v382, 121
  %v720 = vpop.permute.xlu0 %719
  %721 = vrot.lane.b32.xlu0 %v383, 121
  %v722 = vpop.permute.xlu0 %721
  %723 = vrot.lane.b32.xlu0 %v384, 121
  %v724 = vpop.permute.xlu0 %723
  %vm725 = vcmask 990208
  %v726 = vsel %vm725, %v692, %v694
  %v727 = vsel %vm725, %v694, %v696
  %v728 = vsel %vm725, %v696, %v698
  %v729 = vsel %vm725, %v698, %v700
  %v730 = vsel %vm725, %v700, %v702
  %v731 = vsel %vm725, %v702, %v704
  %v732 = vsel %vm725, %v704, %v706
  %v733 = vsel %vm725, %v706, %v708
  %v734 = vsel %vm725, %v708, %v710
  %v735 = vsel %vm725, %v710, %v712
  %v736 = vsel %vm725, %v712, %v714
  %v737 = vsel %vm725, %v714, %v716
  %v738 = vsel %vm725, %v716, %v718
  %v739 = vsel %vm725, %v718, %v720
  %v740 = vsel %vm725, %v720, %v722
  %v741 = vsel %vm725, %v722, %v724
  %742 = vrot.lane.b32.xlu0 %v362, 120
  %v743 = vpop.permute.xlu0 %742
  %744 = vrot.lane.b32.xlu0 %v343, 120
  %v745 = vpop.permute.xlu0 %744
  %746 = vrot.lane.b32.xlu0 %v344, 120
  %v747 = vpop.permute.xlu0 %746
  %748 = vrot.lane.b32.xlu0 %v345, 120
  %v749 = vpop.permute.xlu0 %748
  %750 = vrot.lane.b32.xlu0 %v346, 120
  %v751 = vpop.permute.xlu0 %750
  %752 = vrot.lane.b32.xlu0 %v347, 120
  %v753 = vpop.permute.xlu0 %752
  %754 = vrot.lane.b32.xlu0 %v348, 120
  %v755 = vpop.permute.xlu0 %754
  %756 = vrot.lane.b32.xlu0 %v349, 120
  %v757 = vpop.permute.xlu0 %756
  %758 = vrot.lane.b32.xlu0 %v350, 120
  %v759 = vpop.permute.xlu0 %758
  %760 = vrot.lane.b32.xlu0 %v351, 120
  %v761 = vpop.permute.xlu0 %760
  %762 = vrot.lane.b32.xlu0 %v352, 120
  %v763 = vpop.permute.xlu0 %762
  %764 = vrot.lane.b32.xlu0 %v353, 120
  %v765 = vpop.permute.xlu0 %764
  %766 = vrot.lane.b32.xlu0 %v354, 120
  %v767 = vpop.permute.xlu0 %766
  %768 = vrot.lane.b32.xlu0 %v355, 120
  %v769 = vpop.permute.xlu0 %768
  %770 = vrot.lane.b32.xlu0 %v356, 120
  %v771 = vpop.permute.xlu0 %770
  %772 = vrot.lane.b32.xlu0 %v357, 120
  %v773 = vpop.permute.xlu0 %772
  %774 = vrot.lane.b32.xlu0 %v365, 120
  %v775 = vpop.permute.xlu0 %774
  %vm776 = vcmask 982016
  %v777 = vsel %vm776, %v743, %v745
  %v778 = vsel %vm776, %v745, %v747
  %v779 = vsel %vm776, %v747, %v749
  %v780 = vsel %vm776, %v749, %v751
  %v781 = vsel %vm776, %v751, %v753
  %v782 = vsel %vm776, %v753, %v755
  %v783 = vsel %vm776, %v755, %v757
  %v784 = vsel %vm776, %v757, %v759
  %v785 = vsel %vm776, %v759, %v761
  %v786 = vsel %vm776, %v761, %v763
  %v787 = vsel %vm776, %v763, %v765
  %v788 = vsel %vm776, %v765, %v767
  %v789 = vsel %vm776, %v767, %v769
  %v790 = vsel %vm776, %v769, %v771
  %v791 = vsel %vm776, %v771, %v773
  %v792 = vsel %vm776, %v773, %v775
  %vm793 = vcmask 1043456
  %v795 = vsel %vm793, %v362, %v420
  %v799 = vsel %vm793, %v343, %v421
  %v803 = vsel %vm793, %v344, %v422
  %v807 = vsel %vm793, %v345, %v423
  %v811 = vsel %vm793, %v346, %v424
  %v815 = vsel %vm793, %v347, %v425
  %v819 = vsel %vm793, %v348, %v426
  %v823 = vsel %vm793, %v349, %v427
  %v827 = vsel %vm793, %v350, %v428
  %v831 = vsel %vm793, %v351, %v429
  %v835 = vsel %vm793, %v352, %v430
  %v839 = vsel %vm793, %v353, %v431
  %v843 = vsel %vm793, %v354, %v432
  %v847 = vsel %vm793, %v355, %v433
  %v851 = vsel %vm793, %v356, %v434
  %v855 = vsel %vm793, %v357, %v435
  %v858 = vsel %vm793, %v365, %v418
  %v862 = vsel %vm793, %v471, %v522
  %v866 = vsel %vm793, %v472, %v523
  %v870 = vsel %vm793, %v473, %v524
  %v874 = vsel %vm793, %v474, %v525
  %v878 = vsel %vm793, %v475, %v526
  %v882 = vsel %vm793, %v476, %v527
  %v886 = vsel %vm793, %v477, %v528
  %v890 = vsel %vm793, %v478, %v529
  %v894 = vsel %vm793, %v479, %v530
  %v898 = vsel %vm793, %v480, %v531
  %v902 = vsel %vm793, %v481, %v532
  %v906 = vsel %vm793, %v482, %v533
  %v910 = vsel %vm793, %v483, %v534
  %v914 = vsel %vm793, %v484, %v535
  %v918 = vsel %vm793, %v485, %v536
  %v922 = vsel %vm793, %v486, %v537
  %v926 = vsel %vm793, %v469, %v520
  %v930 = vsel %vm793, %v573, %v624
  %v934 = vsel %vm793, %v574, %v625
  %v938 = vsel %vm793, %v575, %v626
  %v942 = vsel %vm793, %v576, %v627
  %v946 = vsel %vm793, %v577, %v628
  %v950 = vsel %vm793, %v578, %v629
  %v954 = vsel %vm793, %v579, %v630
  %v958 = vsel %vm793, %v580, %v631
  %v962 = vsel %vm793, %v581, %v632
  %v966 = vsel %vm793, %v582, %v633
  %v970 = vsel %vm793, %v583, %v634
  %v974 = vsel %vm793, %v584, %v635
  %v978 = vsel %vm793, %v585, %v636
  %v982 = vsel %vm793, %v586, %v637
  %v986 = vsel %vm793, %v587, %v638
  %v990 = vsel %vm793, %v588, %v639
  %v994 = vsel %vm793, %v571, %v622
  %v998 = vsel %vm793, %v675, %v726
  %v1002 = vsel %vm793, %v676, %v727
  %v1006 = vsel %vm793, %v677, %v728
  %v1010 = vsel %vm793, %v678, %v729
  %v1014 = vsel %vm793, %v679, %v730
  %v1018 = vsel %vm793, %v680, %v731
  %v1022 = vsel %vm793, %v681, %v732
  %v1026 = vsel %vm793, %v682, %v733
  %v1030 = vsel %vm793, %v683, %v734
  %v1034 = vsel %vm793, %v684, %v735
  %v1038 = vsel %vm793, %v685, %v736
  %v1042 = vsel %vm793, %v686, %v737
  %v1046 = vsel %vm793, %v687, %v738
  %v1050 = vsel %vm793, %v688, %v739
  %v1054 = vsel %vm793, %v689, %v740
  %v1058 = vsel %vm793, %v690, %v741
  %v1062 = vsel %vm793, %v673, %v724
  %vm1064 = vcmask 588800
  %v1066 = vsel %vm1064, %v255, 0
  %v1069 = vsel %vm793, %v777, 0
  %v1072 = vsel %vm793, %v778, 0
  %v1075 = vsel %vm793, %v779, 0
  %v1078 = vsel %vm793, %v780, 0
  %v1081 = vsel %vm793, %v781, 0
  %v1084 = vsel %vm793, %v782, 0
  %v1087 = vsel %vm793, %v783, 0
  %v1090 = vsel %vm793, %v784, 0
  %v1093 = vsel %vm793, %v785, 0
  %v1096 = vsel %vm793, %v786, 0
  %v1099 = vsel %vm793, %v787, 0
  %v1102 = vsel %vm793, %v788, 0
  %v1105 = vsel %vm793, %v789, 0
  %v1108 = vsel %vm793, %v790, 0
  %v1111 = vsel %vm793, %v791, 0
  %v1114 = vsel %vm793, %v792, 0
  %v1117 = vsel %vm793, %v775, 0
  %1119 = vmatpush.bf16.msra.mxu0 0
  %1120 = vmatpush.bf16.msra.mxu0 0
  %1121 = vmatpush.bf16.msra.mxu0 0
  %1122 = vmatpush.bf16.msra.mxu0 %v1069
  %1123 = vmatpush.bf16.msra.mxu0 %v998
  %1124 = vmatpush.bf16.msra.mxu0 %v930
  %1125 = vmatpush.bf16.msra.mxu0 %v862
  %1126 = vmatpush.bf16.msra.mxu0 %v795
  %1127 = vmatmul.bf16.gmra.mxu0 %v1066
  %v1128 = vpop.f32.mrf.mxu0
  %v1129 = vadd.f32 0.0, %v1128
  %v1130 = vpop.f32.mrf.mxu0
  %1131 = vdwg.mxu0
  %1132 = vmatpush.bf16.msra.mxu0 0
  %1133 = vmatpush.bf16.msra.mxu0 0
  %1134 = vmatpush.bf16.msra.mxu0 0
  %1135 = vmatpush.bf16.msra.mxu0 %v1072
  %1136 = vmatpush.bf16.msra.mxu0 %v1002
  %1137 = vmatpush.bf16.msra.mxu0 %v934
  %1138 = vmatpush.bf16.msra.mxu0 %v866
  %1139 = vmatpush.bf16.msra.mxu0 %v799
  %1140 = vmatmul.bf16.gmra.mxu0 %v1066
  %v1141 = vpop.f32.mrf.mxu0
  %v1142 = vadd.f32 0.0, %v1141
  %v1143 = vpop.f32.mrf.mxu0
  %1144 = vdwg.mxu0
  %1145 = vmatpush.bf16.msra.mxu0 0
  %1146 = vmatpush.bf16.msra.mxu0 0
  %1147 = vmatpush.bf16.msra.mxu0 0
  %1148 = vmatpush.bf16.msra.mxu0 %v1075
  %1149 = vmatpush.bf16.msra.mxu0 %v1006
  %1150 = vmatpush.bf16.msra.mxu0 %v938
  %1151 = vmatpush.bf16.msra.mxu0 %v870
  %1152 = vmatpush.bf16.msra.mxu0 %v803
  %1153 = vmatmul.bf16.gmra.mxu0 %v1066
  %v1154 = vpop.f32.mrf.mxu0
  %v1155 = vadd.f32 0.0, %v1154
  %v1156 = vpop.f32.mrf.mxu0
  %1157 = vdwg.mxu0
  %1158 = vmatpush.bf16.msra.mxu0 0
  %1159 = vmatpush.bf16.msra.mxu0 0
  %1160 = vmatpush.bf16.msra.mxu0 0
  %1161 = vmatpush.bf16.msra.mxu0 %v1078
  %1162 = vmatpush.bf16.msra.mxu0 %v1010
  %1163 = vmatpush.bf16.msra.mxu0 %v942
  %1164 = vmatpush.bf16.msra.mxu0 %v874
  %1165 = vmatpush.bf16.msra.mxu0 %v807
  %1166 = vmatmul.bf16.gmra.mxu0 %v1066
  %v1167 = vpop.f32.mrf.mxu0
  %v1168 = vadd.f32 0.0, %v1167
  %v1169 = vpop.f32.mrf.mxu0
  %1170 = vdwg.mxu0
  %1171 = vmatpush.bf16.msra.mxu0 0
  %1172 = vmatpush.bf16.msra.mxu0 0
  %1173 = vmatpush.bf16.msra.mxu0 0
  %1174 = vmatpush.bf16.msra.mxu0 %v1081
  %1175 = vmatpush.bf16.msra.mxu0 %v1014
  %1176 = vmatpush.bf16.msra.mxu0 %v946
  %1177 = vmatpush.bf16.msra.mxu0 %v878
  %1178 = vmatpush.bf16.msra.mxu0 %v811
  %1179 = vmatmul.bf16.gmra.mxu0 %v1066
  %v1180 = vpop.f32.mrf.mxu0
  %v1181 = vadd.f32 0.0, %v1180
  %v1182 = vpop.f32.mrf.mxu0
  %1183 = vdwg.mxu0
  %1184 = vmatpush.bf16.msra.mxu0 0
  %1185 = vmatpush.bf16.msra.mxu0 0
  %1186 = vmatpush.bf16.msra.mxu0 0
  %1187 = vmatpush.bf16.msra.mxu0 %v1084
  %1188 = vmatpush.bf16.msra.mxu0 %v1018
  %1189 = vmatpush.bf16.msra.mxu0 %v950
  %1190 = vmatpush.bf16.msra.mxu0 %v882
  %1191 = vmatpush.bf16.msra.mxu0 %v815
  %1192 = vmatmul.bf16.gmra.mxu0 %v1066
  %v1193 = vpop.f32.mrf.mxu0
  %v1194 = vadd.f32 0.0, %v1193
  %v1195 = vpop.f32.mrf.mxu0
  %1196 = vdwg.mxu0
  %1197 = vmatpush.bf16.msra.mxu0 0
  %1198 = vmatpush.bf16.msra.mxu0 0
  %1199 = vmatpush.bf16.msra.mxu0 0
  %1200 = vmatpush.bf16.msra.mxu0 %v1087
  %1201 = vmatpush.bf16.msra.mxu0 %v1022
  %1202 = vmatpush.bf16.msra.mxu0 %v954
  %1203 = vmatpush.bf16.msra.mxu0 %v886
  %1204 = vmatpush.bf16.msra.mxu0 %v819
  %1205 = vmatmul.bf16.gmra.mxu0 %v1066
  %v1206 = vpop.f32.mrf.mxu0
  %v1207 = vadd.f32 0.0, %v1206
  %v1208 = vpop.f32.mrf.mxu0
  %1209 = vdwg.mxu0
  %1210 = vmatpush.bf16.msra.mxu0 0
  %1211 = vmatpush.bf16.msra.mxu0 0
  %1212 = vmatpush.bf16.msra.mxu0 0
  %1213 = vmatpush.bf16.msra.mxu0 %v1090
  %1214 = vmatpush.bf16.msra.mxu0 %v1026
  %1215 = vmatpush.bf16.msra.mxu0 %v958
  %1216 = vmatpush.bf16.msra.mxu0 %v890
  %1217 = vmatpush.bf16.msra.mxu0 %v823
  %1218 = vmatmul.bf16.gmra.mxu0 %v1066
  %v1219 = vpop.f32.mrf.mxu0
  %v1220 = vadd.f32 0.0, %v1219
  %v1221 = vpop.f32.mrf.mxu0
  %1222 = vdwg.mxu0
  %1223 = vmatpush.bf16.msra.mxu0 0
  %1224 = vmatpush.bf16.msra.mxu0 0
  %1225 = vmatpush.bf16.msra.mxu0 0
  %1226 = vmatpush.bf16.msra.mxu0 %v1093
  %1227 = vmatpush.bf16.msra.mxu0 %v1030
  %1228 = vmatpush.bf16.msra.mxu0 %v962
  %1229 = vmatpush.bf16.msra.mxu0 %v894
  %1230 = vmatpush.bf16.msra.mxu0 %v827
  %1231 = vmatmul.bf16.gmra.mxu0 %v1066
  %v1232 = vpop.f32.mrf.mxu0
  %v1233 = vadd.f32 0.0, %v1232
  %v1234 = vpop.f32.mrf.mxu0
  %1235 = vdwg.mxu0
  %1236 = vmatpush.bf16.msra.mxu0 0
  %1237 = vmatpush.bf16.msra.mxu0 0
  %1238 = vmatpush.bf16.msra.mxu0 0
  %1239 = vmatpush.bf16.msra.mxu0 %v1096
  %1240 = vmatpush.bf16.msra.mxu0 %v1034
  %1241 = vmatpush.bf16.msra.mxu0 %v966
  %1242 = vmatpush.bf16.msra.mxu0 %v898
  %1243 = vmatpush.bf16.msra.mxu0 %v831
  %1244 = vmatmul.bf16.gmra.mxu0 %v1066
  %v1245 = vpop.f32.mrf.mxu0
  %v1246 = vadd.f32 0.0, %v1245
  %v1247 = vpop.f32.mrf.mxu0
  %1248 = vdwg.mxu0
  %1249 = vmatpush.bf16.msra.mxu0 0
  %1250 = vmatpush.bf16.msra.mxu0 0
  %1251 = vmatpush.bf16.msra.mxu0 0
  %1252 = vmatpush.bf16.msra.mxu0 %v1099
  %1253 = vmatpush.bf16.msra.mxu0 %v1038
  %1254 = vmatpush.bf16.msra.mxu0 %v970
  %1255 = vmatpush.bf16.msra.mxu0 %v902
  %1256 = vmatpush.bf16.msra.mxu0 %v835
  %1257 = vmatmul.bf16.gmra.mxu0 %v1066
  %v1258 = vpop.f32.mrf.mxu0
  %v1259 = vadd.f32 0.0, %v1258
  %v1260 = vpop.f32.mrf.mxu0
  %1261 = vdwg.mxu0
  %1262 = vmatpush.bf16.msra.mxu0 0
  %1263 = vmatpush.bf16.msra.mxu0 0
  %1264 = vmatpush.bf16.msra.mxu0 0
  %1265 = vmatpush.bf16.msra.mxu0 %v1102
  %1266 = vmatpush.bf16.msra.mxu0 %v1042
  %1267 = vmatpush.bf16.msra.mxu0 %v974
  %1268 = vmatpush.bf16.msra.mxu0 %v906
  %1269 = vmatpush.bf16.msra.mxu0 %v839
  %1270 = vmatmul.bf16.gmra.mxu0 %v1066
  %v1271 = vpop.f32.mrf.mxu0
  %v1272 = vadd.f32 0.0, %v1271
  %v1273 = vpop.f32.mrf.mxu0
  %1274 = vdwg.mxu0
  %1275 = vmatpush.bf16.msra.mxu0 0
  %1276 = vmatpush.bf16.msra.mxu0 0
  %1277 = vmatpush.bf16.msra.mxu0 0
  %1278 = vmatpush.bf16.msra.mxu0 %v1105
  %1279 = vmatpush.bf16.msra.mxu0 %v1046
  %1280 = vmatpush.bf16.msra.mxu0 %v978
  %1281 = vmatpush.bf16.msra.mxu0 %v910
  %1282 = vmatpush.bf16.msra.mxu0 %v843
  %1283 = vmatmul.bf16.gmra.mxu0 %v1066
  %v1284 = vpop.f32.mrf.mxu0
  %v1285 = vadd.f32 0.0, %v1284
  %v1286 = vpop.f32.mrf.mxu0
  %1287 = vdwg.mxu0
  %1288 = vmatpush.bf16.msra.mxu0 0
  %1289 = vmatpush.bf16.msra.mxu0 0
  %1290 = vmatpush.bf16.msra.mxu0 0
  %1291 = vmatpush.bf16.msra.mxu0 %v1108
  %1292 = vmatpush.bf16.msra.mxu0 %v1050
  %1293 = vmatpush.bf16.msra.mxu0 %v982
  %1294 = vmatpush.bf16.msra.mxu0 %v914
  %1295 = vmatpush.bf16.msra.mxu0 %v847
  %1296 = vmatmul.bf16.gmra.mxu0 %v1066
  %v1297 = vpop.f32.mrf.mxu0
  %v1298 = vadd.f32 0.0, %v1297
  %v1299 = vpop.f32.mrf.mxu0
  %1300 = vdwg.mxu0
  %1301 = vmatpush.bf16.msra.mxu0 0
  %1302 = vmatpush.bf16.msra.mxu0 0
  %1303 = vmatpush.bf16.msra.mxu0 0
  %1304 = vmatpush.bf16.msra.mxu0 %v1111
  %1305 = vmatpush.bf16.msra.mxu0 %v1054
  %1306 = vmatpush.bf16.msra.mxu0 %v986
  %1307 = vmatpush.bf16.msra.mxu0 %v918
  %1308 = vmatpush.bf16.msra.mxu0 %v851
  %1309 = vmatmul.bf16.gmra.mxu0 %v1066
  %v1310 = vpop.f32.mrf.mxu0
  %v1311 = vadd.f32 0.0, %v1310
  %v1312 = vpop.f32.mrf.mxu0
  %1313 = vdwg.mxu0
  %1314 = vmatpush.bf16.msra.mxu0 0
  %1315 = vmatpush.bf16.msra.mxu0 0
  %1316 = vmatpush.bf16.msra.mxu0 0
  %1317 = vmatpush.bf16.msra.mxu0 %v1114
  %1318 = vmatpush.bf16.msra.mxu0 %v1058
  %1319 = vmatpush.bf16.msra.mxu0 %v990
  %1320 = vmatpush.bf16.msra.mxu0 %v922
  %1321 = vmatpush.bf16.msra.mxu0 %v855
  %1322 = vmatmul.bf16.gmra.mxu0 %v1066
  %v1323 = vpop.f32.mrf.mxu0
  %v1324 = vadd.f32 0.0, %v1323
  %v1325 = vpop.f32.mrf.mxu0
  %1326 = vdwg.mxu0
  %1327 = vmatpush.bf16.msra.mxu0 0
  %1328 = vmatpush.bf16.msra.mxu0 0
  %1329 = vmatpush.bf16.msra.mxu0 0
  %1330 = vmatpush.bf16.msra.mxu0 %v1117
  %1331 = vmatpush.bf16.msra.mxu0 %v1062
  %1332 = vmatpush.bf16.msra.mxu0 %v994
  %1333 = vmatpush.bf16.msra.mxu0 %v926
  %1334 = vmatpush.bf16.msra.mxu0 %v858
  %1335 = vmatmul.bf16.gmra.mxu0 %v1066
  %v1336 = vpop.f32.mrf.mxu0
  %v1337 = vadd.f32 0.0, %v1336
  %v1338 = vpop.f32.mrf.mxu0
  %1339 = vdwg.mxu0
  %v1340 = vld [vmem:[%s5] sm:$0x7]
  %v1341 = vld [vmem:[%s6] sm:$0x7]
  %v1342 = vmul.f32 %v1129, %v52
  %v1343 = vmul.f32 %v1142, %v53
  %v1344 = vmul.f32 %v1155, %v54
  %v1345 = vmul.f32 %v1168, %v55
  %v1346 = vmul.f32 %v1181, %v56
  %v1347 = vmul.f32 %v1194, %v57
  %v1348 = vmul.f32 %v1207, %v58
  %v1349 = vmul.f32 %v1220, %v59
  %v1350 = vmul.f32 %v1233, %v60
  %v1351 = vmul.f32 %v1246, %v61
  %v1352 = vmul.f32 %v1259, %v62
  %v1353 = vmul.f32 %v1272, %v63
  %v1354 = vmul.f32 %v1285, %v64
  %v1355 = vmul.f32 %v1298, %v65
  %v1356 = vmul.f32 %v1311, %v66
  %v1357 = vmul.f32 %v1324, %v67
  %v1358 = vmul.f32 %v1337, %v68
  %vm1359 = vcmask 1042432
  %v1360 = vsel %vm1359, %v1342, 0.0
  %v1361 = vsel %vm1359, %v1343, 0.0
  %v1362 = vadd.f32 %v1360, %v1361
  %v1363 = vsel %vm1359, %v1344, 0.0
  %v1364 = vadd.f32 %v1362, %v1363
  %v1365 = vsel %vm1359, %v1345, 0.0
  %v1366 = vadd.f32 %v1364, %v1365
  %v1367 = vsel %vm1359, %v1346, 0.0
  %v1368 = vadd.f32 %v1366, %v1367
  %v1369 = vsel %vm1359, %v1347, 0.0
  %v1370 = vadd.f32 %v1368, %v1369
  %v1371 = vsel %vm1359, %v1348, 0.0
  %v1372 = vadd.f32 %v1370, %v1371
  %v1373 = vsel %vm1359, %v1349, 0.0
  %v1374 = vadd.f32 %v1372, %v1373
  %v1375 = vsel %vm1359, %v1350, 0.0
  %v1376 = vadd.f32 %v1374, %v1375
  %v1377 = vsel %vm1359, %v1351, 0.0
  %v1378 = vadd.f32 %v1376, %v1377
  %v1379 = vsel %vm1359, %v1352, 0.0
  %v1380 = vadd.f32 %v1378, %v1379
  %v1381 = vsel %vm1359, %v1353, 0.0
  %v1382 = vadd.f32 %v1380, %v1381
  %v1383 = vsel %vm1359, %v1354, 0.0
  %v1384 = vadd.f32 %v1382, %v1383
  %v1385 = vsel %vm1359, %v1355, 0.0
  %v1386 = vadd.f32 %v1384, %v1385
  %v1387 = vsel %vm1359, %v1356, 0.0
  %v1388 = vadd.f32 %v1386, %v1387
  %v1389 = vsel %vm1359, %v1357, 0.0
  %v1390 = vadd.f32 %v1388, %v1389
  %vm1391 = vcmask 124928
  %v1392 = vsel %vm1391, %v1358, 0.0
  %v1393 = vadd.f32 %v1390, %v1392
  %1394 = vadd.xlane.f32.xlu0 %v1393
  %v1395 = vpop.xlane.xlu0 %1394
  %v1396 = vmul.f32 %v1395, 0.00048828125
  %v1397 = vmul.f32 %v1129, %v1342
  %v1398 = vmul.f32 %v1142, %v1343
  %v1399 = vmul.f32 %v1155, %v1344
  %v1400 = vmul.f32 %v1168, %v1345
  %v1401 = vmul.f32 %v1181, %v1346
  %v1402 = vmul.f32 %v1194, %v1347
  %v1403 = vmul.f32 %v1207, %v1348
  %v1404 = vmul.f32 %v1220, %v1349
  %v1405 = vmul.f32 %v1233, %v1350
  %v1406 = vmul.f32 %v1246, %v1351
  %v1407 = vmul.f32 %v1259, %v1352
  %v1408 = vmul.f32 %v1272, %v1353
  %v1409 = vmul.f32 %v1285, %v1354
  %v1410 = vmul.f32 %v1298, %v1355
  %v1411 = vmul.f32 %v1311, %v1356
  %v1412 = vmul.f32 %v1324, %v1357
  %v1413 = vmul.f32 %v1337, %v1358
  %v1414 = vsel %vm1359, %v1397, 0.0
  %v1415 = vsel %vm1359, %v1398, 0.0
  %v1416 = vadd.f32 %v1414, %v1415
  %v1417 = vsel %vm1359, %v1399, 0.0
  %v1418 = vadd.f32 %v1416, %v1417
  %v1419 = vsel %vm1359, %v1400, 0.0
  %v1420 = vadd.f32 %v1418, %v1419
  %v1421 = vsel %vm1359, %v1401, 0.0
  %v1422 = vadd.f32 %v1420, %v1421
  %v1423 = vsel %vm1359, %v1402, 0.0
  %v1424 = vadd.f32 %v1422, %v1423
  %v1425 = vsel %vm1359, %v1403, 0.0
  %v1426 = vadd.f32 %v1424, %v1425
  %v1427 = vsel %vm1359, %v1404, 0.0
  %v1428 = vadd.f32 %v1426, %v1427
  %v1429 = vsel %vm1359, %v1405, 0.0
  %v1430 = vadd.f32 %v1428, %v1429
  %v1431 = vsel %vm1359, %v1406, 0.0
  %v1432 = vadd.f32 %v1430, %v1431
  %v1433 = vsel %vm1359, %v1407, 0.0
  %v1434 = vadd.f32 %v1432, %v1433
  %v1435 = vsel %vm1359, %v1408, 0.0
  %v1436 = vadd.f32 %v1434, %v1435
  %v1437 = vsel %vm1359, %v1409, 0.0
  %v1438 = vadd.f32 %v1436, %v1437
  %v1439 = vsel %vm1359, %v1410, 0.0
  %v1440 = vadd.f32 %v1438, %v1439
  %v1441 = vsel %vm1359, %v1411, 0.0
  %v1442 = vadd.f32 %v1440, %v1441
  %v1443 = vsel %vm1359, %v1412, 0.0
  %v1444 = vadd.f32 %v1442, %v1443
  %v1445 = vsel %vm1391, %v1413, 0.0
  %v1446 = vadd.f32 %v1444, %v1445
  %1447 = vadd.xlane.f32.xlu0 %v1446
  %v1448 = vpop.xlane.xlu0 %1447
  %v1449 = vmul.f32 %v1448, 0.00048828125
  %v1450 = vmul.f32 %v1396, %v1396
  %v1451 = vsub.f32 %v1449, %v1450
  %v1452 = vadd.f32 %v1451, 1e-05
  %v1453 = vrsqrt.pop %v1452
  %v1454 = vmul.f32 %v1453, %v1452
  %v1455 = vmul.f32 %v1454, %v1453
  %v1456 = vmul.f32 0.5, %v1455
  %v1457 = vsub.f32 1.5, %v1456
  %v1458 = vmul.f32 %v1453, %v1457
  %vm1459 = vweird.f32 %v1452
  %vm1460 = vweird.f32 %v1453
  %vm1461 = vmor %vm1459, %vm1460
  %v1462 = vsel %vm1461, %v1453, %v1458
  %v1463 = vmul.f32 %v1340, %v1462
  %v1464 = vmul.f32 %v1396, %v1463
  %v1465 = vsub.f32 %v1341, %v1464
  %1467 = vset.pattern.permute.xlu0 0
  %1468 = vperm.xlu0 %1467, %v1463
  %v1469 = vpop.permute.xlu0 %1468
  %v1471 = vmul.f32 %v1129, %v1469
  %v1472 = vmul.f32 %v1142, %v1469
  %v1473 = vmul.f32 %v1155, %v1469
  %v1474 = vmul.f32 %v1168, %v1469
  %v1475 = vmul.f32 %v1181, %v1469
  %v1476 = vmul.f32 %v1194, %v1469
  %v1477 = vmul.f32 %v1207, %v1469
  %v1478 = vmul.f32 %v1220, %v1469
  %v1479 = vmul.f32 %v1233, %v1469
  %v1480 = vmul.f32 %v1246, %v1469
  %v1481 = vmul.f32 %v1259, %v1469
  %v1482 = vmul.f32 %v1272, %v1469
  %v1483 = vmul.f32 %v1285, %v1469
  %v1484 = vmul.f32 %v1298, %v1469
  %v1485 = vmul.f32 %v1311, %v1469
  %v1486 = vmul.f32 %v1324, %v1469
  %v1487 = vmul.f32 %v1337, %v1469
  %1489 = vset.pattern.permute.xlu0 0
  %1490 = vperm.xlu0 %1489, %v1465
  %v1491 = vpop.permute.xlu0 %1490
  %v1493 = vadd.f32 %v1471, %v1491
  %v1494 = vadd.f32 %v1472, %v1491
  %v1495 = vadd.f32 %v1473, %v1491
  %v1496 = vadd.f32 %v1474, %v1491
  %v1497 = vadd.f32 %v1475, %v1491
  %v1498 = vadd.f32 %v1476, %v1491
  %v1499 = vadd.f32 %v1477, %v1491
  %v1500 = vadd.f32 %v1478, %v1491
  %v1501 = vadd.f32 %v1479, %v1491
  %v1502 = vadd.f32 %v1480, %v1491
  %v1503 = vadd.f32 %v1481, %v1491
  %v1504 = vadd.f32 %v1482, %v1491
  %v1505 = vadd.f32 %v1483, %v1491
  %v1506 = vadd.f32 %v1484, %v1491
  %v1507 = vadd.f32 %v1485, %v1491
  %v1508 = vadd.f32 %v1486, %v1491
  %v1509 = vadd.f32 %v1487, %v1491
  %v1526 = vrot.slane %v1494, 4
  %v1527 = vrot.slane %v1496, 4
  %v1528 = vrot.slane %v1498, 4
  %v1529 = vrot.slane %v1500, 4
  %v1530 = vrot.slane %v1502, 4
  %v1531 = vrot.slane %v1504, 4
  %v1532 = vrot.slane %v1506, 4
  %v1533 = vrot.slane %v1508, 4
  %v1534 = vsel %vm793, %v1493, %v1526
  %v1535 = vsel %vm793, %v1495, %v1527
  %v1536 = vsel %vm793, %v1497, %v1528
  %v1537 = vsel %vm793, %v1499, %v1529
  %v1538 = vsel %vm793, %v1501, %v1530
  %v1539 = vsel %vm793, %v1503, %v1531
  %v1540 = vsel %vm793, %v1505, %v1532
  %v1541 = vsel %vm793, %v1507, %v1533
  %1550 = vst [vmem:[%s7] sm:$0x77] %v1534
  %1551 = vst [vmem:[%s7 + $0x8] sm:$0x77] %v1535
  %1552 = vst [vmem:[%s7 + $0x10] sm:$0x77] %v1536
  %1553 = vst [vmem:[%s7 + $0x18] sm:$0x77] %v1537
  %1554 = vst [vmem:[%s7 + $0x20] sm:$0x77] %v1538
  %1555 = vst [vmem:[%s7 + $0x28] sm:$0x77] %v1539
  %1556 = vst [vmem:[%s7 + $0x30] sm:$0x77] %v1540
  %1557 = vst [vmem:[%s7 + $0x38] sm:$0x77] %v1541
  %1558 = vst.msk [vmem:[%s7 + $0x40] sm:$0x7] %vm1391, %v1509
  // Predicated region
  $region30: #{seismogram_decoder_forward.7} parent=0 // pred_check
    _
  $region31: #{seismogram_decoder_forward.7} parent=0 // pred_check_branch
    %1560 = sbr.rel (0) target = $region33
  $region32: #{seismogram_decoder_forward.7} parent=0 // pred_region
    _
  $region33: #{seismogram_decoder_forward.7} parent=0 // pred_fallthru
    _
  // Predicated region
  $region34: #{seismogram_decoder_forward.7} parent=0 // pred_check
    _
  $region35: #{seismogram_decoder_forward.7} parent=0 // pred_check_branch
    %1562 = sbr.rel (0) target = $region37
  $region36: #{seismogram_decoder_forward.7} parent=0 // pred_region
    _
  $region37: #{seismogram_decoder_forward.7} parent=0 // pred_fallthru
    _

</llo_original>
